<compile_context>
chip_gen: v5e
topology: v5e:2x2
jax: 0.10.0
libtpu: 0.0.40
codegen_flags: <defaults>
</compile_context>

<pallas_src>
import functools

import jax
import jax.numpy as jnp
from jax.experimental import pallas as pl
from jax.experimental.pallas import tpu as pltpu


GATE_LANES = 128  # pad every gate's column block to a full 128-lane group (vreg aligned)


# ----------------------------------------------------------------------------
# Fused Pallas kernel (whole forward pass, no grid)
# ----------------------------------------------------------------------------
def make_fused_kernel(n_layers, bi_dim, T, B, F, H, n_classes):
    G = GATE_LANES
    D2 = bi_dim * H            # fused hidden width [h_f | h_b]
    G3 = 3 * G                 # packed gate width of one direction block
    max_in = max(F, D2)
    dot = functools.partial(jnp.dot, preferred_element_type=jnp.float32,
                            precision=jax.lax.Precision.DEFAULT)

    def kernel(x_ref, wih_ref, whh_ref, bias_ref, whead_ref, bhead_ref,
               out_ref, act_ref):
        # x_ref    : (T*B, F)                 time-major input slab (row = t*B + b)
        # wih_ref  : (L*max_in, bi_dim*G3)    packed input-projection weights
        # whh_ref  : (L*D2, G3)               per-gate block-diagonal recurrent weights
        # bias_ref : (2*L, bi_dim*G3)         row 2l: xi slab bias; row 2l+1[:D2]: b_hh_n
        # whead_ref: (D2+192, 128)            [w1 | w2(pad) | w3(pad)] stacked on rows
        # bhead_ref: (3, 128)                 [b1; b2(pad); b3(pad)]
        # act_ref  : (T*B, D2) VMEM scratch   per-timestep layer outputs [out_f | out_b]
        h = None
        for l in range(n_layers):
            in_l = F if l == 0 else D2
            last = (l == n_layers - 1)

            # ---- time-batched input projection: ONE matmul per layer (off-chain) ----
            x_slab = x_ref[...] if l == 0 else act_ref[...]                 # (T*B, in_l)
            wih = wih_ref[l * max_in:l * max_in + in_l, :]                  # (in_l, bi*G3)
            xi_all = dot(x_slab, wih) + bias_ref[2 * l:2 * l + 1, :]        # (T*B, bi*G3)

            whh = whh_ref[l * D2:(l + 1) * D2, :]                           # (D2, G3)
            bhn = bias_ref[2 * l + 1:2 * l + 2, 0:D2]                       # (1, D2)

            # ---- fused fwd+bwd recurrence, fully unrolled (T static & tiny) ----
            h = None
            for s in range(T):
                rs = s * B                   # fwd direction processes timestep s
                rb = (T - 1 - s) * B         # bwd direction processes timestep T-1-s
                xi = xi_all[rs:rs + B, 0:G3]
                if bi_dim == 2:
                    # bwd block columns start at lane 384 (vreg aligned); its nonzero
                    # lanes are disjoint from the fwd block's, so '+' is the concat.
                    xi = xi + xi_all[rb:rb + B, G3:2 * G3]
                xr = xi[:, 0:D2]             # gate slices at lane offsets 0 / 128 / 256
                xz = xi[:, G:G + D2]
                xn = xi[:, 2 * G:2 * G + D2]
                if s == 0:
                    # h0 == 0 exactly, so the hidden-side matmul is exactly zero: skip it.
                    r = jax.nn.sigmoid(xr)
                    z = jax.nn.sigmoid(xz)
                    n = jnp.tanh(xn + r * bhn)
                    h = n - z * n                                   # (1 - z) * n
                else:
                    hh = dot(h, whh)         # the ONLY matmul on the serial chain (no bias)
                    r = jax.nn.sigmoid(xr + hh[:, 0:D2])
                    z = jax.nn.sigmoid(xz + hh[:, G:G + D2])
                    n = jnp.tanh(xn + r * (hh[:, 2 * G:2 * G + D2] + bhn))
                    h = n + z * (h - n)                             # (1-z)*n + z*h
                if not last:
                    # Stage the layer output for the next layer's batched projection.
                    act_ref[rs:rs + B, 0:H] = h[:, 0:H]
                    if bi_dim == 2:
                        act_ref[rb:rb + B, H:D2] = h[:, H:D2]

        # Fused final h == cat(gru_out[:, -1, :H], gru_out[:, 0, H:]) == fc_in.
        w1 = whead_ref[0:D2, :]                                     # (D2, 128)
        w2 = whead_ref[D2:D2 + 128, 0:64]                           # (128, 64)
        w3 = whead_ref[D2 + 128:D2 + 192, 0:n_classes]              # (64, C)
        a1 = jnp.maximum(dot(h, w1) + bhead_ref[0:1, :], 0.0)
        a2 = jnp.maximum(dot(a1, w2) + bhead_ref[1:2, 0:64], 0.0)
        out_ref[...] = dot(a2, w3) + bhead_ref[2:3, 0:n_classes]

    return kernel


# ----------------------------------------------------------------------------
# Host-side packing of inputs / weights into a handful of contiguous arrays
# ----------------------------------------------------------------------------
def pack_inputs(x_btf, gru_params, head_params, bidirectional):
    B, T, F = x_btf.shape
    bi_dim = 2 if bidirectional else 1
    n_layers = len(gru_params)
    H = gru_params[0][0]["whh"].shape[0]
    D2 = bi_dim * H
    G = GATE_LANES
    G3 = 3 * G
    assert D2 <= G, "both directions of one gate must fit one 128-lane group"
    max_in = max(F, D2)
    n_classes = head_params[4].shape[1]

    # Time-major slab: row t*B + b = x[b, t, :].
    x_slab = jnp.transpose(x_btf, (1, 0, 2)).reshape(T * B, F)

    wih_all = jnp.zeros((n_layers * max_in, bi_dim * G3), jnp.float32)
    whh_all = jnp.zeros((n_layers * D2, G3), jnp.float32)
    bias_all = jnp.zeros((n_layers * 2, bi_dim * G3), jnp.float32)
    for l, dirs in enumerate(gru_params):
        in_l = F if l == 0 else D2
        for d in range(bi_dim):
            p = dirs[d]
            # b_hh of the n gate stays inside r*(...) (PyTorch GRU semantics).
            bias_all = bias_all.at[2 * l + 1, d * H:(d + 1) * H].set(p["bhh"][0, 2 * H:3 * H])
            for g in range(3):                      # gate order [r, z, n]
                col = d * G3 + g * G + d * H        # fwd lanes [gG:gG+H], bwd [gG+H:gG+2H]
                wih_all = wih_all.at[l * max_in:l * max_in + in_l, col:col + H].set(
                    p["wih"][:, g * H:(g + 1) * H])
                b = p["bih"][0, g * H:(g + 1) * H]
                if g < 2:                            # fold b_hh_r / b_hh_z into the slab bias
                    b = b + p["bhh"][0, g * H:(g + 1) * H]
                bias_all = bias_all.at[2 * l, col:col + H].set(b)
                hcol = g * G + d * H                 # per-gate block-diagonal W_hh
                whh_all = whh_all.at[l * D2 + d * H:l * D2 + (d + 1) * H,
                                     hcol:hcol + H].set(p["whh"][:, g * H:(g + 1) * H])

    w1, b1, w2, b2, w3, b3 = head_params
    whead = jnp.zeros((D2 + 128 + 64, 128), jnp.float32)
    whead = whead.at[0:D2, :].set(w1)
    whead = whead.at[D2:D2 + 128, 0:64].set(w2)
    whead = whead.at[D2 + 128:D2 + 192, 0:n_classes].set(w3)
    bhead = jnp.zeros((3, 128), jnp.float32)
    bhead = bhead.at[0, :].set(b1[0])
    bhead = bhead.at[1, 0:64].set(b2[0])
    bhead = bhead.at[2, 0:n_classes].set(b3[0])

    meta = dict(n_layers=n_layers, bi_dim=bi_dim, T=T, B=B, F=F, H=H,
                D2=D2, n_classes=n_classes)
    return (x_slab, wih_all, whh_all, bias_all, whead, bhead), meta


# ----------------------------------------------------------------------------
# Wrapper
# ----------------------------------------------------------------------------
@functools.partial(jax.jit, static_argnums=(3,))
def gru_model_forward(x_btf, gru_params, head_params, bidirectional):
    """Matches GRU.forward(): x_btf is batch-first (B, T, F)."""
    flat, m = pack_inputs(x_btf, gru_params, head_params, bidirectional)
    kernel = make_fused_kernel(m["n_layers"], m["bi_dim"], m["T"], m["B"],
                               m["F"], m["H"], m["n_classes"])
    vmem = pl.BlockSpec(memory_space=pltpu.MemorySpace.VMEM)
    # Single grid-free invocation; everything (<1 MiB) stays VMEM-resident.
    # NOTE (v7x): intentionally single-TensorCore (no core_map) -- at T=8, B=2 the per-layer
    # cross-core barrier + activation exchange would cost more than the fused recurrence.
    return pl.pallas_call(
        kernel,
        out_shape=jax.ShapeDtypeStruct((m["B"], m["n_classes"]), jnp.float32),
        in_specs=[vmem] * len(flat),
        out_specs=vmem,
        scratch_shapes=[pltpu.VMEM((m["T"] * m["B"], m["D2"]), jnp.float32)],
    )(*flat)


# ----------------------------------------------------------------------------
# Deterministic parameter init (mirrors nn.GRU / nn.Linear shapes & init ranges)
# ----------------------------------------------------------------------------
def init_gru_dir_params(key, in_size, H):
    k = 1.0 / jnp.sqrt(jnp.float32(H))
    ks = jax.random.split(key, 4)
    w_ih = jax.random.uniform(ks[0], (3 * H, in_size), jnp.float32, -k, k)
    w_hh = jax.random.uniform(ks[1], (3 * H, H), jnp.float32, -k, k)
    b_ih = jax.random.uniform(ks[2], (3 * H,), jnp.float32, -k, k)
    b_hh = jax.random.uniform(ks[3], (3 * H,), jnp.float32, -k, k)
    # PyTorch gate order is [r, z, n]; transpose so the kernel can use x @ W.
    return dict(
        wih=w_ih.T,                       # (in_size, 3H), columns = [r | z | n]
        whh=w_hh.T,                       # (H, 3H)
        bih=b_ih.reshape(1, 3 * H),
        bhh=b_hh.reshape(1, 3 * H),
    )


def init_linear_params(key, fan_in, fan_out):
    k = 1.0 / jnp.sqrt(jnp.float32(fan_in))
    k1, k2 = jax.random.split(key)
    w = jax.random.uniform(k1, (fan_in, fan_out), jnp.float32, -k, k)
    b = jax.random.uniform(k2, (1, fan_out), jnp.float32, -k, k)
    return w, b


# ----------------------------------------------------------------------------
# Pure-JAX reference (for correctness check)
# ----------------------------------------------------------------------------
def _gru_cell_ref(h, x, p):
    H = p["whh"].shape[0]
    xi = x @ p["wih"] + p["bih"]
    hh = h @ p["whh"] + p["bhh"]
    r = jax.nn.sigmoid(xi[:, :H] + hh[:, :H])
    z = jax.nn.sigmoid(xi[:, H:2 * H] + hh[:, H:2 * H])
    n = jnp.tanh(xi[:, 2 * H:] + r * hh[:, 2 * H:])
    return (1.0 - z) * n + z * h


def _gru_dir_ref(x_tbf, p, reverse):
    B = x_tbf.shape[1]
    H = p["whh"].shape[0]
    xs = x_tbf[::-1] if reverse else x_tbf

    def step(h, x):
        h_new = _gru_cell_ref(h, x, p)
        return h_new, h_new

    _, outs = jax.lax.scan(step, jnp.zeros((B, H), jnp.float32), xs)
    return outs[::-1] if reverse else outs


def ref_forward(x_btf, gru_params, head_params, hidden_dim, bidirectional):
    x_tbf = jnp.transpose(x_btf, (1, 0, 2))
    for fwd_p, bwd_p in gru_params:
        out_f = _gru_dir_ref(x_tbf, fwd_p, reverse=False)
        if bidirectional:
            out_b = _gru_dir_ref(x_tbf, bwd_p, reverse=True)
            x_tbf = jnp.concatenate([out_f, out_b], axis=-1)
        else:
            x_tbf = out_f
    gru_out = jnp.transpose(x_tbf, (1, 0, 2))
    H = hidden_dim
    fc_in = jnp.concatenate([gru_out[:, -1, :H], gru_out[:, 0, H:]], axis=1)
    w1, b1, w2, b2, w3, b3 = head_params
    h = jnp.maximum(fc_in @ w1 + b1, 0.0)
    h = jnp.maximum(h @ w2 + b2, 0.0)
    return h @ w3 + b3


# ----------------------------------------------------------------------------
if __name__ == "__main__":
    # Module hyper-parameters (small, consistent with the PyTorch forward()).
    n_features = 4
    hidden_dim = 32
    n_layers = 2
    n_classes = 5
    seq_length = 8
    batch_size = 2
    bidirectional = True
    bi_dim = 2 if bidirectional else 1

    key = jax.random.PRNGKey(0)
    k_x, k_gru, k_fc1, k_fc2, k_fc3 = jax.random.split(key, 5)

    # GRU parameters per layer / direction.
    gru_params = []
    gkeys = jax.random.split(k_gru, n_layers * bi_dim)
    for layer in range(n_layers):
        in_size = n_features if layer == 0 else hidden_dim * bi_dim
        fwd_p = init_gru_dir_params(gkeys[layer * bi_dim + 0], in_size, hidden_dim)
        bwd_p = (init_gru_dir_params(gkeys[layer * bi_dim + 1], in_size, hidden_dim)
                 if bidirectional else None)
        gru_params.append((fwd_p, bwd_p))

    # MLP head parameters.
    w1, b1 = init_linear_params(k_fc1, hidden_dim * bi_dim, 128)
    w2, b2 = init_linear_params(k_fc2, 128, 64)
    w3, b3 = init_linear_params(k_fc3, 64, n_classes)
    head_params = (w1, b1, w2, b2, w3, b3)

    # Input: batch_first (B, T, F), like the PyTorch module.
    x = jax.random.normal(k_x, (batch_size, seq_length, n_features), jnp.float32)

    out = gru_model_forward(x, gru_params, head_params, bidirectional)
    out = jax.block_until_ready(out)

    ref = ref_forward(x, gru_params, head_params, hidden_dim, bidirectional)
    assert out.shape == (batch_size, n_classes)
    # Both paths use DEFAULT (bf16 MXU, f32 accumulate) matmuls; tolerance covers the tiny
    # accumulation-order / transcendental-implementation differences between XLA and Mosaic.
    assert jnp.allclose(out, ref, atol=1e-3, rtol=1e-3), "Pallas GRU mismatch vs reference"

    print("KERNEL_OK")
</pallas_src>

<mosaic_0001>
module attributes {stable_mosaic.version = 11 : i64} {
  func.func @kernel(%arg0: memref<16x4xf32, #tpu.memory_space<vmem>>, %arg1: memref<128x768xf32, #tpu.memory_space<vmem>>, %arg2: memref<128x384xf32, #tpu.memory_space<vmem>>, %arg3: memref<4x768xf32, #tpu.memory_space<vmem>>, %arg4: memref<256x128xf32, #tpu.memory_space<vmem>>, %arg5: memref<3x128xf32, #tpu.memory_space<vmem>>, %arg6: memref<2x5xf32, #tpu.memory_space<vmem>>, %arg7: memref<16x64xf32, #tpu.memory_space<vmem>>) attributes {dimension_semantics = [], scalar_prefetch = 0 : i64, scratch_operands = 1 : i64, tpu.core_type = #tpu.core_type<tc>} {
    %c0 = arith.constant 0 : index
    %c0_0 = arith.constant 0 : index
    %0 = vector.load %arg0[%c0, %c0_0] : memref<16x4xf32, #tpu.memory_space<vmem>>, vector<16x4xf32>
    %c0_1 = arith.constant 0 : index
    %c0_2 = arith.constant 0 : index
    %1 = vector.load %arg1[%c0_1, %c0_2] : memref<128x768xf32, #tpu.memory_space<vmem>>, vector<4x768xf32>
    %cst = arith.constant dense<0.000000e+00> : vector<16x768xf32>
    %2 = tpu.matmul %0, %1, %cst {dimension_numbers = #tpu.dot_dimension_numbers<[1], [0], [0], [1], [0, 0, 1, 1], [], []>} : vector<16x4xf32>, vector<4x768xf32>, vector<16x768xf32> -> vector<16x768xf32>
    %c0_3 = arith.constant 0 : index
    %c0_4 = arith.constant 0 : index
    %3 = vector.load %arg3[%c0_3, %c0_4] : memref<4x768xf32, #tpu.memory_space<vmem>>, vector<1x768xf32>
    %4 = vector.broadcast %3 : vector<1x768xf32> to vector<16x768xf32>
    %5 = arith.addf %2, %4 : vector<16x768xf32>
    %c0_5 = arith.constant 0 : index
    %c0_6 = arith.constant 0 : index
    %6 = vector.load %arg2[%c0_5, %c0_6] : memref<128x384xf32, #tpu.memory_space<vmem>>, vector<64x384xf32>
    %c1 = arith.constant 1 : index
    %c0_7 = arith.constant 0 : index
    %7 = vector.load %arg3[%c1, %c0_7] : memref<4x768xf32, #tpu.memory_space<vmem>>, vector<1x64xf32>
    %8 = vector.extract_strided_slice %5 {offsets = [0, 0], sizes = [2, 384], strides = [1, 1]} : vector<16x768xf32> to vector<2x384xf32>
    %9 = vector.extract_strided_slice %5 {offsets = [14, 384], sizes = [2, 384], strides = [1, 1]} : vector<16x768xf32> to vector<2x384xf32>
    %10 = arith.addf %8, %9 : vector<2x384xf32>
    %11 = vector.extract_strided_slice %10 {offsets = [0, 0], sizes = [2, 64], strides = [1, 1]} : vector<2x384xf32> to vector<2x64xf32>
    %12 = vector.extract_strided_slice %10 {offsets = [0, 128], sizes = [2, 64], strides = [1, 1]} : vector<2x384xf32> to vector<2x64xf32>
    %13 = vector.extract_strided_slice %10 {offsets = [0, 256], sizes = [2, 64], strides = [1, 1]} : vector<2x384xf32> to vector<2x64xf32>
    %14 = arith.negf %11 : vector<2x64xf32>
    %15 = math.exp %14 : vector<2x64xf32>
    %cst_8 = arith.constant 1.000000e+00 : f32
    %16 = vector.broadcast %cst_8 : f32 to vector<2x64xf32>
    %17 = arith.addf %16, %15 : vector<2x64xf32>
    %18 = arith.divf %16, %17 : vector<2x64xf32>
    %19 = arith.negf %12 : vector<2x64xf32>
    %20 = math.exp %19 : vector<2x64xf32>
    %cst_9 = arith.constant 1.000000e+00 : f32
    %21 = vector.broadcast %cst_9 : f32 to vector<2x64xf32>
    %22 = arith.addf %21, %20 : vector<2x64xf32>
    %23 = arith.divf %21, %22 : vector<2x64xf32>
    %24 = vector.broadcast %7 : vector<1x64xf32> to vector<2x64xf32>
    %25 = arith.mulf %18, %24 : vector<2x64xf32>
    %26 = arith.addf %13, %25 : vector<2x64xf32>
    %27 = math.tanh %26 : vector<2x64xf32>
    %28 = arith.mulf %23, %27 : vector<2x64xf32>
    %29 = arith.subf %27, %28 : vector<2x64xf32>
    %30 = vector.extract_strided_slice %29 {offsets = [0, 0], sizes = [2, 32], strides = [1, 1]} : vector<2x64xf32> to vector<2x32xf32>
    %c0_10 = arith.constant 0 : index
    %c0_11 = arith.constant 0 : index
    %31 = vector.load %arg7[%c0_10, %c0_11] : memref<16x64xf32, #tpu.memory_space<vmem>>, vector<2x32xf32>
    tpu.vector_store %arg7[%c0_10, %c0_11], %30 {strides = array<i32>} : memref<16x64xf32, #tpu.memory_space<vmem>>, vector<2x32xf32>,
    %32 = vector.extract_strided_slice %29 {offsets = [0, 32], sizes = [2, 32], strides = [1, 1]} : vector<2x64xf32> to vector<2x32xf32>
    %c14 = arith.constant 14 : index
    %c32 = arith.constant 32 : index
    %33 = vector.load %arg7[%c14, %c32] : memref<16x64xf32, #tpu.memory_space<vmem>>, vector<2x32xf32>
    tpu.vector_store %arg7[%c14, %c32], %32 {strides = array<i32>} : memref<16x64xf32, #tpu.memory_space<vmem>>, vector<2x32xf32>,
    %34 = vector.extract_strided_slice %5 {offsets = [2, 0], sizes = [2, 384], strides = [1, 1]} : vector<16x768xf32> to vector<2x384xf32>
    %35 = vector.extract_strided_slice %5 {offsets = [12, 384], sizes = [2, 384], strides = [1, 1]} : vector<16x768xf32> to vector<2x384xf32>
    %36 = arith.addf %34, %35 : vector<2x384xf32>
    %37 = vector.extract_strided_slice %36 {offsets = [0, 0], sizes = [2, 64], strides = [1, 1]} : vector<2x384xf32> to vector<2x64xf32>
    %38 = vector.extract_strided_slice %36 {offsets = [0, 128], sizes = [2, 64], strides = [1, 1]} : vector<2x384xf32> to vector<2x64xf32>
    %39 = vector.extract_strided_slice %36 {offsets = [0, 256], sizes = [2, 64], strides = [1, 1]} : vector<2x384xf32> to vector<2x64xf32>
    %cst_12 = arith.constant dense<0.000000e+00> : vector<2x384xf32>
    %40 = tpu.matmul %29, %6, %cst_12 {dimension_numbers = #tpu.dot_dimension_numbers<[1], [0], [0], [1], [0, 0, 1, 1], [], []>} : vector<2x64xf32>, vector<64x384xf32>, vector<2x384xf32> -> vector<2x384xf32>
    %41 = vector.extract_strided_slice %40 {offsets = [0, 0], sizes = [2, 64], strides = [1, 1]} : vector<2x384xf32> to vector<2x64xf32>
    %42 = arith.addf %37, %41 : vector<2x64xf32>
    %43 = arith.negf %42 : vector<2x64xf32>
    %44 = math.exp %43 : vector<2x64xf32>
    %cst_13 = arith.constant 1.000000e+00 : f32
    %45 = vector.broadcast %cst_13 : f32 to vector<2x64xf32>
    %46 = arith.addf %45, %44 : vector<2x64xf32>
    %47 = arith.divf %45, %46 : vector<2x64xf32>
    %48 = vector.extract_strided_slice %40 {offsets = [0, 128], sizes = [2, 64], strides = [1, 1]} : vector<2x384xf32> to vector<2x64xf32>
    %49 = arith.addf %38, %48 : vector<2x64xf32>
    %50 = arith.negf %49 : vector<2x64xf32>
    %51 = math.exp %50 : vector<2x64xf32>
    %cst_14 = arith.constant 1.000000e+00 : f32
    %52 = vector.broadcast %cst_14 : f32 to vector<2x64xf32>
    %53 = arith.addf %52, %51 : vector<2x64xf32>
    %54 = arith.divf %52, %53 : vector<2x64xf32>
    %55 = vector.extract_strided_slice %40 {offsets = [0, 256], sizes = [2, 64], strides = [1, 1]} : vector<2x384xf32> to vector<2x64xf32>
    %56 = vector.broadcast %7 : vector<1x64xf32> to vector<2x64xf32>
    %57 = arith.addf %55, %56 : vector<2x64xf32>
    %58 = arith.mulf %47, %57 : vector<2x64xf32>
    %59 = arith.addf %39, %58 : vector<2x64xf32>
    %60 = math.tanh %59 : vector<2x64xf32>
    %61 = arith.subf %29, %60 : vector<2x64xf32>
    %62 = arith.mulf %54, %61 : vector<2x64xf32>
    %63 = arith.addf %60, %62 : vector<2x64xf32>
    %64 = vector.extract_strided_slice %63 {offsets = [0, 0], sizes = [2, 32], strides = [1, 1]} : vector<2x64xf32> to vector<2x32xf32>
    %c2 = arith.constant 2 : index
    %c0_15 = arith.constant 0 : index
    %65 = vector.load %arg7[%c2, %c0_15] : memref<16x64xf32, #tpu.memory_space<vmem>>, vector<2x32xf32>
    tpu.vector_store %arg7[%c2, %c0_15], %64 {strides = array<i32>} : memref<16x64xf32, #tpu.memory_space<vmem>>, vector<2x32xf32>,
    %66 = vector.extract_strided_slice %63 {offsets = [0, 32], sizes = [2, 32], strides = [1, 1]} : vector<2x64xf32> to vector<2x32xf32>
    %c12 = arith.constant 12 : index
    %c32_16 = arith.constant 32 : index
    %67 = vector.load %arg7[%c12, %c32_16] : memref<16x64xf32, #tpu.memory_space<vmem>>, vector<2x32xf32>
    tpu.vector_store %arg7[%c12, %c32_16], %66 {strides = array<i32>} : memref<16x64xf32, #tpu.memory_space<vmem>>, vector<2x32xf32>,
    %68 = vector.extract_strided_slice %5 {offsets = [4, 0], sizes = [2, 384], strides = [1, 1]} : vector<16x768xf32> to vector<2x384xf32>
    %69 = vector.extract_strided_slice %5 {offsets = [10, 384], sizes = [2, 384], strides = [1, 1]} : vector<16x768xf32> to vector<2x384xf32>
    %70 = arith.addf %68, %69 : vector<2x384xf32>
    %71 = vector.extract_strided_slice %70 {offsets = [0, 0], sizes = [2, 64], strides = [1, 1]} : vector<2x384xf32> to vector<2x64xf32>
    %72 = vector.extract_strided_slice %70 {offsets = [0, 128], sizes = [2, 64], strides = [1, 1]} : vector<2x384xf32> to vector<2x64xf32>
    %73 = vector.extract_strided_slice %70 {offsets = [0, 256], sizes = [2, 64], strides = [1, 1]} : vector<2x384xf32> to vector<2x64xf32>
    %cst_17 = arith.constant dense<0.000000e+00> : vector<2x384xf32>
    %74 = tpu.matmul %63, %6, %cst_17 {dimension_numbers = #tpu.dot_dimension_numbers<[1], [0], [0], [1], [0, 0, 1, 1], [], []>} : vector<2x64xf32>, vector<64x384xf32>, vector<2x384xf32> -> vector<2x384xf32>
    %75 = vector.extract_strided_slice %74 {offsets = [0, 0], sizes = [2, 64], strides = [1, 1]} : vector<2x384xf32> to vector<2x64xf32>
    %76 = arith.addf %71, %75 : vector<2x64xf32>
    %77 = arith.negf %76 : vector<2x64xf32>
    %78 = math.exp %77 : vector<2x64xf32>
    %cst_18 = arith.constant 1.000000e+00 : f32
    %79 = vector.broadcast %cst_18 : f32 to vector<2x64xf32>
    %80 = arith.addf %79, %78 : vector<2x64xf32>
    %81 = arith.divf %79, %80 : vector<2x64xf32>
    %82 = vector.extract_strided_slice %74 {offsets = [0, 128], sizes = [2, 64], strides = [1, 1]} : vector<2x384xf32> to vector<2x64xf32>
    %83 = arith.addf %72, %82 : vector<2x64xf32>
    %84 = arith.negf %83 : vector<2x64xf32>
    %85 = math.exp %84 : vector<2x64xf32>
    %cst_19 = arith.constant 1.000000e+00 : f32
    %86 = vector.broadcast %cst_19 : f32 to vector<2x64xf32>
    %87 = arith.addf %86, %85 : vector<2x64xf32>
    %88 = arith.divf %86, %87 : vector<2x64xf32>
    %89 = vector.extract_strided_slice %74 {offsets = [0, 256], sizes = [2, 64], strides = [1, 1]} : vector<2x384xf32> to vector<2x64xf32>
    %90 = vector.broadcast %7 : vector<1x64xf32> to vector<2x64xf32>
    %91 = arith.addf %89, %90 : vector<2x64xf32>
    %92 = arith.mulf %81, %91 : vector<2x64xf32>
    %93 = arith.addf %73, %92 : vector<2x64xf32>
    %94 = math.tanh %93 : vector<2x64xf32>
    %95 = arith.subf %63, %94 : vector<2x64xf32>
    %96 = arith.mulf %88, %95 : vector<2x64xf32>
    %97 = arith.addf %94, %96 : vector<2x64xf32>
    %98 = vector.extract_strided_slice %97 {offsets = [0, 0], sizes = [2, 32], strides = [1, 1]} : vector<2x64xf32> to vector<2x32xf32>
    %c4 = arith.constant 4 : index
    %c0_20 = arith.constant 0 : index
    %99 = vector.load %arg7[%c4, %c0_20] : memref<16x64xf32, #tpu.memory_space<vmem>>, vector<2x32xf32>
    tpu.vector_store %arg7[%c4, %c0_20], %98 {strides = array<i32>} : memref<16x64xf32, #tpu.memory_space<vmem>>, vector<2x32xf32>,
    %100 = vector.extract_strided_slice %97 {offsets = [0, 32], sizes = [2, 32], strides = [1, 1]} : vector<2x64xf32> to vector<2x32xf32>
    %c10 = arith.constant 10 : index
    %c32_21 = arith.constant 32 : index
    %101 = vector.load %arg7[%c10, %c32_21] : memref<16x64xf32, #tpu.memory_space<vmem>>, vector<2x32xf32>
    tpu.vector_store %arg7[%c10, %c32_21], %100 {strides = array<i32>} : memref<16x64xf32, #tpu.memory_space<vmem>>, vector<2x32xf32>,
    %102 = vector.extract_strided_slice %5 {offsets = [6, 0], sizes = [2, 384], strides = [1, 1]} : vector<16x768xf32> to vector<2x384xf32>
    %103 = vector.extract_strided_slice %5 {offsets = [8, 384], sizes = [2, 384], strides = [1, 1]} : vector<16x768xf32> to vector<2x384xf32>
    %104 = arith.addf %102, %103 : vector<2x384xf32>
    %105 = vector.extract_strided_slice %104 {offsets = [0, 0], sizes = [2, 64], strides = [1, 1]} : vector<2x384xf32> to vector<2x64xf32>
    %106 = vector.extract_strided_slice %104 {offsets = [0, 128], sizes = [2, 64], strides = [1, 1]} : vector<2x384xf32> to vector<2x64xf32>
    %107 = vector.extract_strided_slice %104 {offsets = [0, 256], sizes = [2, 64], strides = [1, 1]} : vector<2x384xf32> to vector<2x64xf32>
    %cst_22 = arith.constant dense<0.000000e+00> : vector<2x384xf32>
    %108 = tpu.matmul %97, %6, %cst_22 {dimension_numbers = #tpu.dot_dimension_numbers<[1], [0], [0], [1], [0, 0, 1, 1], [], []>} : vector<2x64xf32>, vector<64x384xf32>, vector<2x384xf32> -> vector<2x384xf32>
    %109 = vector.extract_strided_slice %108 {offsets = [0, 0], sizes = [2, 64], strides = [1, 1]} : vector<2x384xf32> to vector<2x64xf32>
    %110 = arith.addf %105, %109 : vector<2x64xf32>
    %111 = arith.negf %110 : vector<2x64xf32>
    %112 = math.exp %111 : vector<2x64xf32>
    %cst_23 = arith.constant 1.000000e+00 : f32
    %113 = vector.broadcast %cst_23 : f32 to vector<2x64xf32>
    %114 = arith.addf %113, %112 : vector<2x64xf32>
    %115 = arith.divf %113, %114 : vector<2x64xf32>
    %116 = vector.extract_strided_slice %108 {offsets = [0, 128], sizes = [2, 64], strides = [1, 1]} : vector<2x384xf32> to vector<2x64xf32>
    %117 = arith.addf %106, %116 : vector<2x64xf32>
    %118 = arith.negf %117 : vector<2x64xf32>
    %119 = math.exp %118 : vector<2x64xf32>
    %cst_24 = arith.constant 1.000000e+00 : f32
    %120 = vector.broadcast %cst_24 : f32 to vector<2x64xf32>
    %121 = arith.addf %120, %119 : vector<2x64xf32>
    %122 = arith.divf %120, %121 : vector<2x64xf32>
    %123 = vector.extract_strided_slice %108 {offsets = [0, 256], sizes = [2, 64], strides = [1, 1]} : vector<2x384xf32> to vector<2x64xf32>
    %124 = vector.broadcast %7 : vector<1x64xf32> to vector<2x64xf32>
    %125 = arith.addf %123, %124 : vector<2x64xf32>
    %126 = arith.mulf %115, %125 : vector<2x64xf32>
    %127 = arith.addf %107, %126 : vector<2x64xf32>
    %128 = math.tanh %127 : vector<2x64xf32>
    %129 = arith.subf %97, %128 : vector<2x64xf32>
    %130 = arith.mulf %122, %129 : vector<2x64xf32>
    %131 = arith.addf %128, %130 : vector<2x64xf32>
    %132 = vector.extract_strided_slice %131 {offsets = [0, 0], sizes = [2, 32], strides = [1, 1]} : vector<2x64xf32> to vector<2x32xf32>
    %c6 = arith.constant 6 : index
    %c0_25 = arith.constant 0 : index
    %133 = vector.load %arg7[%c6, %c0_25] : memref<16x64xf32, #tpu.memory_space<vmem>>, vector<2x32xf32>
    tpu.vector_store %arg7[%c6, %c0_25], %132 {strides = array<i32>} : memref<16x64xf32, #tpu.memory_space<vmem>>, vector<2x32xf32>,
    %134 = vector.extract_strided_slice %131 {offsets = [0, 32], sizes = [2, 32], strides = [1, 1]} : vector<2x64xf32> to vector<2x32xf32>
    %c8 = arith.constant 8 : index
    %c32_26 = arith.constant 32 : index
    %135 = vector.load %arg7[%c8, %c32_26] : memref<16x64xf32, #tpu.memory_space<vmem>>, vector<2x32xf32>
    tpu.vector_store %arg7[%c8, %c32_26], %134 {strides = array<i32>} : memref<16x64xf32, #tpu.memory_space<vmem>>, vector<2x32xf32>,
    %136 = vector.extract_strided_slice %5 {offsets = [8, 0], sizes = [2, 384], strides = [1, 1]} : vector<16x768xf32> to vector<2x384xf32>
    %137 = vector.extract_strided_slice %5 {offsets = [6, 384], sizes = [2, 384], strides = [1, 1]} : vector<16x768xf32> to vector<2x384xf32>
    %138 = arith.addf %136, %137 : vector<2x384xf32>
    %139 = vector.extract_strided_slice %138 {offsets = [0, 0], sizes = [2, 64], strides = [1, 1]} : vector<2x384xf32> to vector<2x64xf32>
    %140 = vector.extract_strided_slice %138 {offsets = [0, 128], sizes = [2, 64], strides = [1, 1]} : vector<2x384xf32> to vector<2x64xf32>
    %141 = vector.extract_strided_slice %138 {offsets = [0, 256], sizes = [2, 64], strides = [1, 1]} : vector<2x384xf32> to vector<2x64xf32>
    %cst_27 = arith.constant dense<0.000000e+00> : vector<2x384xf32>
    %142 = tpu.matmul %131, %6, %cst_27 {dimension_numbers = #tpu.dot_dimension_numbers<[1], [0], [0], [1], [0, 0, 1, 1], [], []>} : vector<2x64xf32>, vector<64x384xf32>, vector<2x384xf32> -> vector<2x384xf32>
    %143 = vector.extract_strided_slice %142 {offsets = [0, 0], sizes = [2, 64], strides = [1, 1]} : vector<2x384xf32> to vector<2x64xf32>
    %144 = arith.addf %139, %143 : vector<2x64xf32>
    %145 = arith.negf %144 : vector<2x64xf32>
    %146 = math.exp %145 : vector<2x64xf32>
    %cst_28 = arith.constant 1.000000e+00 : f32
    %147 = vector.broadcast %cst_28 : f32 to vector<2x64xf32>
    %148 = arith.addf %147, %146 : vector<2x64xf32>
    %149 = arith.divf %147, %148 : vector<2x64xf32>
    %150 = vector.extract_strided_slice %142 {offsets = [0, 128], sizes = [2, 64], strides = [1, 1]} : vector<2x384xf32> to vector<2x64xf32>
    %151 = arith.addf %140, %150 : vector<2x64xf32>
    %152 = arith.negf %151 : vector<2x64xf32>
    %153 = math.exp %152 : vector<2x64xf32>
    %cst_29 = arith.constant 1.000000e+00 : f32
    %154 = vector.broadcast %cst_29 : f32 to vector<2x64xf32>
    %155 = arith.addf %154, %153 : vector<2x64xf32>
    %156 = arith.divf %154, %155 : vector<2x64xf32>
    %157 = vector.extract_strided_slice %142 {offsets = [0, 256], sizes = [2, 64], strides = [1, 1]} : vector<2x384xf32> to vector<2x64xf32>
    %158 = vector.broadcast %7 : vector<1x64xf32> to vector<2x64xf32>
    %159 = arith.addf %157, %158 : vector<2x64xf32>
    %160 = arith.mulf %149, %159 : vector<2x64xf32>
    %161 = arith.addf %141, %160 : vector<2x64xf32>
    %162 = math.tanh %161 : vector<2x64xf32>
    %163 = arith.subf %131, %162 : vector<2x64xf32>
    %164 = arith.mulf %156, %163 : vector<2x64xf32>
    %165 = arith.addf %162, %164 : vector<2x64xf32>
    %166 = vector.extract_strided_slice %165 {offsets = [0, 0], sizes = [2, 32], strides = [1, 1]} : vector<2x64xf32> to vector<2x32xf32>
    %c8_30 = arith.constant 8 : index
    %c0_31 = arith.constant 0 : index
    %167 = vector.load %arg7[%c8_30, %c0_31] : memref<16x64xf32, #tpu.memory_space<vmem>>, vector<2x32xf32>
    tpu.vector_store %arg7[%c8_30, %c0_31], %166 {strides = array<i32>} : memref<16x64xf32, #tpu.memory_space<vmem>>, vector<2x32xf32>,
    %168 = vector.extract_strided_slice %165 {offsets = [0, 32], sizes = [2, 32], strides = [1, 1]} : vector<2x64xf32> to vector<2x32xf32>
    %c6_32 = arith.constant 6 : index
    %c32_33 = arith.constant 32 : index
    %169 = vector.load %arg7[%c6_32, %c32_33] : memref<16x64xf32, #tpu.memory_space<vmem>>, vector<2x32xf32>
    tpu.vector_store %arg7[%c6_32, %c32_33], %168 {strides = array<i32>} : memref<16x64xf32, #tpu.memory_space<vmem>>, vector<2x32xf32>,
    %170 = vector.extract_strided_slice %5 {offsets = [10, 0], sizes = [2, 384], strides = [1, 1]} : vector<16x768xf32> to vector<2x384xf32>
    %171 = vector.extract_strided_slice %5 {offsets = [4, 384], sizes = [2, 384], strides = [1, 1]} : vector<16x768xf32> to vector<2x384xf32>
    %172 = arith.addf %170, %171 : vector<2x384xf32>
    %173 = vector.extract_strided_slice %172 {offsets = [0, 0], sizes = [2, 64], strides = [1, 1]} : vector<2x384xf32> to vector<2x64xf32>
    %174 = vector.extract_strided_slice %172 {offsets = [0, 128], sizes = [2, 64], strides = [1, 1]} : vector<2x384xf32> to vector<2x64xf32>
    %175 = vector.extract_strided_slice %172 {offsets = [0, 256], sizes = [2, 64], strides = [1, 1]} : vector<2x384xf32> to vector<2x64xf32>
    %cst_34 = arith.constant dense<0.000000e+00> : vector<2x384xf32>
    %176 = tpu.matmul %165, %6, %cst_34 {dimension_numbers = #tpu.dot_dimension_numbers<[1], [0], [0], [1], [0, 0, 1, 1], [], []>} : vector<2x64xf32>, vector<64x384xf32>, vector<2x384xf32> -> vector<2x384xf32>
    %177 = vector.extract_strided_slice %176 {offsets = [0, 0], sizes = [2, 64], strides = [1, 1]} : vector<2x384xf32> to vector<2x64xf32>
    %178 = arith.addf %173, %177 : vector<2x64xf32>
    %179 = arith.negf %178 : vector<2x64xf32>
    %180 = math.exp %179 : vector<2x64xf32>
    %cst_35 = arith.constant 1.000000e+00 : f32
    %181 = vector.broadcast %cst_35 : f32 to vector<2x64xf32>
    %182 = arith.addf %181, %180 : vector<2x64xf32>
    %183 = arith.divf %181, %182 : vector<2x64xf32>
    %184 = vector.extract_strided_slice %176 {offsets = [0, 128], sizes = [2, 64], strides = [1, 1]} : vector<2x384xf32> to vector<2x64xf32>
    %185 = arith.addf %174, %184 : vector<2x64xf32>
    %186 = arith.negf %185 : vector<2x64xf32>
    %187 = math.exp %186 : vector<2x64xf32>
    %cst_36 = arith.constant 1.000000e+00 : f32
    %188 = vector.broadcast %cst_36 : f32 to vector<2x64xf32>
    %189 = arith.addf %188, %187 : vector<2x64xf32>
    %190 = arith.divf %188, %189 : vector<2x64xf32>
    %191 = vector.extract_strided_slice %176 {offsets = [0, 256], sizes = [2, 64], strides = [1, 1]} : vector<2x384xf32> to vector<2x64xf32>
    %192 = vector.broadcast %7 : vector<1x64xf32> to vector<2x64xf32>
    %193 = arith.addf %191, %192 : vector<2x64xf32>
    %194 = arith.mulf %183, %193 : vector<2x64xf32>
    %195 = arith.addf %175, %194 : vector<2x64xf32>
    %196 = math.tanh %195 : vector<2x64xf32>
    %197 = arith.subf %165, %196 : vector<2x64xf32>
    %198 = arith.mulf %190, %197 : vector<2x64xf32>
    %199 = arith.addf %196, %198 : vector<2x64xf32>
    %200 = vector.extract_strided_slice %199 {offsets = [0, 0], sizes = [2, 32], strides = [1, 1]} : vector<2x64xf32> to vector<2x32xf32>
    %c10_37 = arith.constant 10 : index
    %c0_38 = arith.constant 0 : index
    %201 = vector.load %arg7[%c10_37, %c0_38] : memref<16x64xf32, #tpu.memory_space<vmem>>, vector<2x32xf32>
    tpu.vector_store %arg7[%c10_37, %c0_38], %200 {strides = array<i32>} : memref<16x64xf32, #tpu.memory_space<vmem>>, vector<2x32xf32>,
    %202 = vector.extract_strided_slice %199 {offsets = [0, 32], sizes = [2, 32], strides = [1, 1]} : vector<2x64xf32> to vector<2x32xf32>
    %c4_39 = arith.constant 4 : index
    %c32_40 = arith.constant 32 : index
    %203 = vector.load %arg7[%c4_39, %c32_40] : memref<16x64xf32, #tpu.memory_space<vmem>>, vector<2x32xf32>
    tpu.vector_store %arg7[%c4_39, %c32_40], %202 {strides = array<i32>} : memref<16x64xf32, #tpu.memory_space<vmem>>, vector<2x32xf32>,
    %204 = vector.extract_strided_slice %5 {offsets = [12, 0], sizes = [2, 384], strides = [1, 1]} : vector<16x768xf32> to vector<2x384xf32>
    %205 = vector.extract_strided_slice %5 {offsets = [2, 384], sizes = [2, 384], strides = [1, 1]} : vector<16x768xf32> to vector<2x384xf32>
    %206 = arith.addf %204, %205 : vector<2x384xf32>
    %207 = vector.extract_strided_slice %206 {offsets = [0, 0], sizes = [2, 64], strides = [1, 1]} : vector<2x384xf32> to vector<2x64xf32>
    %208 = vector.extract_strided_slice %206 {offsets = [0, 128], sizes = [2, 64], strides = [1, 1]} : vector<2x384xf32> to vector<2x64xf32>
    %209 = vector.extract_strided_slice %206 {offsets = [0, 256], sizes = [2, 64], strides = [1, 1]} : vector<2x384xf32> to vector<2x64xf32>
    %cst_41 = arith.constant dense<0.000000e+00> : vector<2x384xf32>
    %210 = tpu.matmul %199, %6, %cst_41 {dimension_numbers = #tpu.dot_dimension_numbers<[1], [0], [0], [1], [0, 0, 1, 1], [], []>} : vector<2x64xf32>, vector<64x384xf32>, vector<2x384xf32> -> vector<2x384xf32>
    %211 = vector.extract_strided_slice %210 {offsets = [0, 0], sizes = [2, 64], strides = [1, 1]} : vector<2x384xf32> to vector<2x64xf32>
    %212 = arith.addf %207, %211 : vector<2x64xf32>
    %213 = arith.negf %212 : vector<2x64xf32>
    %214 = math.exp %213 : vector<2x64xf32>
    %cst_42 = arith.constant 1.000000e+00 : f32
    %215 = vector.broadcast %cst_42 : f32 to vector<2x64xf32>
    %216 = arith.addf %215, %214 : vector<2x64xf32>
    %217 = arith.divf %215, %216 : vector<2x64xf32>
    %218 = vector.extract_strided_slice %210 {offsets = [0, 128], sizes = [2, 64], strides = [1, 1]} : vector<2x384xf32> to vector<2x64xf32>
    %219 = arith.addf %208, %218 : vector<2x64xf32>
    %220 = arith.negf %219 : vector<2x64xf32>
    %221 = math.exp %220 : vector<2x64xf32>
    %cst_43 = arith.constant 1.000000e+00 : f32
    %222 = vector.broadcast %cst_43 : f32 to vector<2x64xf32>
    %223 = arith.addf %222, %221 : vector<2x64xf32>
    %224 = arith.divf %222, %223 : vector<2x64xf32>
    %225 = vector.extract_strided_slice %210 {offsets = [0, 256], sizes = [2, 64], strides = [1, 1]} : vector<2x384xf32> to vector<2x64xf32>
    %226 = vector.broadcast %7 : vector<1x64xf32> to vector<2x64xf32>
    %227 = arith.addf %225, %226 : vector<2x64xf32>
    %228 = arith.mulf %217, %227 : vector<2x64xf32>
    %229 = arith.addf %209, %228 : vector<2x64xf32>
    %230 = math.tanh %229 : vector<2x64xf32>
    %231 = arith.subf %199, %230 : vector<2x64xf32>
    %232 = arith.mulf %224, %231 : vector<2x64xf32>
    %233 = arith.addf %230, %232 : vector<2x64xf32>
    %234 = vector.extract_strided_slice %233 {offsets = [0, 0], sizes = [2, 32], strides = [1, 1]} : vector<2x64xf32> to vector<2x32xf32>
    %c12_44 = arith.constant 12 : index
    %c0_45 = arith.constant 0 : index
    %235 = vector.load %arg7[%c12_44, %c0_45] : memref<16x64xf32, #tpu.memory_space<vmem>>, vector<2x32xf32>
    tpu.vector_store %arg7[%c12_44, %c0_45], %234 {strides = array<i32>} : memref<16x64xf32, #tpu.memory_space<vmem>>, vector<2x32xf32>,
    %236 = vector.extract_strided_slice %233 {offsets = [0, 32], sizes = [2, 32], strides = [1, 1]} : vector<2x64xf32> to vector<2x32xf32>
    %c2_46 = arith.constant 2 : index
    %c32_47 = arith.constant 32 : index
    %237 = vector.load %arg7[%c2_46, %c32_47] : memref<16x64xf32, #tpu.memory_space<vmem>>, vector<2x32xf32>
    tpu.vector_store %arg7[%c2_46, %c32_47], %236 {strides = array<i32>} : memref<16x64xf32, #tpu.memory_space<vmem>>, vector<2x32xf32>,
    %238 = vector.extract_strided_slice %5 {offsets = [14, 0], sizes = [2, 384], strides = [1, 1]} : vector<16x768xf32> to vector<2x384xf32>
    %239 = vector.extract_strided_slice %5 {offsets = [0, 384], sizes = [2, 384], strides = [1, 1]} : vector<16x768xf32> to vector<2x384xf32>
    %240 = arith.addf %238, %239 : vector<2x384xf32>
    %241 = vector.extract_strided_slice %240 {offsets = [0, 0], sizes = [2, 64], strides = [1, 1]} : vector<2x384xf32> to vector<2x64xf32>
    %242 = vector.extract_strided_slice %240 {offsets = [0, 128], sizes = [2, 64], strides = [1, 1]} : vector<2x384xf32> to vector<2x64xf32>
    %243 = vector.extract_strided_slice %240 {offsets = [0, 256], sizes = [2, 64], strides = [1, 1]} : vector<2x384xf32> to vector<2x64xf32>
    %cst_48 = arith.constant dense<0.000000e+00> : vector<2x384xf32>
    %244 = tpu.matmul %233, %6, %cst_48 {dimension_numbers = #tpu.dot_dimension_numbers<[1], [0], [0], [1], [0, 0, 1, 1], [], []>} : vector<2x64xf32>, vector<64x384xf32>, vector<2x384xf32> -> vector<2x384xf32>
    %245 = vector.extract_strided_slice %244 {offsets = [0, 0], sizes = [2, 64], strides = [1, 1]} : vector<2x384xf32> to vector<2x64xf32>
    %246 = arith.addf %241, %245 : vector<2x64xf32>
    %247 = arith.negf %246 : vector<2x64xf32>
    %248 = math.exp %247 : vector<2x64xf32>
    %cst_49 = arith.constant 1.000000e+00 : f32
    %249 = vector.broadcast %cst_49 : f32 to vector<2x64xf32>
    %250 = arith.addf %249, %248 : vector<2x64xf32>
    %251 = arith.divf %249, %250 : vector<2x64xf32>
    %252 = vector.extract_strided_slice %244 {offsets = [0, 128], sizes = [2, 64], strides = [1, 1]} : vector<2x384xf32> to vector<2x64xf32>
    %253 = arith.addf %242, %252 : vector<2x64xf32>
    %254 = arith.negf %253 : vector<2x64xf32>
    %255 = math.exp %254 : vector<2x64xf32>
    %cst_50 = arith.constant 1.000000e+00 : f32
    %256 = vector.broadcast %cst_50 : f32 to vector<2x64xf32>
    %257 = arith.addf %256, %255 : vector<2x64xf32>
    %258 = arith.divf %256, %257 : vector<2x64xf32>
    %259 = vector.extract_strided_slice %244 {offsets = [0, 256], sizes = [2, 64], strides = [1, 1]} : vector<2x384xf32> to vector<2x64xf32>
    %260 = vector.broadcast %7 : vector<1x64xf32> to vector<2x64xf32>
    %261 = arith.addf %259, %260 : vector<2x64xf32>
    %262 = arith.mulf %251, %261 : vector<2x64xf32>
    %263 = arith.addf %243, %262 : vector<2x64xf32>
    %264 = math.tanh %263 : vector<2x64xf32>
    %265 = arith.subf %233, %264 : vector<2x64xf32>
    %266 = arith.mulf %258, %265 : vector<2x64xf32>
    %267 = arith.addf %264, %266 : vector<2x64xf32>
    %268 = vector.extract_strided_slice %267 {offsets = [0, 0], sizes = [2, 32], strides = [1, 1]} : vector<2x64xf32> to vector<2x32xf32>
    %c14_51 = arith.constant 14 : index
    %c0_52 = arith.constant 0 : index
    %269 = vector.load %arg7[%c14_51, %c0_52] : memref<16x64xf32, #tpu.memory_space<vmem>>, vector<2x32xf32>
    tpu.vector_store %arg7[%c14_51, %c0_52], %268 {strides = array<i32>} : memref<16x64xf32, #tpu.memory_space<vmem>>, vector<2x32xf32>,
    %270 = vector.extract_strided_slice %267 {offsets = [0, 32], sizes = [2, 32], strides = [1, 1]} : vector<2x64xf32> to vector<2x32xf32>
    %c0_53 = arith.constant 0 : index
    %c32_54 = arith.constant 32 : index
    %271 = vector.load %arg7[%c0_53, %c32_54] : memref<16x64xf32, #tpu.memory_space<vmem>>, vector<2x32xf32>
    tpu.vector_store %arg7[%c0_53, %c32_54], %270 {strides = array<i32>} : memref<16x64xf32, #tpu.memory_space<vmem>>, vector<2x32xf32>,
    %c0_55 = arith.constant 0 : index
    %c0_56 = arith.constant 0 : index
    %272 = vector.load %arg7[%c0_55, %c0_56] : memref<16x64xf32, #tpu.memory_space<vmem>>, vector<16x64xf32>
    %c64 = arith.constant 64 : index
    %c0_57 = arith.constant 0 : index
    %273 = vector.load %arg1[%c64, %c0_57] : memref<128x768xf32, #tpu.memory_space<vmem>>, vector<64x768xf32>
    %cst_58 = arith.constant dense<0.000000e+00> : vector<16x768xf32>
    %274 = tpu.matmul %272, %273, %cst_58 {dimension_numbers = #tpu.dot_dimension_numbers<[1], [0], [0], [1], [0, 0, 1, 1], [], []>} : vector<16x64xf32>, vector<64x768xf32>, vector<16x768xf32> -> vector<16x768xf32>
    %c2_59 = arith.constant 2 : index
    %c0_60 = arith.constant 0 : index
    %275 = vector.load %arg3[%c2_59, %c0_60] : memref<4x768xf32, #tpu.memory_space<vmem>>, vector<1x768xf32>
    %276 = vector.broadcast %275 : vector<1x768xf32> to vector<16x768xf32>
    %277 = arith.addf %274, %276 : vector<16x768xf32>
    %c64_61 = arith.constant 64 : index
    %c0_62 = arith.constant 0 : index
    %278 = vector.load %arg2[%c64_61, %c0_62] : memref<128x384xf32, #tpu.memory_space<vmem>>, vector<64x384xf32>
    %c3 = arith.constant 3 : index
    %c0_63 = arith.constant 0 : index
    %279 = vector.load %arg3[%c3, %c0_63] : memref<4x768xf32, #tpu.memory_space<vmem>>, vector<1x64xf32>
    %280 = vector.extract_strided_slice %277 {offsets = [0, 0], sizes = [2, 384], strides = [1, 1]} : vector<16x768xf32> to vector<2x384xf32>
    %281 = vector.extract_strided_slice %277 {offsets = [14, 384], sizes = [2, 384], strides = [1, 1]} : vector<16x768xf32> to vector<2x384xf32>
    %282 = arith.addf %280, %281 : vector<2x384xf32>
    %283 = vector.extract_strided_slice %282 {offsets = [0, 0], sizes = [2, 64], strides = [1, 1]} : vector<2x384xf32> to vector<2x64xf32>
    %284 = vector.extract_strided_slice %282 {offsets = [0, 128], sizes = [2, 64], strides = [1, 1]} : vector<2x384xf32> to vector<2x64xf32>
    %285 = vector.extract_strided_slice %282 {offsets = [0, 256], sizes = [2, 64], strides = [1, 1]} : vector<2x384xf32> to vector<2x64xf32>
    %286 = arith.negf %283 : vector<2x64xf32>
    %287 = math.exp %286 : vector<2x64xf32>
    %cst_64 = arith.constant 1.000000e+00 : f32
    %288 = vector.broadcast %cst_64 : f32 to vector<2x64xf32>
    %289 = arith.addf %288, %287 : vector<2x64xf32>
    %290 = arith.divf %288, %289 : vector<2x64xf32>
    %291 = arith.negf %284 : vector<2x64xf32>
    %292 = math.exp %291 : vector<2x64xf32>
    %cst_65 = arith.constant 1.000000e+00 : f32
    %293 = vector.broadcast %cst_65 : f32 to vector<2x64xf32>
    %294 = arith.addf %293, %292 : vector<2x64xf32>
    %295 = arith.divf %293, %294 : vector<2x64xf32>
    %296 = vector.broadcast %279 : vector<1x64xf32> to vector<2x64xf32>
    %297 = arith.mulf %290, %296 : vector<2x64xf32>
    %298 = arith.addf %285, %297 : vector<2x64xf32>
    %299 = math.tanh %298 : vector<2x64xf32>
    %300 = arith.mulf %295, %299 : vector<2x64xf32>
    %301 = arith.subf %299, %300 : vector<2x64xf32>
    %302 = vector.extract_strided_slice %277 {offsets = [2, 0], sizes = [2, 384], strides = [1, 1]} : vector<16x768xf32> to vector<2x384xf32>
    %303 = vector.extract_strided_slice %277 {offsets = [12, 384], sizes = [2, 384], strides = [1, 1]} : vector<16x768xf32> to vector<2x384xf32>
    %304 = arith.addf %302, %303 : vector<2x384xf32>
    %305 = vector.extract_strided_slice %304 {offsets = [0, 0], sizes = [2, 64], strides = [1, 1]} : vector<2x384xf32> to vector<2x64xf32>
    %306 = vector.extract_strided_slice %304 {offsets = [0, 128], sizes = [2, 64], strides = [1, 1]} : vector<2x384xf32> to vector<2x64xf32>
    %307 = vector.extract_strided_slice %304 {offsets = [0, 256], sizes = [2, 64], strides = [1, 1]} : vector<2x384xf32> to vector<2x64xf32>
    %cst_66 = arith.constant dense<0.000000e+00> : vector<2x384xf32>
    %308 = tpu.matmul %301, %278, %cst_66 {dimension_numbers = #tpu.dot_dimension_numbers<[1], [0], [0], [1], [0, 0, 1, 1], [], []>} : vector<2x64xf32>, vector<64x384xf32>, vector<2x384xf32> -> vector<2x384xf32>
    %309 = vector.extract_strided_slice %308 {offsets = [0, 0], sizes = [2, 64], strides = [1, 1]} : vector<2x384xf32> to vector<2x64xf32>
    %310 = arith.addf %305, %309 : vector<2x64xf32>
    %311 = arith.negf %310 : vector<2x64xf32>
    %312 = math.exp %311 : vector<2x64xf32>
    %cst_67 = arith.constant 1.000000e+00 : f32
    %313 = vector.broadcast %cst_67 : f32 to vector<2x64xf32>
    %314 = arith.addf %313, %312 : vector<2x64xf32>
    %315 = arith.divf %313, %314 : vector<2x64xf32>
    %316 = vector.extract_strided_slice %308 {offsets = [0, 128], sizes = [2, 64], strides = [1, 1]} : vector<2x384xf32> to vector<2x64xf32>
    %317 = arith.addf %306, %316 : vector<2x64xf32>
    %318 = arith.negf %317 : vector<2x64xf32>
    %319 = math.exp %318 : vector<2x64xf32>
    %cst_68 = arith.constant 1.000000e+00 : f32
    %320 = vector.broadcast %cst_68 : f32 to vector<2x64xf32>
    %321 = arith.addf %320, %319 : vector<2x64xf32>
    %322 = arith.divf %320, %321 : vector<2x64xf32>
    %323 = vector.extract_strided_slice %308 {offsets = [0, 256], sizes = [2, 64], strides = [1, 1]} : vector<2x384xf32> to vector<2x64xf32>
    %324 = vector.broadcast %279 : vector<1x64xf32> to vector<2x64xf32>
    %325 = arith.addf %323, %324 : vector<2x64xf32>
    %326 = arith.mulf %315, %325 : vector<2x64xf32>
    %327 = arith.addf %307, %326 : vector<2x64xf32>
    %328 = math.tanh %327 : vector<2x64xf32>
    %329 = arith.subf %301, %328 : vector<2x64xf32>
    %330 = arith.mulf %322, %329 : vector<2x64xf32>
    %331 = arith.addf %328, %330 : vector<2x64xf32>
    %332 = vector.extract_strided_slice %277 {offsets = [4, 0], sizes = [2, 384], strides = [1, 1]} : vector<16x768xf32> to vector<2x384xf32>
    %333 = vector.extract_strided_slice %277 {offsets = [10, 384], sizes = [2, 384], strides = [1, 1]} : vector<16x768xf32> to vector<2x384xf32>
    %334 = arith.addf %332, %333 : vector<2x384xf32>
    %335 = vector.extract_strided_slice %334 {offsets = [0, 0], sizes = [2, 64], strides = [1, 1]} : vector<2x384xf32> to vector<2x64xf32>
    %336 = vector.extract_strided_slice %334 {offsets = [0, 128], sizes = [2, 64], strides = [1, 1]} : vector<2x384xf32> to vector<2x64xf32>
    %337 = vector.extract_strided_slice %334 {offsets = [0, 256], sizes = [2, 64], strides = [1, 1]} : vector<2x384xf32> to vector<2x64xf32>
    %cst_69 = arith.constant dense<0.000000e+00> : vector<2x384xf32>
    %338 = tpu.matmul %331, %278, %cst_69 {dimension_numbers = #tpu.dot_dimension_numbers<[1], [0], [0], [1], [0, 0, 1, 1], [], []>} : vector<2x64xf32>, vector<64x384xf32>, vector<2x384xf32> -> vector<2x384xf32>
    %339 = vector.extract_strided_slice %338 {offsets = [0, 0], sizes = [2, 64], strides = [1, 1]} : vector<2x384xf32> to vector<2x64xf32>
    %340 = arith.addf %335, %339 : vector<2x64xf32>
    %341 = arith.negf %340 : vector<2x64xf32>
    %342 = math.exp %341 : vector<2x64xf32>
    %cst_70 = arith.constant 1.000000e+00 : f32
    %343 = vector.broadcast %cst_70 : f32 to vector<2x64xf32>
    %344 = arith.addf %343, %342 : vector<2x64xf32>
    %345 = arith.divf %343, %344 : vector<2x64xf32>
    %346 = vector.extract_strided_slice %338 {offsets = [0, 128], sizes = [2, 64], strides = [1, 1]} : vector<2x384xf32> to vector<2x64xf32>
    %347 = arith.addf %336, %346 : vector<2x64xf32>
    %348 = arith.negf %347 : vector<2x64xf32>
    %349 = math.exp %348 : vector<2x64xf32>
    %cst_71 = arith.constant 1.000000e+00 : f32
    %350 = vector.broadcast %cst_71 : f32 to vector<2x64xf32>
    %351 = arith.addf %350, %349 : vector<2x64xf32>
    %352 = arith.divf %350, %351 : vector<2x64xf32>
    %353 = vector.extract_strided_slice %338 {offsets = [0, 256], sizes = [2, 64], strides = [1, 1]} : vector<2x384xf32> to vector<2x64xf32>
    %354 = vector.broadcast %279 : vector<1x64xf32> to vector<2x64xf32>
    %355 = arith.addf %353, %354 : vector<2x64xf32>
    %356 = arith.mulf %345, %355 : vector<2x64xf32>
    %357 = arith.addf %337, %356 : vector<2x64xf32>
    %358 = math.tanh %357 : vector<2x64xf32>
    %359 = arith.subf %331, %358 : vector<2x64xf32>
    %360 = arith.mulf %352, %359 : vector<2x64xf32>
    %361 = arith.addf %358, %360 : vector<2x64xf32>
    %362 = vector.extract_strided_slice %277 {offsets = [6, 0], sizes = [2, 384], strides = [1, 1]} : vector<16x768xf32> to vector<2x384xf32>
    %363 = vector.extract_strided_slice %277 {offsets = [8, 384], sizes = [2, 384], strides = [1, 1]} : vector<16x768xf32> to vector<2x384xf32>
    %364 = arith.addf %362, %363 : vector<2x384xf32>
    %365 = vector.extract_strided_slice %364 {offsets = [0, 0], sizes = [2, 64], strides = [1, 1]} : vector<2x384xf32> to vector<2x64xf32>
    %366 = vector.extract_strided_slice %364 {offsets = [0, 128], sizes = [2, 64], strides = [1, 1]} : vector<2x384xf32> to vector<2x64xf32>
    %367 = vector.extract_strided_slice %364 {offsets = [0, 256], sizes = [2, 64], strides = [1, 1]} : vector<2x384xf32> to vector<2x64xf32>
    %cst_72 = arith.constant dense<0.000000e+00> : vector<2x384xf32>
    %368 = tpu.matmul %361, %278, %cst_72 {dimension_numbers = #tpu.dot_dimension_numbers<[1], [0], [0], [1], [0, 0, 1, 1], [], []>} : vector<2x64xf32>, vector<64x384xf32>, vector<2x384xf32> -> vector<2x384xf32>
    %369 = vector.extract_strided_slice %368 {offsets = [0, 0], sizes = [2, 64], strides = [1, 1]} : vector<2x384xf32> to vector<2x64xf32>
    %370 = arith.addf %365, %369 : vector<2x64xf32>
    %371 = arith.negf %370 : vector<2x64xf32>
    %372 = math.exp %371 : vector<2x64xf32>
    %cst_73 = arith.constant 1.000000e+00 : f32
    %373 = vector.broadcast %cst_73 : f32 to vector<2x64xf32>
    %374 = arith.addf %373, %372 : vector<2x64xf32>
    %375 = arith.divf %373, %374 : vector<2x64xf32>
    %376 = vector.extract_strided_slice %368 {offsets = [0, 128], sizes = [2, 64], strides = [1, 1]} : vector<2x384xf32> to vector<2x64xf32>
    %377 = arith.addf %366, %376 : vector<2x64xf32>
    %378 = arith.negf %377 : vector<2x64xf32>
    %379 = math.exp %378 : vector<2x64xf32>
    %cst_74 = arith.constant 1.000000e+00 : f32
    %380 = vector.broadcast %cst_74 : f32 to vector<2x64xf32>
    %381 = arith.addf %380, %379 : vector<2x64xf32>
    %382 = arith.divf %380, %381 : vector<2x64xf32>
    %383 = vector.extract_strided_slice %368 {offsets = [0, 256], sizes = [2, 64], strides = [1, 1]} : vector<2x384xf32> to vector<2x64xf32>
    %384 = vector.broadcast %279 : vector<1x64xf32> to vector<2x64xf32>
    %385 = arith.addf %383, %384 : vector<2x64xf32>
    %386 = arith.mulf %375, %385 : vector<2x64xf32>
    %387 = arith.addf %367, %386 : vector<2x64xf32>
    %388 = math.tanh %387 : vector<2x64xf32>
    %389 = arith.subf %361, %388 : vector<2x64xf32>
    %390 = arith.mulf %382, %389 : vector<2x64xf32>
    %391 = arith.addf %388, %390 : vector<2x64xf32>
    %392 = vector.extract_strided_slice %277 {offsets = [8, 0], sizes = [2, 384], strides = [1, 1]} : vector<16x768xf32> to vector<2x384xf32>
    %393 = vector.extract_strided_slice %277 {offsets = [6, 384], sizes = [2, 384], strides = [1, 1]} : vector<16x768xf32> to vector<2x384xf32>
    %394 = arith.addf %392, %393 : vector<2x384xf32>
    %395 = vector.extract_strided_slice %394 {offsets = [0, 0], sizes = [2, 64], strides = [1, 1]} : vector<2x384xf32> to vector<2x64xf32>
    %396 = vector.extract_strided_slice %394 {offsets = [0, 128], sizes = [2, 64], strides = [1, 1]} : vector<2x384xf32> to vector<2x64xf32>
    %397 = vector.extract_strided_slice %394 {offsets = [0, 256], sizes = [2, 64], strides = [1, 1]} : vector<2x384xf32> to vector<2x64xf32>
    %cst_75 = arith.constant dense<0.000000e+00> : vector<2x384xf32>
    %398 = tpu.matmul %391, %278, %cst_75 {dimension_numbers = #tpu.dot_dimension_numbers<[1], [0], [0], [1], [0, 0, 1, 1], [], []>} : vector<2x64xf32>, vector<64x384xf32>, vector<2x384xf32> -> vector<2x384xf32>
    %399 = vector.extract_strided_slice %398 {offsets = [0, 0], sizes = [2, 64], strides = [1, 1]} : vector<2x384xf32> to vector<2x64xf32>
    %400 = arith.addf %395, %399 : vector<2x64xf32>
    %401 = arith.negf %400 : vector<2x64xf32>
    %402 = math.exp %401 : vector<2x64xf32>
    %cst_76 = arith.constant 1.000000e+00 : f32
    %403 = vector.broadcast %cst_76 : f32 to vector<2x64xf32>
    %404 = arith.addf %403, %402 : vector<2x64xf32>
    %405 = arith.divf %403, %404 : vector<2x64xf32>
    %406 = vector.extract_strided_slice %398 {offsets = [0, 128], sizes = [2, 64], strides = [1, 1]} : vector<2x384xf32> to vector<2x64xf32>
    %407 = arith.addf %396, %406 : vector<2x64xf32>
    %408 = arith.negf %407 : vector<2x64xf32>
    %409 = math.exp %408 : vector<2x64xf32>
    %cst_77 = arith.constant 1.000000e+00 : f32
    %410 = vector.broadcast %cst_77 : f32 to vector<2x64xf32>
    %411 = arith.addf %410, %409 : vector<2x64xf32>
    %412 = arith.divf %410, %411 : vector<2x64xf32>
    %413 = vector.extract_strided_slice %398 {offsets = [0, 256], sizes = [2, 64], strides = [1, 1]} : vector<2x384xf32> to vector<2x64xf32>
    %414 = vector.broadcast %279 : vector<1x64xf32> to vector<2x64xf32>
    %415 = arith.addf %413, %414 : vector<2x64xf32>
    %416 = arith.mulf %405, %415 : vector<2x64xf32>
    %417 = arith.addf %397, %416 : vector<2x64xf32>
    %418 = math.tanh %417 : vector<2x64xf32>
    %419 = arith.subf %391, %418 : vector<2x64xf32>
    %420 = arith.mulf %412, %419 : vector<2x64xf32>
    %421 = arith.addf %418, %420 : vector<2x64xf32>
    %422 = vector.extract_strided_slice %277 {offsets = [10, 0], sizes = [2, 384], strides = [1, 1]} : vector<16x768xf32> to vector<2x384xf32>
    %423 = vector.extract_strided_slice %277 {offsets = [4, 384], sizes = [2, 384], strides = [1, 1]} : vector<16x768xf32> to vector<2x384xf32>
    %424 = arith.addf %422, %423 : vector<2x384xf32>
    %425 = vector.extract_strided_slice %424 {offsets = [0, 0], sizes = [2, 64], strides = [1, 1]} : vector<2x384xf32> to vector<2x64xf32>
    %426 = vector.extract_strided_slice %424 {offsets = [0, 128], sizes = [2, 64], strides = [1, 1]} : vector<2x384xf32> to vector<2x64xf32>
    %427 = vector.extract_strided_slice %424 {offsets = [0, 256], sizes = [2, 64], strides = [1, 1]} : vector<2x384xf32> to vector<2x64xf32>
    %cst_78 = arith.constant dense<0.000000e+00> : vector<2x384xf32>
    %428 = tpu.matmul %421, %278, %cst_78 {dimension_numbers = #tpu.dot_dimension_numbers<[1], [0], [0], [1], [0, 0, 1, 1], [], []>} : vector<2x64xf32>, vector<64x384xf32>, vector<2x384xf32> -> vector<2x384xf32>
    %429 = vector.extract_strided_slice %428 {offsets = [0, 0], sizes = [2, 64], strides = [1, 1]} : vector<2x384xf32> to vector<2x64xf32>
    %430 = arith.addf %425, %429 : vector<2x64xf32>
    %431 = arith.negf %430 : vector<2x64xf32>
    %432 = math.exp %431 : vector<2x64xf32>
    %cst_79 = arith.constant 1.000000e+00 : f32
    %433 = vector.broadcast %cst_79 : f32 to vector<2x64xf32>
    %434 = arith.addf %433, %432 : vector<2x64xf32>
    %435 = arith.divf %433, %434 : vector<2x64xf32>
    %436 = vector.extract_strided_slice %428 {offsets = [0, 128], sizes = [2, 64], strides = [1, 1]} : vector<2x384xf32> to vector<2x64xf32>
    %437 = arith.addf %426, %436 : vector<2x64xf32>
    %438 = arith.negf %437 : vector<2x64xf32>
    %439 = math.exp %438 : vector<2x64xf32>
    %cst_80 = arith.constant 1.000000e+00 : f32
    %440 = vector.broadcast %cst_80 : f32 to vector<2x64xf32>
    %441 = arith.addf %440, %439 : vector<2x64xf32>
    %442 = arith.divf %440, %441 : vector<2x64xf32>
    %443 = vector.extract_strided_slice %428 {offsets = [0, 256], sizes = [2, 64], strides = [1, 1]} : vector<2x384xf32> to vector<2x64xf32>
    %444 = vector.broadcast %279 : vector<1x64xf32> to vector<2x64xf32>
    %445 = arith.addf %443, %444 : vector<2x64xf32>
    %446 = arith.mulf %435, %445 : vector<2x64xf32>
    %447 = arith.addf %427, %446 : vector<2x64xf32>
    %448 = math.tanh %447 : vector<2x64xf32>
    %449 = arith.subf %421, %448 : vector<2x64xf32>
    %450 = arith.mulf %442, %449 : vector<2x64xf32>
    %451 = arith.addf %448, %450 : vector<2x64xf32>
    %452 = vector.extract_strided_slice %277 {offsets = [12, 0], sizes = [2, 384], strides = [1, 1]} : vector<16x768xf32> to vector<2x384xf32>
    %453 = vector.extract_strided_slice %277 {offsets = [2, 384], sizes = [2, 384], strides = [1, 1]} : vector<16x768xf32> to vector<2x384xf32>
    %454 = arith.addf %452, %453 : vector<2x384xf32>
    %455 = vector.extract_strided_slice %454 {offsets = [0, 0], sizes = [2, 64], strides = [1, 1]} : vector<2x384xf32> to vector<2x64xf32>
    %456 = vector.extract_strided_slice %454 {offsets = [0, 128], sizes = [2, 64], strides = [1, 1]} : vector<2x384xf32> to vector<2x64xf32>
    %457 = vector.extract_strided_slice %454 {offsets = [0, 256], sizes = [2, 64], strides = [1, 1]} : vector<2x384xf32> to vector<2x64xf32>
    %cst_81 = arith.constant dense<0.000000e+00> : vector<2x384xf32>
    %458 = tpu.matmul %451, %278, %cst_81 {dimension_numbers = #tpu.dot_dimension_numbers<[1], [0], [0], [1], [0, 0, 1, 1], [], []>} : vector<2x64xf32>, vector<64x384xf32>, vector<2x384xf32> -> vector<2x384xf32>
    %459 = vector.extract_strided_slice %458 {offsets = [0, 0], sizes = [2, 64], strides = [1, 1]} : vector<2x384xf32> to vector<2x64xf32>
    %460 = arith.addf %455, %459 : vector<2x64xf32>
    %461 = arith.negf %460 : vector<2x64xf32>
    %462 = math.exp %461 : vector<2x64xf32>
    %cst_82 = arith.constant 1.000000e+00 : f32
    %463 = vector.broadcast %cst_82 : f32 to vector<2x64xf32>
    %464 = arith.addf %463, %462 : vector<2x64xf32>
    %465 = arith.divf %463, %464 : vector<2x64xf32>
    %466 = vector.extract_strided_slice %458 {offsets = [0, 128], sizes = [2, 64], strides = [1, 1]} : vector<2x384xf32> to vector<2x64xf32>
    %467 = arith.addf %456, %466 : vector<2x64xf32>
    %468 = arith.negf %467 : vector<2x64xf32>
    %469 = math.exp %468 : vector<2x64xf32>
    %cst_83 = arith.constant 1.000000e+00 : f32
    %470 = vector.broadcast %cst_83 : f32 to vector<2x64xf32>
    %471 = arith.addf %470, %469 : vector<2x64xf32>
    %472 = arith.divf %470, %471 : vector<2x64xf32>
    %473 = vector.extract_strided_slice %458 {offsets = [0, 256], sizes = [2, 64], strides = [1, 1]} : vector<2x384xf32> to vector<2x64xf32>
    %474 = vector.broadcast %279 : vector<1x64xf32> to vector<2x64xf32>
    %475 = arith.addf %473, %474 : vector<2x64xf32>
    %476 = arith.mulf %465, %475 : vector<2x64xf32>
    %477 = arith.addf %457, %476 : vector<2x64xf32>
    %478 = math.tanh %477 : vector<2x64xf32>
    %479 = arith.subf %451, %478 : vector<2x64xf32>
    %480 = arith.mulf %472, %479 : vector<2x64xf32>
    %481 = arith.addf %478, %480 : vector<2x64xf32>
    %482 = vector.extract_strided_slice %277 {offsets = [14, 0], sizes = [2, 384], strides = [1, 1]} : vector<16x768xf32> to vector<2x384xf32>
    %483 = vector.extract_strided_slice %277 {offsets = [0, 384], sizes = [2, 384], strides = [1, 1]} : vector<16x768xf32> to vector<2x384xf32>
    %484 = arith.addf %482, %483 : vector<2x384xf32>
    %485 = vector.extract_strided_slice %484 {offsets = [0, 0], sizes = [2, 64], strides = [1, 1]} : vector<2x384xf32> to vector<2x64xf32>
    %486 = vector.extract_strided_slice %484 {offsets = [0, 128], sizes = [2, 64], strides = [1, 1]} : vector<2x384xf32> to vector<2x64xf32>
    %487 = vector.extract_strided_slice %484 {offsets = [0, 256], sizes = [2, 64], strides = [1, 1]} : vector<2x384xf32> to vector<2x64xf32>
    %cst_84 = arith.constant dense<0.000000e+00> : vector<2x384xf32>
    %488 = tpu.matmul %481, %278, %cst_84 {dimension_numbers = #tpu.dot_dimension_numbers<[1], [0], [0], [1], [0, 0, 1, 1], [], []>} : vector<2x64xf32>, vector<64x384xf32>, vector<2x384xf32> -> vector<2x384xf32>
    %489 = vector.extract_strided_slice %488 {offsets = [0, 0], sizes = [2, 64], strides = [1, 1]} : vector<2x384xf32> to vector<2x64xf32>
    %490 = arith.addf %485, %489 : vector<2x64xf32>
    %491 = arith.negf %490 : vector<2x64xf32>
    %492 = math.exp %491 : vector<2x64xf32>
    %cst_85 = arith.constant 1.000000e+00 : f32
    %493 = vector.broadcast %cst_85 : f32 to vector<2x64xf32>
    %494 = arith.addf %493, %492 : vector<2x64xf32>
    %495 = arith.divf %493, %494 : vector<2x64xf32>
    %496 = vector.extract_strided_slice %488 {offsets = [0, 128], sizes = [2, 64], strides = [1, 1]} : vector<2x384xf32> to vector<2x64xf32>
    %497 = arith.addf %486, %496 : vector<2x64xf32>
    %498 = arith.negf %497 : vector<2x64xf32>
    %499 = math.exp %498 : vector<2x64xf32>
    %cst_86 = arith.constant 1.000000e+00 : f32
    %500 = vector.broadcast %cst_86 : f32 to vector<2x64xf32>
    %501 = arith.addf %500, %499 : vector<2x64xf32>
    %502 = arith.divf %500, %501 : vector<2x64xf32>
    %503 = vector.extract_strided_slice %488 {offsets = [0, 256], sizes = [2, 64], strides = [1, 1]} : vector<2x384xf32> to vector<2x64xf32>
    %504 = vector.broadcast %279 : vector<1x64xf32> to vector<2x64xf32>
    %505 = arith.addf %503, %504 : vector<2x64xf32>
    %506 = arith.mulf %495, %505 : vector<2x64xf32>
    %507 = arith.addf %487, %506 : vector<2x64xf32>
    %508 = math.tanh %507 : vector<2x64xf32>
    %509 = arith.subf %481, %508 : vector<2x64xf32>
    %510 = arith.mulf %502, %509 : vector<2x64xf32>
    %511 = arith.addf %508, %510 : vector<2x64xf32>
    %c0_87 = arith.constant 0 : index
    %c0_88 = arith.constant 0 : index
    %512 = vector.load %arg4[%c0_87, %c0_88] : memref<256x128xf32, #tpu.memory_space<vmem>>, vector<64x128xf32>
    %c64_89 = arith.constant 64 : index
    %c0_90 = arith.constant 0 : index
    %513 = vector.load %arg4[%c64_89, %c0_90] : memref<256x128xf32, #tpu.memory_space<vmem>>, vector<128x64xf32>
    %c192 = arith.constant 192 : index
    %c0_91 = arith.constant 0 : index
    %514 = vector.load %arg4[%c192, %c0_91] : memref<256x128xf32, #tpu.memory_space<vmem>>, vector<64x5xf32>
    %cst_92 = arith.constant dense<0.000000e+00> : vector<2x128xf32>
    %515 = tpu.matmul %511, %512, %cst_92 {dimension_numbers = #tpu.dot_dimension_numbers<[1], [0], [0], [1], [0, 0, 1, 1], [], []>} : vector<2x64xf32>, vector<64x128xf32>, vector<2x128xf32> -> vector<2x128xf32>
    %c0_93 = arith.constant 0 : index
    %c0_94 = arith.constant 0 : index
    %516 = vector.load %arg5[%c0_93, %c0_94] : memref<3x128xf32, #tpu.memory_space<vmem>>, vector<1x128xf32>
    %517 = vector.broadcast %516 : vector<1x128xf32> to vector<2x128xf32>
    %518 = arith.addf %515, %517 : vector<2x128xf32>
    %cst_95 = arith.constant 0.000000e+00 : f32
    %519 = vector.broadcast %cst_95 : f32 to vector<2x128xf32>
    %520 = arith.maximumf %518, %519 : vector<2x128xf32>
    %cst_96 = arith.constant dense<0.000000e+00> : vector<2x64xf32>
    %521 = tpu.matmul %520, %513, %cst_96 {dimension_numbers = #tpu.dot_dimension_numbers<[1], [0], [0], [1], [0, 0, 1, 1], [], []>} : vector<2x128xf32>, vector<128x64xf32>, vector<2x64xf32> -> vector<2x64xf32>
    %c1_97 = arith.constant 1 : index
    %c0_98 = arith.constant 0 : index
    %522 = vector.load %arg5[%c1_97, %c0_98] : memref<3x128xf32, #tpu.memory_space<vmem>>, vector<1x64xf32>
    %523 = vector.broadcast %522 : vector<1x64xf32> to vector<2x64xf32>
    %524 = arith.addf %521, %523 : vector<2x64xf32>
    %cst_99 = arith.constant 0.000000e+00 : f32
    %525 = vector.broadcast %cst_99 : f32 to vector<2x64xf32>
    %526 = arith.maximumf %524, %525 : vector<2x64xf32>
    %cst_100 = arith.constant dense<0.000000e+00> : vector<2x5xf32>
    %527 = tpu.matmul %526, %514, %cst_100 {dimension_numbers = #tpu.dot_dimension_numbers<[1], [0], [0], [1], [0, 0, 1, 1], [], []>} : vector<2x64xf32>, vector<64x5xf32>, vector<2x5xf32> -> vector<2x5xf32>
    %c2_101 = arith.constant 2 : index
    %c0_102 = arith.constant 0 : index
    %528 = vector.load %arg5[%c2_101, %c0_102] : memref<3x128xf32, #tpu.memory_space<vmem>>, vector<1x5xf32>
    %529 = vector.broadcast %528 : vector<1x5xf32> to vector<2x5xf32>
    %530 = arith.addf %527, %529 : vector<2x5xf32>
    %c0_103 = arith.constant 0 : index
    %c0_104 = arith.constant 0 : index
    %531 = vector.load %arg6[%c0_103, %c0_104] : memref<2x5xf32, #tpu.memory_space<vmem>>, vector<2x5xf32>
    tpu.vector_store %arg6[%c0_103, %c0_104], %530 {strides = array<i32>} : memref<2x5xf32, #tpu.memory_space<vmem>>, vector<2x5xf32>,
    return
  }
}

</mosaic_0001>

<llo_original>
// kernel: gru_model_forward.1
$region0: #{gru_model_forward.1}
  #allocation0 [shape = 'u32[]', space=smem, size = 0x4, offset = 0x4, fixed_abs, tag = 'smem constant byte address 0x4 - core index']
  #allocation1 [shape = 'u32[72,128]{1,0:T(1,128)}', space=vmem, size = 0x9000, scoped, tag = 'internal scratch']
  #allocation2 [shape = 'f32[16,64]{1,0:T(8,128)}', space=vmem, size = 0x2000, scoped, tag = 'scratch operand']
  %s0 = inlined_call_operand.vmem [shape: f32[16,4], index: 0, kind: input, shape index: {}]
  %s1 = inlined_call_operand.vmem [shape: f32[128,768], index: 1, kind: input, shape index: {}]
  %s2 = inlined_call_operand.vmem [shape: f32[128,384], index: 2, kind: input, shape index: {}]
  %s3 = inlined_call_operand.vmem [shape: f32[4,768], index: 3, kind: input, shape index: {}]
  %s4 = inlined_call_operand.vmem [shape: f32[256,128], index: 4, kind: input, shape index: {}]
  %s5 = inlined_call_operand.vmem [shape: f32[3,128], index: 5, kind: input, shape index: {}]
  %s6 = inlined_call_operand.hbm [shape: f32[2,5], index: 6, kind: output, shape index: {}]
  %s7 = sld [smem:[#allocation0]]
  $region34: #{gru_model_forward.1} parent=0
    _
  %s9 = ssub.s32 1, %s7
  %s10 = scalar_select 0, %s9, %s7
  $region1: #{gru_model_forward.1} parent=0
    #allocation3 [shape = 'u8[1024]{0}', space=vmem, size = 0x400, scoped, tag = 'output window, operand 0, single buffered']
    #allocation4 [shape = 's32[1]{0}', space=sflag, size = 0x4, scoped, tag = 'scoped memory for gru_model_forward.1']
    %11 = vsyncpa [#allocation4], 0
    // Predicated region
    $region2: #{gru_model_forward.1} parent=1 // pred_check
      _
    $region3: #{gru_model_forward.1} parent=1 // pred_check_branch
      %13 = sbr.rel (0) target = $region5
    $region4: #{gru_model_forward.1} parent=1 // pred_region
      _
    $region5: #{gru_model_forward.1} parent=1 // pred_fallthru
      _
    // Predicated region
    $region6: #{gru_model_forward.1} parent=1 // pred_check
      _
    $region7: #{gru_model_forward.1} parent=1 // pred_check_branch
      %15 = sbr.rel (0) target = $region9
    $region8: #{gru_model_forward.1} parent=1 // pred_region
      _
    $region9: #{gru_model_forward.1} parent=1 // pred_fallthru
      _
    // Predicated region
    $region10: #{gru_model_forward.1} parent=1 // pred_check
      _
    $region11: #{gru_model_forward.1} parent=1 // pred_check_branch
      %17 = sbr.rel (0) target = $region13
    $region12: #{gru_model_forward.1} parent=1 // pred_region
      _
    $region13: #{gru_model_forward.1} parent=1 // pred_fallthru
      _
    // Predicated region
    $region14: #{gru_model_forward.1} parent=1 // pred_check
      _
    $region15: #{gru_model_forward.1} parent=1 // pred_check_branch
      %19 = sbr.rel (0) target = $region17
    $region16: #{gru_model_forward.1} parent=1 // pred_region
      _
    $region17: #{gru_model_forward.1} parent=1 // pred_fallthru
      _
    // Predicated region
    $region18: #{gru_model_forward.1} parent=1 // pred_check
      _
    $region19: #{gru_model_forward.1} parent=1 // pred_check_branch
      %21 = sbr.rel (0) target = $region21
    $region20: #{gru_model_forward.1} parent=1 // pred_region
      _
    $region21: #{gru_model_forward.1} parent=1 // pred_fallthru
      _
    // Predicated region
    $region22: #{gru_model_forward.1} parent=1 // pred_check
      _
    $region23: #{gru_model_forward.1} parent=1 // pred_check_branch
      %23 = sbr.rel (0) target = $region25
    $region24: #{gru_model_forward.1} parent=1 // pred_region
      _
    $region25: #{gru_model_forward.1} parent=1 // pred_fallthru
      _
    %v24 = vld [vmem:[%s0] sm:$0xff]
    %v25 = vld [vmem:[%s0 + $0x8] sm:$0xff]
    %v26 = vld [vmem:[%s1] sm:$0xf]
    %v27 = vld [vmem:[%s1 + $0x8] sm:$0xf]
    %v28 = vld [vmem:[%s1 + $0x10] sm:$0xf]
    %v29 = vld [vmem:[%s1 + $0x18] sm:$0xf]
    %v30 = vld [vmem:[%s1 + $0x20] sm:$0xf]
    %v31 = vld [vmem:[%s1 + $0x28] sm:$0xf]
    %v32 = vld [vmem:[%s3] ss:$4 sm:$0x3f]
    %v34 = vperm.slane %v32, 0
    %v35 = vperm.slane %v32, 1
    %v36 = vperm.slane %v32, 2
    %v37 = vperm.slane %v32, 3
    %v38 = vperm.slane %v32, 4
    %v39 = vperm.slane %v32, 5
    %vm46 = vcmask 31744
    %v48 = vsel %vm46, %v24, 0
    %v51 = vsel %vm46, %v25, 0
    %vm53 = vcmask 1043456
    %v55 = vsel %vm53, %v26, 0
    %v58 = vsel %vm53, %v27, 0
    %v61 = vsel %vm53, %v28, 0
    %v64 = vsel %vm53, %v29, 0
    %v67 = vsel %vm53, %v30, 0
    %v70 = vsel %vm53, %v31, 0
    %72 = vmatpush.msra.mxu0 0.0
    %73 = vmatpush.msra.mxu0 0.0
    %74 = vmatpush.msra.mxu0 0.0
    %75 = vmatpush.msra.mxu0 0.0
    %76 = vmatpush.msra.mxu0 0.0
    %77 = vmatpush.msra.mxu0 0.0
    %78 = vmatpush.msra.mxu0 0.0
    %79 = vmatpush.msra.mxu0 0.0
    %80 = vmatpush.msra.mxu0 0.0
    %81 = vmatpush.msra.mxu0 0.0
    %82 = vmatpush.msra.mxu0 0.0
    %83 = vmatpush.msra.mxu0 0.0
    %84 = vmatpush.msra.mxu0 0.0
    %85 = vmatpush.msra.mxu0 0.0
    %86 = vmatpush.msra.mxu0 0.0
    %87 = vmatpush.msra.mxu0 %v55
    %88 = vmatmul.f32.gmra.mxu0 %v48
    %v89 = vpop.f32.mrf.mxu0
    %v90 = vadd.f32 %v34, %v89
    %91 = vmatmul.f32.gmra.mxu0 %v51
    %v92 = vpop.f32.mrf.mxu0
    %v93 = vadd.f32 %v34, %v92
    %94 = vdwg.mxu0
    %95 = vmatpush.msra.mxu0 0.0
    %96 = vmatpush.msra.mxu0 0.0
    %97 = vmatpush.msra.mxu0 0.0
    %98 = vmatpush.msra.mxu0 0.0
    %99 = vmatpush.msra.mxu0 0.0
    %100 = vmatpush.msra.mxu0 0.0
    %101 = vmatpush.msra.mxu0 0.0
    %102 = vmatpush.msra.mxu0 0.0
    %103 = vmatpush.msra.mxu0 0.0
    %104 = vmatpush.msra.mxu0 0.0
    %105 = vmatpush.msra.mxu0 0.0
    %106 = vmatpush.msra.mxu0 0.0
    %107 = vmatpush.msra.mxu0 0.0
    %108 = vmatpush.msra.mxu0 0.0
    %109 = vmatpush.msra.mxu0 0.0
    %110 = vmatpush.msra.mxu0 %v58
    %111 = vmatmul.f32.gmra.mxu0 %v48
    %v112 = vpop.f32.mrf.mxu0
    %v113 = vadd.f32 %v35, %v112
    %114 = vmatmul.f32.gmra.mxu0 %v51
    %v115 = vpop.f32.mrf.mxu0
    %v116 = vadd.f32 %v35, %v115
    %117 = vdwg.mxu0
    %118 = vmatpush.msra.mxu0 0.0
    %119 = vmatpush.msra.mxu0 0.0
    %120 = vmatpush.msra.mxu0 0.0
    %121 = vmatpush.msra.mxu0 0.0
    %122 = vmatpush.msra.mxu0 0.0
    %123 = vmatpush.msra.mxu0 0.0
    %124 = vmatpush.msra.mxu0 0.0
    %125 = vmatpush.msra.mxu0 0.0
    %126 = vmatpush.msra.mxu0 0.0
    %127 = vmatpush.msra.mxu0 0.0
    %128 = vmatpush.msra.mxu0 0.0
    %129 = vmatpush.msra.mxu0 0.0
    %130 = vmatpush.msra.mxu0 0.0
    %131 = vmatpush.msra.mxu0 0.0
    %132 = vmatpush.msra.mxu0 0.0
    %133 = vmatpush.msra.mxu0 %v61
    %134 = vmatmul.f32.gmra.mxu0 %v48
    %v135 = vpop.f32.mrf.mxu0
    %v136 = vadd.f32 %v36, %v135
    %137 = vmatmul.f32.gmra.mxu0 %v51
    %v138 = vpop.f32.mrf.mxu0
    %v139 = vadd.f32 %v36, %v138
    %140 = vdwg.mxu0
    %141 = vmatpush.msra.mxu0 0.0
    %142 = vmatpush.msra.mxu0 0.0
    %143 = vmatpush.msra.mxu0 0.0
    %144 = vmatpush.msra.mxu0 0.0
    %145 = vmatpush.msra.mxu0 0.0
    %146 = vmatpush.msra.mxu0 0.0
    %147 = vmatpush.msra.mxu0 0.0
    %148 = vmatpush.msra.mxu0 0.0
    %149 = vmatpush.msra.mxu0 0.0
    %150 = vmatpush.msra.mxu0 0.0
    %151 = vmatpush.msra.mxu0 0.0
    %152 = vmatpush.msra.mxu0 0.0
    %153 = vmatpush.msra.mxu0 0.0
    %154 = vmatpush.msra.mxu0 0.0
    %155 = vmatpush.msra.mxu0 0.0
    %156 = vmatpush.msra.mxu0 %v64
    %157 = vmatmul.f32.gmra.mxu0 %v48
    %v158 = vpop.f32.mrf.mxu0
    %v159 = vadd.f32 %v37, %v158
    %160 = vmatmul.f32.gmra.mxu0 %v51
    %v161 = vpop.f32.mrf.mxu0
    %v162 = vadd.f32 %v37, %v161
    %163 = vdwg.mxu0
    %164 = vmatpush.msra.mxu0 0.0
    %165 = vmatpush.msra.mxu0 0.0
    %166 = vmatpush.msra.mxu0 0.0
    %167 = vmatpush.msra.mxu0 0.0
    %168 = vmatpush.msra.mxu0 0.0
    %169 = vmatpush.msra.mxu0 0.0
    %170 = vmatpush.msra.mxu0 0.0
    %171 = vmatpush.msra.mxu0 0.0
    %172 = vmatpush.msra.mxu0 0.0
    %173 = vmatpush.msra.mxu0 0.0
    %174 = vmatpush.msra.mxu0 0.0
    %175 = vmatpush.msra.mxu0 0.0
    %176 = vmatpush.msra.mxu0 0.0
    %177 = vmatpush.msra.mxu0 0.0
    %178 = vmatpush.msra.mxu0 0.0
    %179 = vmatpush.msra.mxu0 %v67
    %180 = vmatmul.f32.gmra.mxu0 %v48
    %v181 = vpop.f32.mrf.mxu0
    %v182 = vadd.f32 %v38, %v181
    %183 = vmatmul.f32.gmra.mxu0 %v51
    %v184 = vpop.f32.mrf.mxu0
    %v185 = vadd.f32 %v38, %v184
    %186 = vdwg.mxu0
    %187 = vmatpush.msra.mxu0 0.0
    %188 = vmatpush.msra.mxu0 0.0
    %189 = vmatpush.msra.mxu0 0.0
    %190 = vmatpush.msra.mxu0 0.0
    %191 = vmatpush.msra.mxu0 0.0
    %192 = vmatpush.msra.mxu0 0.0
    %193 = vmatpush.msra.mxu0 0.0
    %194 = vmatpush.msra.mxu0 0.0
    %195 = vmatpush.msra.mxu0 0.0
    %196 = vmatpush.msra.mxu0 0.0
    %197 = vmatpush.msra.mxu0 0.0
    %198 = vmatpush.msra.mxu0 0.0
    %199 = vmatpush.msra.mxu0 0.0
    %200 = vmatpush.msra.mxu0 0.0
    %201 = vmatpush.msra.mxu0 0.0
    %202 = vmatpush.msra.mxu0 %v70
    %203 = vmatmul.f32.gmra.mxu0 %v48
    %v204 = vpop.f32.mrf.mxu0
    %v205 = vadd.f32 %v39, %v204
    %206 = vmatmul.f32.gmra.mxu0 %v51
    %v207 = vpop.f32.mrf.mxu0
    %v208 = vadd.f32 %v39, %v207
    %209 = vdwg.mxu0
    %v210 = vld [vmem:[%s2] sm:$0xff]
    %v211 = vld [vmem:[%s2 + $0x8] sm:$0xff]
    %v212 = vld [vmem:[%s2 + $0x10] sm:$0xff]
    %v213 = vld [vmem:[%s2 + $0x18] sm:$0xff]
    %v214 = vld [vmem:[%s2 + $0x20] sm:$0xff]
    %v215 = vld [vmem:[%s2 + $0x28] sm:$0xff]
    %v216 = vld [vmem:[%s2 + $0x30] sm:$0xff]
    %v217 = vld [vmem:[%s2 + $0x38] sm:$0xff]
    %v218 = vld [vmem:[%s2 + $0x40] sm:$0xff]
    %v219 = vld [vmem:[%s2 + $0x48] sm:$0xff]
    %v220 = vld [vmem:[%s2 + $0x50] sm:$0xff]
    %v221 = vld [vmem:[%s2 + $0x58] sm:$0xff]
    %v222 = vld [vmem:[%s2 + $0x60] sm:$0xff]
    %v223 = vld [vmem:[%s2 + $0x68] sm:$0xff]
    %v224 = vld [vmem:[%s2 + $0x70] sm:$0xff]
    %v225 = vld [vmem:[%s2 + $0x78] sm:$0xff]
    %v226 = vld [vmem:[%s2 + $0x80] sm:$0xff]
    %v227 = vld [vmem:[%s2 + $0x88] sm:$0xff]
    %v228 = vld [vmem:[%s2 + $0x90] sm:$0xff]
    %v229 = vld [vmem:[%s2 + $0x98] sm:$0xff]
    %v230 = vld [vmem:[%s2 + $0xa0] sm:$0xff]
    %v231 = vld [vmem:[%s2 + $0xa8] sm:$0xff]
    %v232 = vld [vmem:[%s2 + $0xb0] sm:$0xff]
    %v233 = vld [vmem:[%s2 + $0xb8] sm:$0xff]
    %v234 = vld [vmem:[%s3 + $0x1] sm:$0x1]
    %v238 = vrot.slane %v162, 6
    %v239 = vrot.slane %v185, 6
    %v240 = vrot.slane %v208, 6
    %v244 = vadd.f32 %v90, %v238
    %v245 = vadd.f32 %v113, %v239
    %v246 = vadd.f32 %v136, %v240
    %v247 = vxor.u32 %v244, 2147483648
    %v248 = vmul.f32 %v247, 1.442695
    %v249 = vpow.pop %v248
    %v250 = vadd.f32 %v249, 1.0
    %v251 = vrcp.pop %v250
    %v252 = vmul.f32 %v250, %v251
    %v253 = vsub.f32 1.0, %v252
    %v254 = vmul.f32 %v251, %v253
    %v255 = vadd.f32 %v251, %v254
    %vm256 = vweird.f32 %v250
    %vm257 = vweird.f32 %v251
    %vm258 = vmor %vm256, %vm257
    %v259 = vsel %vm258, %v251, %v255
    %v260 = vand.u32 2147483647, %v250
    %vm261 = vcmp.eq.f32.partialorder %v260, 8.507059e+37
    %v262 = vand.u32 %v250, 2147483648
    %v263 = vor.u32 1.1754944e-38, %v262
    %v264 = vsel %vm261, %v263, %v259
    %v265 = vmul.f32 1.0, %v264
    %v266 = vxor.u32 %v245, 2147483648
    %v267 = vmul.f32 %v266, 1.442695
    %v268 = vpow.pop %v267
    %v269 = vadd.f32 %v268, 1.0
    %v270 = vrcp.pop %v269
    %v271 = vmul.f32 %v269, %v270
    %v272 = vsub.f32 1.0, %v271
    %v273 = vmul.f32 %v270, %v272
    %v274 = vadd.f32 %v270, %v273
    %vm275 = vweird.f32 %v269
    %vm276 = vweird.f32 %v270
    %vm277 = vmor %vm275, %vm276
    %v278 = vsel %vm277, %v270, %v274
    %v279 = vand.u32 2147483647, %v269
    %vm280 = vcmp.eq.f32.partialorder %v279, 8.507059e+37
    %v281 = vand.u32 %v269, 2147483648
    %v282 = vor.u32 1.1754944e-38, %v281
    %v283 = vsel %vm280, %v282, %v278
    %v284 = vmul.f32 1.0, %v283
    %v285 = vperm.slane %v234, 0
    %v286 = vmul.f32 %v265, %v285
    %v287 = vadd.f32 %v246, %v286
    %v288 = vtanh.pop %v287
    %v289 = vmul.f32 %v284, %v288
    %v290 = vsub.f32 %v288, %v289
    %vm291 = vcmask 254976
    %292 = vst.msk [vmem:[#allocation2] sm:$0x3] %vm291, %v290
    %vm293 = vcmask 517376
    %294 = vst.msk [vmem:[#allocation2 + $0xe] sm:$0x3] %vm293, %v290
    %v295 = vrot.slane %v162, 2
    %v296 = vrot.slane %v185, 2
    %v297 = vrot.slane %v208, 2
    %v301 = vadd.f32 %v90, %v295
    %v302 = vadd.f32 %v113, %v296
    %v303 = vadd.f32 %v136, %v297
    %vm304 = vcmask 523264
    %v306 = vsel %vm304, %v290, 0
    %308 = vmatpush.msra.mxu0 0.0
    %309 = vmatpush.msra.mxu0 0.0
    %310 = vmatpush.msra.mxu0 0.0
    %311 = vmatpush.msra.mxu0 0.0
    %312 = vmatpush.msra.mxu0 0.0
    %313 = vmatpush.msra.mxu0 0.0
    %314 = vmatpush.msra.mxu0 0.0
    %315 = vmatpush.msra.mxu0 0.0
    %316 = vmatpush.msra.mxu0 %v231
    %317 = vmatpush.msra.mxu0 %v228
    %318 = vmatpush.msra.mxu0 %v225
    %319 = vmatpush.msra.mxu0 %v222
    %320 = vmatpush.msra.mxu0 %v219
    %321 = vmatpush.msra.mxu0 %v216
    %322 = vmatpush.msra.mxu0 %v213
    %323 = vmatpush.msra.mxu0 %v210
    %324 = vmatmul.f32.gmra.mxu0 %v306
    %v325 = vpop.f32.mrf.mxu0
    %v326 = vadd.f32 0.0, %v325
    %327 = vdwg.mxu0
    %328 = vmatpush.msra.mxu0 0.0
    %329 = vmatpush.msra.mxu0 0.0
    %330 = vmatpush.msra.mxu0 0.0
    %331 = vmatpush.msra.mxu0 0.0
    %332 = vmatpush.msra.mxu0 0.0
    %333 = vmatpush.msra.mxu0 0.0
    %334 = vmatpush.msra.mxu0 0.0
    %335 = vmatpush.msra.mxu0 0.0
    %336 = vmatpush.msra.mxu0 %v232
    %337 = vmatpush.msra.mxu0 %v229
    %338 = vmatpush.msra.mxu0 %v226
    %339 = vmatpush.msra.mxu0 %v223
    %340 = vmatpush.msra.mxu0 %v220
    %341 = vmatpush.msra.mxu0 %v217
    %342 = vmatpush.msra.mxu0 %v214
    %343 = vmatpush.msra.mxu0 %v211
    %344 = vmatmul.f32.gmra.mxu0 %v306
    %v345 = vpop.f32.mrf.mxu0
    %v346 = vadd.f32 0.0, %v345
    %347 = vdwg.mxu0
    %348 = vmatpush.msra.mxu0 0.0
    %349 = vmatpush.msra.mxu0 0.0
    %350 = vmatpush.msra.mxu0 0.0
    %351 = vmatpush.msra.mxu0 0.0
    %352 = vmatpush.msra.mxu0 0.0
    %353 = vmatpush.msra.mxu0 0.0
    %354 = vmatpush.msra.mxu0 0.0
    %355 = vmatpush.msra.mxu0 0.0
    %356 = vmatpush.msra.mxu0 %v233
    %357 = vmatpush.msra.mxu0 %v230
    %358 = vmatpush.msra.mxu0 %v227
    %359 = vmatpush.msra.mxu0 %v224
    %360 = vmatpush.msra.mxu0 %v221
    %361 = vmatpush.msra.mxu0 %v218
    %362 = vmatpush.msra.mxu0 %v215
    %363 = vmatpush.msra.mxu0 %v212
    %364 = vmatmul.f32.gmra.mxu0 %v306
    %v365 = vpop.f32.mrf.mxu0
    %v366 = vadd.f32 0.0, %v365
    %367 = vdwg.mxu0
    %v369 = vrot.slane %v326, 6
    %v371 = vadd.f32 %v301, %v369
    %v372 = vxor.u32 %v371, 2147483648
    %v373 = vmul.f32 %v372, 1.442695
    %v374 = vpow.pop %v373
    %v375 = vadd.f32 %v374, 1.0
    %v376 = vrcp.pop %v375
    %v377 = vmul.f32 %v375, %v376
    %v378 = vsub.f32 1.0, %v377
    %v379 = vmul.f32 %v376, %v378
    %v380 = vadd.f32 %v376, %v379
    %vm381 = vweird.f32 %v375
    %vm382 = vweird.f32 %v376
    %vm383 = vmor %vm381, %vm382
    %v384 = vsel %vm383, %v376, %v380
    %v385 = vand.u32 2147483647, %v375
    %vm386 = vcmp.eq.f32.partialorder %v385, 8.507059e+37
    %v387 = vand.u32 %v375, 2147483648
    %v388 = vor.u32 1.1754944e-38, %v387
    %v389 = vsel %vm386, %v388, %v384
    %v390 = vmul.f32 1.0, %v389
    %v392 = vrot.slane %v346, 6
    %v394 = vadd.f32 %v302, %v392
    %v395 = vxor.u32 %v394, 2147483648
    %v396 = vmul.f32 %v395, 1.442695
    %v397 = vpow.pop %v396
    %v398 = vadd.f32 %v397, 1.0
    %v399 = vrcp.pop %v398
    %v400 = vmul.f32 %v398, %v399
    %v401 = vsub.f32 1.0, %v400
    %v402 = vmul.f32 %v399, %v401
    %v403 = vadd.f32 %v399, %v402
    %vm404 = vweird.f32 %v398
    %vm405 = vweird.f32 %v399
    %vm406 = vmor %vm404, %vm405
    %v407 = vsel %vm406, %v399, %v403
    %v408 = vand.u32 2147483647, %v398
    %vm409 = vcmp.eq.f32.partialorder %v408, 8.507059e+37
    %v410 = vand.u32 %v398, 2147483648
    %v411 = vor.u32 1.1754944e-38, %v410
    %v412 = vsel %vm409, %v411, %v407
    %v413 = vmul.f32 1.0, %v412
    %v414 = vadd.f32 %v366, %v285
    %v416 = vrot.slane %v414, 6
    %v418 = vmul.f32 %v390, %v416
    %v419 = vadd.f32 %v303, %v418
    %v420 = vtanh.pop %v419
    %v422 = vrot.slane %v420, 2
    %v424 = vsub.f32 %v290, %v422
    %v426 = vrot.slane %v424, 6
    %v428 = vmul.f32 %v413, %v426
    %v429 = vadd.f32 %v420, %v428
    %vm430 = vcmask 257026
    %431 = vst.msk [vmem:[#allocation2] sm:$0xc] %vm430, %v429
    %vm432 = vcmask 519426
    %433 = vst.msk [vmem:[#allocation2 + $0xa] sm:$0xc] %vm432, %v429
    %v435 = vrot.slane %v429, 2
    %v436 = vsel %vm304, %v435, 0
    %438 = vmatpush.msra.mxu0 0.0
    %439 = vmatpush.msra.mxu0 0.0
    %440 = vmatpush.msra.mxu0 0.0
    %441 = vmatpush.msra.mxu0 0.0
    %442 = vmatpush.msra.mxu0 0.0
    %443 = vmatpush.msra.mxu0 0.0
    %444 = vmatpush.msra.mxu0 0.0
    %445 = vmatpush.msra.mxu0 0.0
    %446 = vmatpush.msra.mxu0 %v231
    %447 = vmatpush.msra.mxu0 %v228
    %448 = vmatpush.msra.mxu0 %v225
    %449 = vmatpush.msra.mxu0 %v222
    %450 = vmatpush.msra.mxu0 %v219
    %451 = vmatpush.msra.mxu0 %v216
    %452 = vmatpush.msra.mxu0 %v213
    %453 = vmatpush.msra.mxu0 %v210
    %454 = vmatmul.f32.gmra.mxu0 %v436
    %v455 = vpop.f32.mrf.mxu0
    %v456 = vadd.f32 0.0, %v455
    %457 = vdwg.mxu0
    %458 = vmatpush.msra.mxu0 0.0
    %459 = vmatpush.msra.mxu0 0.0
    %460 = vmatpush.msra.mxu0 0.0
    %461 = vmatpush.msra.mxu0 0.0
    %462 = vmatpush.msra.mxu0 0.0
    %463 = vmatpush.msra.mxu0 0.0
    %464 = vmatpush.msra.mxu0 0.0
    %465 = vmatpush.msra.mxu0 0.0
    %466 = vmatpush.msra.mxu0 %v232
    %467 = vmatpush.msra.mxu0 %v229
    %468 = vmatpush.msra.mxu0 %v226
    %469 = vmatpush.msra.mxu0 %v223
    %470 = vmatpush.msra.mxu0 %v220
    %471 = vmatpush.msra.mxu0 %v217
    %472 = vmatpush.msra.mxu0 %v214
    %473 = vmatpush.msra.mxu0 %v211
    %474 = vmatmul.f32.gmra.mxu0 %v436
    %v475 = vpop.f32.mrf.mxu0
    %v476 = vadd.f32 0.0, %v475
    %477 = vdwg.mxu0
    %478 = vmatpush.msra.mxu0 0.0
    %479 = vmatpush.msra.mxu0 0.0
    %480 = vmatpush.msra.mxu0 0.0
    %481 = vmatpush.msra.mxu0 0.0
    %482 = vmatpush.msra.mxu0 0.0
    %483 = vmatpush.msra.mxu0 0.0
    %484 = vmatpush.msra.mxu0 0.0
    %485 = vmatpush.msra.mxu0 0.0
    %486 = vmatpush.msra.mxu0 %v233
    %487 = vmatpush.msra.mxu0 %v230
    %488 = vmatpush.msra.mxu0 %v227
    %489 = vmatpush.msra.mxu0 %v224
    %490 = vmatpush.msra.mxu0 %v221
    %491 = vmatpush.msra.mxu0 %v218
    %492 = vmatpush.msra.mxu0 %v215
    %493 = vmatpush.msra.mxu0 %v212
    %494 = vmatmul.f32.gmra.mxu0 %v436
    %v495 = vpop.f32.mrf.mxu0
    %v496 = vadd.f32 0.0, %v495
    %497 = vdwg.mxu0
    %v499 = vrot.slane %v456, 4
    %v501 = vadd.f32 %v244, %v499
    %v502 = vxor.u32 %v501, 2147483648
    %v503 = vmul.f32 %v502, 1.442695
    %v504 = vpow.pop %v503
    %v505 = vadd.f32 %v504, 1.0
    %v506 = vrcp.pop %v505
    %v507 = vmul.f32 %v505, %v506
    %v508 = vsub.f32 1.0, %v507
    %v509 = vmul.f32 %v506, %v508
    %v510 = vadd.f32 %v506, %v509
    %vm511 = vweird.f32 %v505
    %vm512 = vweird.f32 %v506
    %vm513 = vmor %vm511, %vm512
    %v514 = vsel %vm513, %v506, %v510
    %v515 = vand.u32 2147483647, %v505
    %vm516 = vcmp.eq.f32.partialorder %v515, 8.507059e+37
    %v517 = vand.u32 %v505, 2147483648
    %v518 = vor.u32 1.1754944e-38, %v517
    %v519 = vsel %vm516, %v518, %v514
    %v520 = vmul.f32 1.0, %v519
    %v522 = vrot.slane %v476, 4
    %v524 = vadd.f32 %v245, %v522
    %v525 = vxor.u32 %v524, 2147483648
    %v526 = vmul.f32 %v525, 1.442695
    %v527 = vpow.pop %v526
    %v528 = vadd.f32 %v527, 1.0
    %v529 = vrcp.pop %v528
    %v530 = vmul.f32 %v528, %v529
    %v531 = vsub.f32 1.0, %v530
    %v532 = vmul.f32 %v529, %v531
    %v533 = vadd.f32 %v529, %v532
    %vm534 = vweird.f32 %v528
    %vm535 = vweird.f32 %v529
    %vm536 = vmor %vm534, %vm535
    %v537 = vsel %vm536, %v529, %v533
    %v538 = vand.u32 2147483647, %v528
    %vm539 = vcmp.eq.f32.partialorder %v538, 8.507059e+37
    %v540 = vand.u32 %v528, 2147483648
    %v541 = vor.u32 1.1754944e-38, %v540
    %v542 = vsel %vm539, %v541, %v537
    %v543 = vmul.f32 1.0, %v542
    %v544 = vadd.f32 %v496, %v285
    %v546 = vrot.slane %v544, 4
    %v548 = vmul.f32 %v520, %v546
    %v549 = vadd.f32 %v246, %v548
    %v550 = vtanh.pop %v549
    %v552 = vrot.slane %v550, 2
    %v554 = vsub.f32 %v429, %v552
    %v556 = vrot.slane %v554, 6
    %v558 = vmul.f32 %v543, %v556
    %v559 = vadd.f32 %v550, %v558
    %vm560 = vcmask 259076
    %561 = vst.msk [vmem:[#allocation2] sm:$0x30] %vm560, %v559
    %vm562 = vcmask 521476
    %563 = vst.msk [vmem:[#allocation2 + $0x6] sm:$0x30] %vm562, %v559
    %v565 = vrot.slane %v559, 4
    %v566 = vsel %vm304, %v565, 0
    %568 = vmatpush.msra.mxu0 0.0
    %569 = vmatpush.msra.mxu0 0.0
    %570 = vmatpush.msra.mxu0 0.0
    %571 = vmatpush.msra.mxu0 0.0
    %572 = vmatpush.msra.mxu0 0.0
    %573 = vmatpush.msra.mxu0 0.0
    %574 = vmatpush.msra.mxu0 0.0
    %575 = vmatpush.msra.mxu0 0.0
    %576 = vmatpush.msra.mxu0 %v231
    %577 = vmatpush.msra.mxu0 %v228
    %578 = vmatpush.msra.mxu0 %v225
    %579 = vmatpush.msra.mxu0 %v222
    %580 = vmatpush.msra.mxu0 %v219
    %581 = vmatpush.msra.mxu0 %v216
    %582 = vmatpush.msra.mxu0 %v213
    %583 = vmatpush.msra.mxu0 %v210
    %584 = vmatmul.f32.gmra.mxu0 %v566
    %v585 = vpop.f32.mrf.mxu0
    %v586 = vadd.f32 0.0, %v585
    %587 = vdwg.mxu0
    %588 = vmatpush.msra.mxu0 0.0
    %589 = vmatpush.msra.mxu0 0.0
    %590 = vmatpush.msra.mxu0 0.0
    %591 = vmatpush.msra.mxu0 0.0
    %592 = vmatpush.msra.mxu0 0.0
    %593 = vmatpush.msra.mxu0 0.0
    %594 = vmatpush.msra.mxu0 0.0
    %595 = vmatpush.msra.mxu0 0.0
    %596 = vmatpush.msra.mxu0 %v232
    %597 = vmatpush.msra.mxu0 %v229
    %598 = vmatpush.msra.mxu0 %v226
    %599 = vmatpush.msra.mxu0 %v223
    %600 = vmatpush.msra.mxu0 %v220
    %601 = vmatpush.msra.mxu0 %v217
    %602 = vmatpush.msra.mxu0 %v214
    %603 = vmatpush.msra.mxu0 %v211
    %604 = vmatmul.f32.gmra.mxu0 %v566
    %v605 = vpop.f32.mrf.mxu0
    %v606 = vadd.f32 0.0, %v605
    %607 = vdwg.mxu0
    %608 = vmatpush.msra.mxu0 0.0
    %609 = vmatpush.msra.mxu0 0.0
    %610 = vmatpush.msra.mxu0 0.0
    %611 = vmatpush.msra.mxu0 0.0
    %612 = vmatpush.msra.mxu0 0.0
    %613 = vmatpush.msra.mxu0 0.0
    %614 = vmatpush.msra.mxu0 0.0
    %615 = vmatpush.msra.mxu0 0.0
    %616 = vmatpush.msra.mxu0 %v233
    %617 = vmatpush.msra.mxu0 %v230
    %618 = vmatpush.msra.mxu0 %v227
    %619 = vmatpush.msra.mxu0 %v224
    %620 = vmatpush.msra.mxu0 %v221
    %621 = vmatpush.msra.mxu0 %v218
    %622 = vmatpush.msra.mxu0 %v215
    %623 = vmatpush.msra.mxu0 %v212
    %624 = vmatmul.f32.gmra.mxu0 %v566
    %v625 = vpop.f32.mrf.mxu0
    %v626 = vadd.f32 0.0, %v625
    %627 = vdwg.mxu0
    %v629 = vrot.slane %v586, 2
    %v631 = vadd.f32 %v301, %v629
    %v632 = vxor.u32 %v631, 2147483648
    %v633 = vmul.f32 %v632, 1.442695
    %v634 = vpow.pop %v633
    %v635 = vadd.f32 %v634, 1.0
    %v636 = vrcp.pop %v635
    %v637 = vmul.f32 %v635, %v636
    %v638 = vsub.f32 1.0, %v637
    %v639 = vmul.f32 %v636, %v638
    %v640 = vadd.f32 %v636, %v639
    %vm641 = vweird.f32 %v635
    %vm642 = vweird.f32 %v636
    %vm643 = vmor %vm641, %vm642
    %v644 = vsel %vm643, %v636, %v640
    %v645 = vand.u32 2147483647, %v635
    %vm646 = vcmp.eq.f32.partialorder %v645, 8.507059e+37
    %v647 = vand.u32 %v635, 2147483648
    %v648 = vor.u32 1.1754944e-38, %v647
    %v649 = vsel %vm646, %v648, %v644
    %v650 = vmul.f32 1.0, %v649
    %v652 = vrot.slane %v606, 2
    %v654 = vadd.f32 %v302, %v652
    %v655 = vxor.u32 %v654, 2147483648
    %v656 = vmul.f32 %v655, 1.442695
    %v657 = vpow.pop %v656
    %v658 = vadd.f32 %v657, 1.0
    %v659 = vrcp.pop %v658
    %v660 = vmul.f32 %v658, %v659
    %v661 = vsub.f32 1.0, %v660
    %v662 = vmul.f32 %v659, %v661
    %v663 = vadd.f32 %v659, %v662
    %vm664 = vweird.f32 %v658
    %vm665 = vweird.f32 %v659
    %vm666 = vmor %vm664, %vm665
    %v667 = vsel %vm666, %v659, %v663
    %v668 = vand.u32 2147483647, %v658
    %vm669 = vcmp.eq.f32.partialorder %v668, 8.507059e+37
    %v670 = vand.u32 %v658, 2147483648
    %v671 = vor.u32 1.1754944e-38, %v670
    %v672 = vsel %vm669, %v671, %v667
    %v673 = vmul.f32 1.0, %v672
    %v674 = vadd.f32 %v626, %v285
    %v676 = vrot.slane %v674, 2
    %v678 = vmul.f32 %v650, %v676
    %v679 = vadd.f32 %v303, %v678
    %v680 = vtanh.pop %v679
    %v682 = vrot.slane %v680, 2
    %v684 = vsub.f32 %v559, %v682
    %v686 = vrot.slane %v684, 6
    %v688 = vmul.f32 %v673, %v686
    %v689 = vadd.f32 %v680, %v688
    %vm690 = vcmask 261126
    %691 = vst.msk [vmem:[#allocation2] sm:$0xc0] %vm690, %v689
    %vm692 = vcmask 523526
    %693 = vst.msk [vmem:[#allocation2 + $0x2] sm:$0xc0] %vm692, %v689
    %v697 = vrot.slane %v159, 6
    %v698 = vrot.slane %v182, 6
    %v699 = vrot.slane %v205, 6
    %v703 = vadd.f32 %v93, %v697
    %v704 = vadd.f32 %v116, %v698
    %v705 = vadd.f32 %v139, %v699
    %v707 = vrot.slane %v689, 6
    %v708 = vsel %vm304, %v707, 0
    %710 = vmatpush.msra.mxu0 0.0
    %711 = vmatpush.msra.mxu0 0.0
    %712 = vmatpush.msra.mxu0 0.0
    %713 = vmatpush.msra.mxu0 0.0
    %714 = vmatpush.msra.mxu0 0.0
    %715 = vmatpush.msra.mxu0 0.0
    %716 = vmatpush.msra.mxu0 0.0
    %717 = vmatpush.msra.mxu0 0.0
    %718 = vmatpush.msra.mxu0 %v231
    %719 = vmatpush.msra.mxu0 %v228
    %720 = vmatpush.msra.mxu0 %v225
    %721 = vmatpush.msra.mxu0 %v222
    %722 = vmatpush.msra.mxu0 %v219
    %723 = vmatpush.msra.mxu0 %v216
    %724 = vmatpush.msra.mxu0 %v213
    %725 = vmatpush.msra.mxu0 %v210
    %726 = vmatmul.f32.gmra.mxu0 %v708
    %v727 = vpop.f32.mrf.mxu0
    %v728 = vadd.f32 0.0, %v727
    %729 = vdwg.mxu0
    %730 = vmatpush.msra.mxu0 0.0
    %731 = vmatpush.msra.mxu0 0.0
    %732 = vmatpush.msra.mxu0 0.0
    %733 = vmatpush.msra.mxu0 0.0
    %734 = vmatpush.msra.mxu0 0.0
    %735 = vmatpush.msra.mxu0 0.0
    %736 = vmatpush.msra.mxu0 0.0
    %737 = vmatpush.msra.mxu0 0.0
    %738 = vmatpush.msra.mxu0 %v232
    %739 = vmatpush.msra.mxu0 %v229
    %740 = vmatpush.msra.mxu0 %v226
    %741 = vmatpush.msra.mxu0 %v223
    %742 = vmatpush.msra.mxu0 %v220
    %743 = vmatpush.msra.mxu0 %v217
    %744 = vmatpush.msra.mxu0 %v214
    %745 = vmatpush.msra.mxu0 %v211
    %746 = vmatmul.f32.gmra.mxu0 %v708
    %v747 = vpop.f32.mrf.mxu0
    %v748 = vadd.f32 0.0, %v747
    %749 = vdwg.mxu0
    %750 = vmatpush.msra.mxu0 0.0
    %751 = vmatpush.msra.mxu0 0.0
    %752 = vmatpush.msra.mxu0 0.0
    %753 = vmatpush.msra.mxu0 0.0
    %754 = vmatpush.msra.mxu0 0.0
    %755 = vmatpush.msra.mxu0 0.0
    %756 = vmatpush.msra.mxu0 0.0
    %757 = vmatpush.msra.mxu0 0.0
    %758 = vmatpush.msra.mxu0 %v233
    %759 = vmatpush.msra.mxu0 %v230
    %760 = vmatpush.msra.mxu0 %v227
    %761 = vmatpush.msra.mxu0 %v224
    %762 = vmatpush.msra.mxu0 %v221
    %763 = vmatpush.msra.mxu0 %v218
    %764 = vmatpush.msra.mxu0 %v215
    %765 = vmatpush.msra.mxu0 %v212
    %766 = vmatmul.f32.gmra.mxu0 %v708
    %v767 = vpop.f32.mrf.mxu0
    %v768 = vadd.f32 0.0, %v767
    %769 = vdwg.mxu0
    %v770 = vadd.f32 %v703, %v728
    %v771 = vxor.u32 %v770, 2147483648
    %v772 = vmul.f32 %v771, 1.442695
    %v773 = vpow.pop %v772
    %v774 = vadd.f32 %v773, 1.0
    %v775 = vrcp.pop %v774
    %v776 = vmul.f32 %v774, %v775
    %v777 = vsub.f32 1.0, %v776
    %v778 = vmul.f32 %v775, %v777
    %v779 = vadd.f32 %v775, %v778
    %vm780 = vweird.f32 %v774
    %vm781 = vweird.f32 %v775
    %vm782 = vmor %vm780, %vm781
    %v783 = vsel %vm782, %v775, %v779
    %v784 = vand.u32 2147483647, %v774
    %vm785 = vcmp.eq.f32.partialorder %v784, 8.507059e+37
    %v786 = vand.u32 %v774, 2147483648
    %v787 = vor.u32 1.1754944e-38, %v786
    %v788 = vsel %vm785, %v787, %v783
    %v789 = vmul.f32 1.0, %v788
    %v790 = vadd.f32 %v704, %v748
    %v791 = vxor.u32 %v790, 2147483648
    %v792 = vmul.f32 %v791, 1.442695
    %v793 = vpow.pop %v792
    %v794 = vadd.f32 %v793, 1.0
    %v795 = vrcp.pop %v794
    %v796 = vmul.f32 %v794, %v795
    %v797 = vsub.f32 1.0, %v796
    %v798 = vmul.f32 %v795, %v797
    %v799 = vadd.f32 %v795, %v798
    %vm800 = vweird.f32 %v794
    %vm801 = vweird.f32 %v795
    %vm802 = vmor %vm800, %vm801
    %v803 = vsel %vm802, %v795, %v799
    %v804 = vand.u32 2147483647, %v794
    %vm805 = vcmp.eq.f32.partialorder %v804, 8.507059e+37
    %v806 = vand.u32 %v794, 2147483648
    %v807 = vor.u32 1.1754944e-38, %v806
    %v808 = vsel %vm805, %v807, %v803
    %v809 = vmul.f32 1.0, %v808
    %v810 = vadd.f32 %v768, %v285
    %v811 = vmul.f32 %v789, %v810
    %v812 = vadd.f32 %v705, %v811
    %v813 = vtanh.pop %v812
    %v815 = vrot.slane %v813, 2
    %v817 = vsub.f32 %v689, %v815
    %v819 = vrot.slane %v817, 6
    %v821 = vmul.f32 %v809, %v819
    %v822 = vadd.f32 %v813, %v821
    %823 = vst.msk [vmem:[#allocation2 + $0x8] sm:$0x3] %vm291, %v822
    %824 = vst.msk [vmem:[#allocation2 + $0x6] sm:$0x3] %vm293, %v822
    %v825 = vrot.slane %v159, 2
    %v826 = vrot.slane %v182, 2
    %v827 = vrot.slane %v205, 2
    %v831 = vadd.f32 %v93, %v825
    %v832 = vadd.f32 %v116, %v826
    %v833 = vadd.f32 %v139, %v827
    %v835 = vsel %vm304, %v822, 0
    %837 = vmatpush.msra.mxu0 0.0
    %838 = vmatpush.msra.mxu0 0.0
    %839 = vmatpush.msra.mxu0 0.0
    %840 = vmatpush.msra.mxu0 0.0
    %841 = vmatpush.msra.mxu0 0.0
    %842 = vmatpush.msra.mxu0 0.0
    %843 = vmatpush.msra.mxu0 0.0
    %844 = vmatpush.msra.mxu0 0.0
    %845 = vmatpush.msra.mxu0 %v231
    %846 = vmatpush.msra.mxu0 %v228
    %847 = vmatpush.msra.mxu0 %v225
    %848 = vmatpush.msra.mxu0 %v222
    %849 = vmatpush.msra.mxu0 %v219
    %850 = vmatpush.msra.mxu0 %v216
    %851 = vmatpush.msra.mxu0 %v213
    %852 = vmatpush.msra.mxu0 %v210
    %853 = vmatmul.f32.gmra.mxu0 %v835
    %v854 = vpop.f32.mrf.mxu0
    %v855 = vadd.f32 0.0, %v854
    %856 = vdwg.mxu0
    %857 = vmatpush.msra.mxu0 0.0
    %858 = vmatpush.msra.mxu0 0.0
    %859 = vmatpush.msra.mxu0 0.0
    %860 = vmatpush.msra.mxu0 0.0
    %861 = vmatpush.msra.mxu0 0.0
    %862 = vmatpush.msra.mxu0 0.0
    %863 = vmatpush.msra.mxu0 0.0
    %864 = vmatpush.msra.mxu0 0.0
    %865 = vmatpush.msra.mxu0 %v232
    %866 = vmatpush.msra.mxu0 %v229
    %867 = vmatpush.msra.mxu0 %v226
    %868 = vmatpush.msra.mxu0 %v223
    %869 = vmatpush.msra.mxu0 %v220
    %870 = vmatpush.msra.mxu0 %v217
    %871 = vmatpush.msra.mxu0 %v214
    %872 = vmatpush.msra.mxu0 %v211
    %873 = vmatmul.f32.gmra.mxu0 %v835
    %v874 = vpop.f32.mrf.mxu0
    %v875 = vadd.f32 0.0, %v874
    %876 = vdwg.mxu0
    %877 = vmatpush.msra.mxu0 0.0
    %878 = vmatpush.msra.mxu0 0.0
    %879 = vmatpush.msra.mxu0 0.0
    %880 = vmatpush.msra.mxu0 0.0
    %881 = vmatpush.msra.mxu0 0.0
    %882 = vmatpush.msra.mxu0 0.0
    %883 = vmatpush.msra.mxu0 0.0
    %884 = vmatpush.msra.mxu0 0.0
    %885 = vmatpush.msra.mxu0 %v233
    %886 = vmatpush.msra.mxu0 %v230
    %887 = vmatpush.msra.mxu0 %v227
    %888 = vmatpush.msra.mxu0 %v224
    %889 = vmatpush.msra.mxu0 %v221
    %890 = vmatpush.msra.mxu0 %v218
    %891 = vmatpush.msra.mxu0 %v215
    %892 = vmatpush.msra.mxu0 %v212
    %893 = vmatmul.f32.gmra.mxu0 %v835
    %v894 = vpop.f32.mrf.mxu0
    %v895 = vadd.f32 0.0, %v894
    %896 = vdwg.mxu0
    %v898 = vrot.slane %v855, 6
    %v900 = vadd.f32 %v831, %v898
    %v901 = vxor.u32 %v900, 2147483648
    %v902 = vmul.f32 %v901, 1.442695
    %v903 = vpow.pop %v902
    %v904 = vadd.f32 %v903, 1.0
    %v905 = vrcp.pop %v904
    %v906 = vmul.f32 %v904, %v905
    %v907 = vsub.f32 1.0, %v906
    %v908 = vmul.f32 %v905, %v907
    %v909 = vadd.f32 %v905, %v908
    %vm910 = vweird.f32 %v904
    %vm911 = vweird.f32 %v905
    %vm912 = vmor %vm910, %vm911
    %v913 = vsel %vm912, %v905, %v909
    %v914 = vand.u32 2147483647, %v904
    %vm915 = vcmp.eq.f32.partialorder %v914, 8.507059e+37
    %v916 = vand.u32 %v904, 2147483648
    %v917 = vor.u32 1.1754944e-38, %v916
    %v918 = vsel %vm915, %v917, %v913
    %v919 = vmul.f32 1.0, %v918
    %v921 = vrot.slane %v875, 6
    %v923 = vadd.f32 %v832, %v921
    %v924 = vxor.u32 %v923, 2147483648
    %v925 = vmul.f32 %v924, 1.442695
    %v926 = vpow.pop %v925
    %v927 = vadd.f32 %v926, 1.0
    %v928 = vrcp.pop %v927
    %v929 = vmul.f32 %v927, %v928
    %v930 = vsub.f32 1.0, %v929
    %v931 = vmul.f32 %v928, %v930
    %v932 = vadd.f32 %v928, %v931
    %vm933 = vweird.f32 %v927
    %vm934 = vweird.f32 %v928
    %vm935 = vmor %vm933, %vm934
    %v936 = vsel %vm935, %v928, %v932
    %v937 = vand.u32 2147483647, %v927
    %vm938 = vcmp.eq.f32.partialorder %v937, 8.507059e+37
    %v939 = vand.u32 %v927, 2147483648
    %v940 = vor.u32 1.1754944e-38, %v939
    %v941 = vsel %vm938, %v940, %v936
    %v942 = vmul.f32 1.0, %v941
    %v943 = vadd.f32 %v895, %v285
    %v945 = vrot.slane %v943, 6
    %v947 = vmul.f32 %v919, %v945
    %v948 = vadd.f32 %v833, %v947
    %v949 = vtanh.pop %v948
    %v951 = vrot.slane %v949, 2
    %v953 = vsub.f32 %v822, %v951
    %v955 = vrot.slane %v953, 6
    %v957 = vmul.f32 %v942, %v955
    %v958 = vadd.f32 %v949, %v957
    %959 = vst.msk [vmem:[#allocation2 + $0x8] sm:$0xc] %vm430, %v958
    %960 = vst.msk [vmem:[#allocation2 + $0x2] sm:$0xc] %vm432, %v958
    %v962 = vrot.slane %v958, 2
    %v963 = vsel %vm304, %v962, 0
    %965 = vmatpush.msra.mxu0 0.0
    %966 = vmatpush.msra.mxu0 0.0
    %967 = vmatpush.msra.mxu0 0.0
    %968 = vmatpush.msra.mxu0 0.0
    %969 = vmatpush.msra.mxu0 0.0
    %970 = vmatpush.msra.mxu0 0.0
    %971 = vmatpush.msra.mxu0 0.0
    %972 = vmatpush.msra.mxu0 0.0
    %973 = vmatpush.msra.mxu0 %v231
    %974 = vmatpush.msra.mxu0 %v228
    %975 = vmatpush.msra.mxu0 %v225
    %976 = vmatpush.msra.mxu0 %v222
    %977 = vmatpush.msra.mxu0 %v219
    %978 = vmatpush.msra.mxu0 %v216
    %979 = vmatpush.msra.mxu0 %v213
    %980 = vmatpush.msra.mxu0 %v210
    %981 = vmatmul.f32.gmra.mxu0 %v963
    %v982 = vpop.f32.mrf.mxu0
    %v983 = vadd.f32 0.0, %v982
    %984 = vdwg.mxu0
    %985 = vmatpush.msra.mxu0 0.0
    %986 = vmatpush.msra.mxu0 0.0
    %987 = vmatpush.msra.mxu0 0.0
    %988 = vmatpush.msra.mxu0 0.0
    %989 = vmatpush.msra.mxu0 0.0
    %990 = vmatpush.msra.mxu0 0.0
    %991 = vmatpush.msra.mxu0 0.0
    %992 = vmatpush.msra.mxu0 0.0
    %993 = vmatpush.msra.mxu0 %v232
    %994 = vmatpush.msra.mxu0 %v229
    %995 = vmatpush.msra.mxu0 %v226
    %996 = vmatpush.msra.mxu0 %v223
    %997 = vmatpush.msra.mxu0 %v220
    %998 = vmatpush.msra.mxu0 %v217
    %999 = vmatpush.msra.mxu0 %v214
    %1000 = vmatpush.msra.mxu0 %v211
    %1001 = vmatmul.f32.gmra.mxu0 %v963
    %v1002 = vpop.f32.mrf.mxu0
    %v1003 = vadd.f32 0.0, %v1002
    %1004 = vdwg.mxu0
    %1005 = vmatpush.msra.mxu0 0.0
    %1006 = vmatpush.msra.mxu0 0.0
    %1007 = vmatpush.msra.mxu0 0.0
    %1008 = vmatpush.msra.mxu0 0.0
    %1009 = vmatpush.msra.mxu0 0.0
    %1010 = vmatpush.msra.mxu0 0.0
    %1011 = vmatpush.msra.mxu0 0.0
    %1012 = vmatpush.msra.mxu0 0.0
    %1013 = vmatpush.msra.mxu0 %v233
    %1014 = vmatpush.msra.mxu0 %v230
    %1015 = vmatpush.msra.mxu0 %v227
    %1016 = vmatpush.msra.mxu0 %v224
    %1017 = vmatpush.msra.mxu0 %v221
    %1018 = vmatpush.msra.mxu0 %v218
    %1019 = vmatpush.msra.mxu0 %v215
    %1020 = vmatpush.msra.mxu0 %v212
    %1021 = vmatmul.f32.gmra.mxu0 %v963
    %v1022 = vpop.f32.mrf.mxu0
    %v1023 = vadd.f32 0.0, %v1022
    %1024 = vdwg.mxu0
    %v1026 = vrot.slane %v983, 4
    %v1028 = vadd.f32 %v703, %v1026
    %v1029 = vxor.u32 %v1028, 2147483648
    %v1030 = vmul.f32 %v1029, 1.442695
    %v1031 = vpow.pop %v1030
    %v1032 = vadd.f32 %v1031, 1.0
    %v1033 = vrcp.pop %v1032
    %v1034 = vmul.f32 %v1032, %v1033
    %v1035 = vsub.f32 1.0, %v1034
    %v1036 = vmul.f32 %v1033, %v1035
    %v1037 = vadd.f32 %v1033, %v1036
    %vm1038 = vweird.f32 %v1032
    %vm1039 = vweird.f32 %v1033
    %vm1040 = vmor %vm1038, %vm1039
    %v1041 = vsel %vm1040, %v1033, %v1037
    %v1042 = vand.u32 2147483647, %v1032
    %vm1043 = vcmp.eq.f32.partialorder %v1042, 8.507059e+37
    %v1044 = vand.u32 %v1032, 2147483648
    %v1045 = vor.u32 1.1754944e-38, %v1044
    %v1046 = vsel %vm1043, %v1045, %v1041
    %v1047 = vmul.f32 1.0, %v1046
    %v1049 = vrot.slane %v1003, 4
    %v1051 = vadd.f32 %v704, %v1049
    %v1052 = vxor.u32 %v1051, 2147483648
    %v1053 = vmul.f32 %v1052, 1.442695
    %v1054 = vpow.pop %v1053
    %v1055 = vadd.f32 %v1054, 1.0
    %v1056 = vrcp.pop %v1055
    %v1057 = vmul.f32 %v1055, %v1056
    %v1058 = vsub.f32 1.0, %v1057
    %v1059 = vmul.f32 %v1056, %v1058
    %v1060 = vadd.f32 %v1056, %v1059
    %vm1061 = vweird.f32 %v1055
    %vm1062 = vweird.f32 %v1056
    %vm1063 = vmor %vm1061, %vm1062
    %v1064 = vsel %vm1063, %v1056, %v1060
    %v1065 = vand.u32 2147483647, %v1055
    %vm1066 = vcmp.eq.f32.partialorder %v1065, 8.507059e+37
    %v1067 = vand.u32 %v1055, 2147483648
    %v1068 = vor.u32 1.1754944e-38, %v1067
    %v1069 = vsel %vm1066, %v1068, %v1064
    %v1070 = vmul.f32 1.0, %v1069
    %v1071 = vadd.f32 %v1023, %v285
    %v1073 = vrot.slane %v1071, 4
    %v1075 = vmul.f32 %v1047, %v1073
    %v1076 = vadd.f32 %v705, %v1075
    %v1077 = vtanh.pop %v1076
    %v1079 = vrot.slane %v1077, 2
    %v1081 = vsub.f32 %v958, %v1079
    %v1083 = vrot.slane %v1081, 6
    %v1085 = vmul.f32 %v1070, %v1083
    %v1086 = vadd.f32 %v1077, %v1085
    %1087 = vst.msk [vmem:[#allocation2 + $0x8] sm:$0x30] %vm560, %v1086
    %1088 = vst.msk [vmem:[#allocation2 - $0x2] sm:$0x30] %vm562, %v1086
    %v1090 = vrot.slane %v1086, 4
    %v1091 = vsel %vm304, %v1090, 0
    %1093 = vmatpush.msra.mxu0 0.0
    %1094 = vmatpush.msra.mxu0 0.0
    %1095 = vmatpush.msra.mxu0 0.0
    %1096 = vmatpush.msra.mxu0 0.0
    %1097 = vmatpush.msra.mxu0 0.0
    %1098 = vmatpush.msra.mxu0 0.0
    %1099 = vmatpush.msra.mxu0 0.0
    %1100 = vmatpush.msra.mxu0 0.0
    %1101 = vmatpush.msra.mxu0 %v231
    %1102 = vmatpush.msra.mxu0 %v228
    %1103 = vmatpush.msra.mxu0 %v225
    %1104 = vmatpush.msra.mxu0 %v222
    %1105 = vmatpush.msra.mxu0 %v219
    %1106 = vmatpush.msra.mxu0 %v216
    %1107 = vmatpush.msra.mxu0 %v213
    %1108 = vmatpush.msra.mxu0 %v210
    %1109 = vmatmul.f32.gmra.mxu0 %v1091
    %v1110 = vpop.f32.mrf.mxu0
    %v1111 = vadd.f32 0.0, %v1110
    %1112 = vdwg.mxu0
    %1113 = vmatpush.msra.mxu0 0.0
    %1114 = vmatpush.msra.mxu0 0.0
    %1115 = vmatpush.msra.mxu0 0.0
    %1116 = vmatpush.msra.mxu0 0.0
    %1117 = vmatpush.msra.mxu0 0.0
    %1118 = vmatpush.msra.mxu0 0.0
    %1119 = vmatpush.msra.mxu0 0.0
    %1120 = vmatpush.msra.mxu0 0.0
    %1121 = vmatpush.msra.mxu0 %v232
    %1122 = vmatpush.msra.mxu0 %v229
    %1123 = vmatpush.msra.mxu0 %v226
    %1124 = vmatpush.msra.mxu0 %v223
    %1125 = vmatpush.msra.mxu0 %v220
    %1126 = vmatpush.msra.mxu0 %v217
    %1127 = vmatpush.msra.mxu0 %v214
    %1128 = vmatpush.msra.mxu0 %v211
    %1129 = vmatmul.f32.gmra.mxu0 %v1091
    %v1130 = vpop.f32.mrf.mxu0
    %v1131 = vadd.f32 0.0, %v1130
    %1132 = vdwg.mxu0
    %1133 = vmatpush.msra.mxu0 0.0
    %1134 = vmatpush.msra.mxu0 0.0
    %1135 = vmatpush.msra.mxu0 0.0
    %1136 = vmatpush.msra.mxu0 0.0
    %1137 = vmatpush.msra.mxu0 0.0
    %1138 = vmatpush.msra.mxu0 0.0
    %1139 = vmatpush.msra.mxu0 0.0
    %1140 = vmatpush.msra.mxu0 0.0
    %1141 = vmatpush.msra.mxu0 %v233
    %1142 = vmatpush.msra.mxu0 %v230
    %1143 = vmatpush.msra.mxu0 %v227
    %1144 = vmatpush.msra.mxu0 %v224
    %1145 = vmatpush.msra.mxu0 %v221
    %1146 = vmatpush.msra.mxu0 %v218
    %1147 = vmatpush.msra.mxu0 %v215
    %1148 = vmatpush.msra.mxu0 %v212
    %1149 = vmatmul.f32.gmra.mxu0 %v1091
    %v1150 = vpop.f32.mrf.mxu0
    %v1151 = vadd.f32 0.0, %v1150
    %1152 = vdwg.mxu0
    %v1154 = vrot.slane %v1111, 2
    %v1156 = vadd.f32 %v831, %v1154
    %v1157 = vxor.u32 %v1156, 2147483648
    %v1158 = vmul.f32 %v1157, 1.442695
    %v1159 = vpow.pop %v1158
    %v1160 = vadd.f32 %v1159, 1.0
    %v1161 = vrcp.pop %v1160
    %v1162 = vmul.f32 %v1160, %v1161
    %v1163 = vsub.f32 1.0, %v1162
    %v1164 = vmul.f32 %v1161, %v1163
    %v1165 = vadd.f32 %v1161, %v1164
    %vm1166 = vweird.f32 %v1160
    %vm1167 = vweird.f32 %v1161
    %vm1168 = vmor %vm1166, %vm1167
    %v1169 = vsel %vm1168, %v1161, %v1165
    %v1170 = vand.u32 2147483647, %v1160
    %vm1171 = vcmp.eq.f32.partialorder %v1170, 8.507059e+37
    %v1172 = vand.u32 %v1160, 2147483648
    %v1173 = vor.u32 1.1754944e-38, %v1172
    %v1174 = vsel %vm1171, %v1173, %v1169
    %v1175 = vmul.f32 1.0, %v1174
    %v1177 = vrot.slane %v1131, 2
    %v1179 = vadd.f32 %v832, %v1177
    %v1180 = vxor.u32 %v1179, 2147483648
    %v1181 = vmul.f32 %v1180, 1.442695
    %v1182 = vpow.pop %v1181
    %v1183 = vadd.f32 %v1182, 1.0
    %v1184 = vrcp.pop %v1183
    %v1185 = vmul.f32 %v1183, %v1184
    %v1186 = vsub.f32 1.0, %v1185
    %v1187 = vmul.f32 %v1184, %v1186
    %v1188 = vadd.f32 %v1184, %v1187
    %vm1189 = vweird.f32 %v1183
    %vm1190 = vweird.f32 %v1184
    %vm1191 = vmor %vm1189, %vm1190
    %v1192 = vsel %vm1191, %v1184, %v1188
    %v1193 = vand.u32 2147483647, %v1183
    %vm1194 = vcmp.eq.f32.partialorder %v1193, 8.507059e+37
    %v1195 = vand.u32 %v1183, 2147483648
    %v1196 = vor.u32 1.1754944e-38, %v1195
    %v1197 = vsel %vm1194, %v1196, %v1192
    %v1198 = vmul.f32 1.0, %v1197
    %v1199 = vadd.f32 %v1151, %v285
    %v1201 = vrot.slane %v1199, 2
    %v1203 = vmul.f32 %v1175, %v1201
    %v1204 = vadd.f32 %v833, %v1203
    %v1205 = vtanh.pop %v1204
    %v1207 = vrot.slane %v1205, 2
    %v1209 = vsub.f32 %v1086, %v1207
    %v1211 = vrot.slane %v1209, 6
    %v1213 = vmul.f32 %v1198, %v1211
    %v1214 = vadd.f32 %v1205, %v1213
    %1215 = vst.msk [vmem:[#allocation2 + $0x8] sm:$0xc0] %vm690, %v1214
    %1216 = vst.msk [vmem:[#allocation2 - $0x6] sm:$0xc0] %vm692, %v1214
    %v1217 = vld [vmem:[#allocation2] sm:$0xff]
    %v1218 = vld [vmem:[#allocation2 + $0x8] sm:$0xff]
    %v1219 = vld [vmem:[%s1 + $0x180] sm:$0xff]
    %v1220 = vld [vmem:[%s1 + $0x188] sm:$0xff]
    %v1221 = vld [vmem:[%s1 + $0x190] sm:$0xff]
    %v1222 = vld [vmem:[%s1 + $0x198] sm:$0xff]
    %v1223 = vld [vmem:[%s1 + $0x1a0] sm:$0xff]
    %v1224 = vld [vmem:[%s1 + $0x1a8] sm:$0xff]
    %v1225 = vld [vmem:[%s1 + $0x1b0] sm:$0xff]
    %v1226 = vld [vmem:[%s1 + $0x1b8] sm:$0xff]
    %v1227 = vld [vmem:[%s1 + $0x1c0] sm:$0xff]
    %v1228 = vld [vmem:[%s1 + $0x1c8] sm:$0xff]
    %v1229 = vld [vmem:[%s1 + $0x1d0] sm:$0xff]
    %v1230 = vld [vmem:[%s1 + $0x1d8] sm:$0xff]
    %v1231 = vld [vmem:[%s1 + $0x1e0] sm:$0xff]
    %v1232 = vld [vmem:[%s1 + $0x1e8] sm:$0xff]
    %v1233 = vld [vmem:[%s1 + $0x1f0] sm:$0xff]
    %v1234 = vld [vmem:[%s1 + $0x1f8] sm:$0xff]
    %v1235 = vld [vmem:[%s1 + $0x200] sm:$0xff]
    %v1236 = vld [vmem:[%s1 + $0x208] sm:$0xff]
    %v1237 = vld [vmem:[%s1 + $0x210] sm:$0xff]
    %v1238 = vld [vmem:[%s1 + $0x218] sm:$0xff]
    %v1239 = vld [vmem:[%s1 + $0x220] sm:$0xff]
    %v1240 = vld [vmem:[%s1 + $0x228] sm:$0xff]
    %v1241 = vld [vmem:[%s1 + $0x230] sm:$0xff]
    %v1242 = vld [vmem:[%s1 + $0x238] sm:$0xff]
    %v1243 = vld [vmem:[%s1 + $0x240] sm:$0xff]
    %v1244 = vld [vmem:[%s1 + $0x248] sm:$0xff]
    %v1245 = vld [vmem:[%s1 + $0x250] sm:$0xff]
    %v1246 = vld [vmem:[%s1 + $0x258] sm:$0xff]
    %v1247 = vld [vmem:[%s1 + $0x260] sm:$0xff]
    %v1248 = vld [vmem:[%s1 + $0x268] sm:$0xff]
    %v1249 = vld [vmem:[%s1 + $0x270] sm:$0xff]
    %v1250 = vld [vmem:[%s1 + $0x278] sm:$0xff]
    %v1251 = vld [vmem:[%s1 + $0x280] sm:$0xff]
    %v1252 = vld [vmem:[%s1 + $0x288] sm:$0xff]
    %v1253 = vld [vmem:[%s1 + $0x290] sm:$0xff]
    %v1254 = vld [vmem:[%s1 + $0x298] sm:$0xff]
    %v1255 = vld [vmem:[%s1 + $0x2a0] sm:$0xff]
    %v1256 = vld [vmem:[%s1 + $0x2a8] sm:$0xff]
    %v1257 = vld [vmem:[%s1 + $0x2b0] sm:$0xff]
    %v1258 = vld [vmem:[%s1 + $0x2b8] sm:$0xff]
    %v1259 = vld [vmem:[%s1 + $0x2c0] sm:$0xff]
    %v1260 = vld [vmem:[%s1 + $0x2c8] sm:$0xff]
    %v1261 = vld [vmem:[%s1 + $0x2d0] sm:$0xff]
    %v1262 = vld [vmem:[%s1 + $0x2d8] sm:$0xff]
    %v1263 = vld [vmem:[%s1 + $0x2e0] sm:$0xff]
    %v1264 = vld [vmem:[%s1 + $0x2e8] sm:$0xff]
    %v1265 = vld [vmem:[%s1 + $0x2f0] sm:$0xff]
    %v1266 = vld [vmem:[%s1 + $0x2f8] sm:$0xff]
    %s1267 = scalar_lea.vmem %s3, 2
    %v1268 = vld [vmem:[%s1267] ss:$4 sm:$0x3f]
    %v1270 = vperm.slane %v1268, 0
    %v1271 = vperm.slane %v1268, 1
    %v1272 = vperm.slane %v1268, 2
    %v1273 = vperm.slane %v1268, 3
    %v1274 = vperm.slane %v1268, 4
    %v1275 = vperm.slane %v1268, 5
    %v1283 = vsel %vm304, %v1217, 0
    %v1286 = vsel %vm304, %v1218, 0
    %1288 = vmatpush.msra.mxu0 0.0
    %1289 = vmatpush.msra.mxu0 0.0
    %1290 = vmatpush.msra.mxu0 0.0
    %1291 = vmatpush.msra.mxu0 0.0
    %1292 = vmatpush.msra.mxu0 0.0
    %1293 = vmatpush.msra.mxu0 0.0
    %1294 = vmatpush.msra.mxu0 0.0
    %1295 = vmatpush.msra.mxu0 0.0
    %1296 = vmatpush.msra.mxu0 %v1261
    %1297 = vmatpush.msra.mxu0 %v1255
    %1298 = vmatpush.msra.mxu0 %v1249
    %1299 = vmatpush.msra.mxu0 %v1243
    %1300 = vmatpush.msra.mxu0 %v1237
    %1301 = vmatpush.msra.mxu0 %v1231
    %1302 = vmatpush.msra.mxu0 %v1225
    %1303 = vmatpush.msra.mxu0 %v1219
    %1304 = vmatmul.f32.gmra.mxu0 %v1283
    %v1305 = vpop.f32.mrf.mxu0
    %v1306 = vadd.f32 %v1270, %v1305
    %1307 = vmatmul.f32.gmra.mxu0 %v1286
    %v1308 = vpop.f32.mrf.mxu0
    %v1309 = vadd.f32 %v1270, %v1308
    %1310 = vdwg.mxu0
    %1311 = vmatpush.msra.mxu0 0.0
    %1312 = vmatpush.msra.mxu0 0.0
    %1313 = vmatpush.msra.mxu0 0.0
    %1314 = vmatpush.msra.mxu0 0.0
    %1315 = vmatpush.msra.mxu0 0.0
    %1316 = vmatpush.msra.mxu0 0.0
    %1317 = vmatpush.msra.mxu0 0.0
    %1318 = vmatpush.msra.mxu0 0.0
    %1319 = vmatpush.msra.mxu0 %v1262
    %1320 = vmatpush.msra.mxu0 %v1256
    %1321 = vmatpush.msra.mxu0 %v1250
    %1322 = vmatpush.msra.mxu0 %v1244
    %1323 = vmatpush.msra.mxu0 %v1238
    %1324 = vmatpush.msra.mxu0 %v1232
    %1325 = vmatpush.msra.mxu0 %v1226
    %1326 = vmatpush.msra.mxu0 %v1220
    %1327 = vmatmul.f32.gmra.mxu0 %v1283
    %v1328 = vpop.f32.mrf.mxu0
    %v1329 = vadd.f32 %v1271, %v1328
    %1330 = vmatmul.f32.gmra.mxu0 %v1286
    %v1331 = vpop.f32.mrf.mxu0
    %v1332 = vadd.f32 %v1271, %v1331
    %1333 = vdwg.mxu0
    %1334 = vmatpush.msra.mxu0 0.0
    %1335 = vmatpush.msra.mxu0 0.0
    %1336 = vmatpush.msra.mxu0 0.0
    %1337 = vmatpush.msra.mxu0 0.0
    %1338 = vmatpush.msra.mxu0 0.0
    %1339 = vmatpush.msra.mxu0 0.0
    %1340 = vmatpush.msra.mxu0 0.0
    %1341 = vmatpush.msra.mxu0 0.0
    %1342 = vmatpush.msra.mxu0 %v1263
    %1343 = vmatpush.msra.mxu0 %v1257
    %1344 = vmatpush.msra.mxu0 %v1251
    %1345 = vmatpush.msra.mxu0 %v1245
    %1346 = vmatpush.msra.mxu0 %v1239
    %1347 = vmatpush.msra.mxu0 %v1233
    %1348 = vmatpush.msra.mxu0 %v1227
    %1349 = vmatpush.msra.mxu0 %v1221
    %1350 = vmatmul.f32.gmra.mxu0 %v1283
    %v1351 = vpop.f32.mrf.mxu0
    %v1352 = vadd.f32 %v1272, %v1351
    %1353 = vmatmul.f32.gmra.mxu0 %v1286
    %v1354 = vpop.f32.mrf.mxu0
    %v1355 = vadd.f32 %v1272, %v1354
    %1356 = vdwg.mxu0
    %1357 = vmatpush.msra.mxu0 0.0
    %1358 = vmatpush.msra.mxu0 0.0
    %1359 = vmatpush.msra.mxu0 0.0
    %1360 = vmatpush.msra.mxu0 0.0
    %1361 = vmatpush.msra.mxu0 0.0
    %1362 = vmatpush.msra.mxu0 0.0
    %1363 = vmatpush.msra.mxu0 0.0
    %1364 = vmatpush.msra.mxu0 0.0
    %1365 = vmatpush.msra.mxu0 %v1264
    %1366 = vmatpush.msra.mxu0 %v1258
    %1367 = vmatpush.msra.mxu0 %v1252
    %1368 = vmatpush.msra.mxu0 %v1246
    %1369 = vmatpush.msra.mxu0 %v1240
    %1370 = vmatpush.msra.mxu0 %v1234
    %1371 = vmatpush.msra.mxu0 %v1228
    %1372 = vmatpush.msra.mxu0 %v1222
    %1373 = vmatmul.f32.gmra.mxu0 %v1283
    %v1374 = vpop.f32.mrf.mxu0
    %v1375 = vadd.f32 %v1273, %v1374
    %1376 = vmatmul.f32.gmra.mxu0 %v1286
    %v1377 = vpop.f32.mrf.mxu0
    %v1378 = vadd.f32 %v1273, %v1377
    %1379 = vdwg.mxu0
    %1380 = vmatpush.msra.mxu0 0.0
    %1381 = vmatpush.msra.mxu0 0.0
    %1382 = vmatpush.msra.mxu0 0.0
    %1383 = vmatpush.msra.mxu0 0.0
    %1384 = vmatpush.msra.mxu0 0.0
    %1385 = vmatpush.msra.mxu0 0.0
    %1386 = vmatpush.msra.mxu0 0.0
    %1387 = vmatpush.msra.mxu0 0.0
    %1388 = vmatpush.msra.mxu0 %v1265
    %1389 = vmatpush.msra.mxu0 %v1259
    %1390 = vmatpush.msra.mxu0 %v1253
    %1391 = vmatpush.msra.mxu0 %v1247
    %1392 = vmatpush.msra.mxu0 %v1241
    %1393 = vmatpush.msra.mxu0 %v1235
    %1394 = vmatpush.msra.mxu0 %v1229
    %1395 = vmatpush.msra.mxu0 %v1223
    %1396 = vmatmul.f32.gmra.mxu0 %v1283
    %v1397 = vpop.f32.mrf.mxu0
    %v1398 = vadd.f32 %v1274, %v1397
    %1399 = vmatmul.f32.gmra.mxu0 %v1286
    %v1400 = vpop.f32.mrf.mxu0
    %v1401 = vadd.f32 %v1274, %v1400
    %1402 = vdwg.mxu0
    %1403 = vmatpush.msra.mxu0 0.0
    %1404 = vmatpush.msra.mxu0 0.0
    %1405 = vmatpush.msra.mxu0 0.0
    %1406 = vmatpush.msra.mxu0 0.0
    %1407 = vmatpush.msra.mxu0 0.0
    %1408 = vmatpush.msra.mxu0 0.0
    %1409 = vmatpush.msra.mxu0 0.0
    %1410 = vmatpush.msra.mxu0 0.0
    %1411 = vmatpush.msra.mxu0 %v1266
    %1412 = vmatpush.msra.mxu0 %v1260
    %1413 = vmatpush.msra.mxu0 %v1254
    %1414 = vmatpush.msra.mxu0 %v1248
    %1415 = vmatpush.msra.mxu0 %v1242
    %1416 = vmatpush.msra.mxu0 %v1236
    %1417 = vmatpush.msra.mxu0 %v1230
    %1418 = vmatpush.msra.mxu0 %v1224
    %1419 = vmatmul.f32.gmra.mxu0 %v1283
    %v1420 = vpop.f32.mrf.mxu0
    %v1421 = vadd.f32 %v1275, %v1420
    %1422 = vmatmul.f32.gmra.mxu0 %v1286
    %v1423 = vpop.f32.mrf.mxu0
    %v1424 = vadd.f32 %v1275, %v1423
    %1425 = vdwg.mxu0
    %v1426 = vld [vmem:[%s2 + $0xc0] sm:$0xff]
    %v1427 = vld [vmem:[%s2 + $0xc8] sm:$0xff]
    %v1428 = vld [vmem:[%s2 + $0xd0] sm:$0xff]
    %v1429 = vld [vmem:[%s2 + $0xd8] sm:$0xff]
    %v1430 = vld [vmem:[%s2 + $0xe0] sm:$0xff]
    %v1431 = vld [vmem:[%s2 + $0xe8] sm:$0xff]
    %v1432 = vld [vmem:[%s2 + $0xf0] sm:$0xff]
    %v1433 = vld [vmem:[%s2 + $0xf8] sm:$0xff]
    %v1434 = vld [vmem:[%s2 + $0x100] sm:$0xff]
    %v1435 = vld [vmem:[%s2 + $0x108] sm:$0xff]
    %v1436 = vld [vmem:[%s2 + $0x110] sm:$0xff]
    %v1437 = vld [vmem:[%s2 + $0x118] sm:$0xff]
    %v1438 = vld [vmem:[%s2 + $0x120] sm:$0xff]
    %v1439 = vld [vmem:[%s2 + $0x128] sm:$0xff]
    %v1440 = vld [vmem:[%s2 + $0x130] sm:$0xff]
    %v1441 = vld [vmem:[%s2 + $0x138] sm:$0xff]
    %v1442 = vld [vmem:[%s2 + $0x140] sm:$0xff]
    %v1443 = vld [vmem:[%s2 + $0x148] sm:$0xff]
    %v1444 = vld [vmem:[%s2 + $0x150] sm:$0xff]
    %v1445 = vld [vmem:[%s2 + $0x158] sm:$0xff]
    %v1446 = vld [vmem:[%s2 + $0x160] sm:$0xff]
    %v1447 = vld [vmem:[%s2 + $0x168] sm:$0xff]
    %v1448 = vld [vmem:[%s2 + $0x170] sm:$0xff]
    %v1449 = vld [vmem:[%s2 + $0x178] sm:$0xff]
    %v1450 = vld [vmem:[%s3 + $0x3] sm:$0x1]
    %v1454 = vrot.slane %v1378, 6
    %v1455 = vrot.slane %v1401, 6
    %v1456 = vrot.slane %v1424, 6
    %v1460 = vadd.f32 %v1306, %v1454
    %v1461 = vadd.f32 %v1329, %v1455
    %v1462 = vadd.f32 %v1352, %v1456
    %v1463 = vxor.u32 %v1460, 2147483648
    %v1464 = vmul.f32 %v1463, 1.442695
    %v1465 = vpow.pop %v1464
    %v1466 = vadd.f32 %v1465, 1.0
    %v1467 = vrcp.pop %v1466
    %v1468 = vmul.f32 %v1466, %v1467
    %v1469 = vsub.f32 1.0, %v1468
    %v1470 = vmul.f32 %v1467, %v1469
    %v1471 = vadd.f32 %v1467, %v1470
    %vm1472 = vweird.f32 %v1466
    %vm1473 = vweird.f32 %v1467
    %vm1474 = vmor %vm1472, %vm1473
    %v1475 = vsel %vm1474, %v1467, %v1471
    %v1476 = vand.u32 2147483647, %v1466
    %vm1477 = vcmp.eq.f32.partialorder %v1476, 8.507059e+37
    %v1478 = vand.u32 %v1466, 2147483648
    %v1479 = vor.u32 1.1754944e-38, %v1478
    %v1480 = vsel %vm1477, %v1479, %v1475
    %v1481 = vmul.f32 1.0, %v1480
    %v1482 = vxor.u32 %v1461, 2147483648
    %v1483 = vmul.f32 %v1482, 1.442695
    %v1484 = vpow.pop %v1483
    %v1485 = vadd.f32 %v1484, 1.0
    %v1486 = vrcp.pop %v1485
    %v1487 = vmul.f32 %v1485, %v1486
    %v1488 = vsub.f32 1.0, %v1487
    %v1489 = vmul.f32 %v1486, %v1488
    %v1490 = vadd.f32 %v1486, %v1489
    %vm1491 = vweird.f32 %v1485
    %vm1492 = vweird.f32 %v1486
    %vm1493 = vmor %vm1491, %vm1492
    %v1494 = vsel %vm1493, %v1486, %v1490
    %v1495 = vand.u32 2147483647, %v1485
    %vm1496 = vcmp.eq.f32.partialorder %v1495, 8.507059e+37
    %v1497 = vand.u32 %v1485, 2147483648
    %v1498 = vor.u32 1.1754944e-38, %v1497
    %v1499 = vsel %vm1496, %v1498, %v1494
    %v1500 = vmul.f32 1.0, %v1499
    %v1501 = vperm.slane %v1450, 0
    %v1502 = vmul.f32 %v1481, %v1501
    %v1503 = vadd.f32 %v1462, %v1502
    %v1504 = vtanh.pop %v1503
    %v1505 = vmul.f32 %v1500, %v1504
    %v1506 = vsub.f32 %v1504, %v1505
    %v1507 = vrot.slane %v1378, 2
    %v1508 = vrot.slane %v1401, 2
    %v1509 = vrot.slane %v1424, 2
    %v1513 = vadd.f32 %v1306, %v1507
    %v1514 = vadd.f32 %v1329, %v1508
    %v1515 = vadd.f32 %v1352, %v1509
    %v1517 = vsel %vm304, %v1506, 0
    %1519 = vmatpush.msra.mxu0 0.0
    %1520 = vmatpush.msra.mxu0 0.0
    %1521 = vmatpush.msra.mxu0 0.0
    %1522 = vmatpush.msra.mxu0 0.0
    %1523 = vmatpush.msra.mxu0 0.0
    %1524 = vmatpush.msra.mxu0 0.0
    %1525 = vmatpush.msra.mxu0 0.0
    %1526 = vmatpush.msra.mxu0 0.0
    %1527 = vmatpush.msra.mxu0 %v1447
    %1528 = vmatpush.msra.mxu0 %v1444
    %1529 = vmatpush.msra.mxu0 %v1441
    %1530 = vmatpush.msra.mxu0 %v1438
    %1531 = vmatpush.msra.mxu0 %v1435
    %1532 = vmatpush.msra.mxu0 %v1432
    %1533 = vmatpush.msra.mxu0 %v1429
    %1534 = vmatpush.msra.mxu0 %v1426
    %1535 = vmatmul.f32.gmra.mxu0 %v1517
    %v1536 = vpop.f32.mrf.mxu0
    %v1537 = vadd.f32 0.0, %v1536
    %1538 = vdwg.mxu0
    %1539 = vmatpush.msra.mxu0 0.0
    %1540 = vmatpush.msra.mxu0 0.0
    %1541 = vmatpush.msra.mxu0 0.0
    %1542 = vmatpush.msra.mxu0 0.0
    %1543 = vmatpush.msra.mxu0 0.0
    %1544 = vmatpush.msra.mxu0 0.0
    %1545 = vmatpush.msra.mxu0 0.0
    %1546 = vmatpush.msra.mxu0 0.0
    %1547 = vmatpush.msra.mxu0 %v1448
    %1548 = vmatpush.msra.mxu0 %v1445
    %1549 = vmatpush.msra.mxu0 %v1442
    %1550 = vmatpush.msra.mxu0 %v1439
    %1551 = vmatpush.msra.mxu0 %v1436
    %1552 = vmatpush.msra.mxu0 %v1433
    %1553 = vmatpush.msra.mxu0 %v1430
    %1554 = vmatpush.msra.mxu0 %v1427
    %1555 = vmatmul.f32.gmra.mxu0 %v1517
    %v1556 = vpop.f32.mrf.mxu0
    %v1557 = vadd.f32 0.0, %v1556
    %1558 = vdwg.mxu0
    %1559 = vmatpush.msra.mxu0 0.0
    %1560 = vmatpush.msra.mxu0 0.0
    %1561 = vmatpush.msra.mxu0 0.0
    %1562 = vmatpush.msra.mxu0 0.0
    %1563 = vmatpush.msra.mxu0 0.0
    %1564 = vmatpush.msra.mxu0 0.0
    %1565 = vmatpush.msra.mxu0 0.0
    %1566 = vmatpush.msra.mxu0 0.0
    %1567 = vmatpush.msra.mxu0 %v1449
    %1568 = vmatpush.msra.mxu0 %v1446
    %1569 = vmatpush.msra.mxu0 %v1443
    %1570 = vmatpush.msra.mxu0 %v1440
    %1571 = vmatpush.msra.mxu0 %v1437
    %1572 = vmatpush.msra.mxu0 %v1434
    %1573 = vmatpush.msra.mxu0 %v1431
    %1574 = vmatpush.msra.mxu0 %v1428
    %1575 = vmatmul.f32.gmra.mxu0 %v1517
    %v1576 = vpop.f32.mrf.mxu0
    %v1577 = vadd.f32 0.0, %v1576
    %1578 = vdwg.mxu0
    %v1580 = vrot.slane %v1537, 6
    %v1582 = vadd.f32 %v1513, %v1580
    %v1583 = vxor.u32 %v1582, 2147483648
    %v1584 = vmul.f32 %v1583, 1.442695
    %v1585 = vpow.pop %v1584
    %v1586 = vadd.f32 %v1585, 1.0
    %v1587 = vrcp.pop %v1586
    %v1588 = vmul.f32 %v1586, %v1587
    %v1589 = vsub.f32 1.0, %v1588
    %v1590 = vmul.f32 %v1587, %v1589
    %v1591 = vadd.f32 %v1587, %v1590
    %vm1592 = vweird.f32 %v1586
    %vm1593 = vweird.f32 %v1587
    %vm1594 = vmor %vm1592, %vm1593
    %v1595 = vsel %vm1594, %v1587, %v1591
    %v1596 = vand.u32 2147483647, %v1586
    %vm1597 = vcmp.eq.f32.partialorder %v1596, 8.507059e+37
    %v1598 = vand.u32 %v1586, 2147483648
    %v1599 = vor.u32 1.1754944e-38, %v1598
    %v1600 = vsel %vm1597, %v1599, %v1595
    %v1601 = vmul.f32 1.0, %v1600
    %v1603 = vrot.slane %v1557, 6
    %v1605 = vadd.f32 %v1514, %v1603
    %v1606 = vxor.u32 %v1605, 2147483648
    %v1607 = vmul.f32 %v1606, 1.442695
    %v1608 = vpow.pop %v1607
    %v1609 = vadd.f32 %v1608, 1.0
    %v1610 = vrcp.pop %v1609
    %v1611 = vmul.f32 %v1609, %v1610
    %v1612 = vsub.f32 1.0, %v1611
    %v1613 = vmul.f32 %v1610, %v1612
    %v1614 = vadd.f32 %v1610, %v1613
    %vm1615 = vweird.f32 %v1609
    %vm1616 = vweird.f32 %v1610
    %vm1617 = vmor %vm1615, %vm1616
    %v1618 = vsel %vm1617, %v1610, %v1614
    %v1619 = vand.u32 2147483647, %v1609
    %vm1620 = vcmp.eq.f32.partialorder %v1619, 8.507059e+37
    %v1621 = vand.u32 %v1609, 2147483648
    %v1622 = vor.u32 1.1754944e-38, %v1621
    %v1623 = vsel %vm1620, %v1622, %v1618
    %v1624 = vmul.f32 1.0, %v1623
    %v1625 = vadd.f32 %v1577, %v1501
    %v1627 = vrot.slane %v1625, 6
    %v1629 = vmul.f32 %v1601, %v1627
    %v1630 = vadd.f32 %v1515, %v1629
    %v1631 = vtanh.pop %v1630
    %v1633 = vrot.slane %v1631, 2
    %v1635 = vsub.f32 %v1506, %v1633
    %v1637 = vrot.slane %v1635, 6
    %v1639 = vmul.f32 %v1624, %v1637
    %v1640 = vadd.f32 %v1631, %v1639
    %v1642 = vrot.slane %v1640, 2
    %v1643 = vsel %vm304, %v1642, 0
    %1645 = vmatpush.msra.mxu0 0.0
    %1646 = vmatpush.msra.mxu0 0.0
    %1647 = vmatpush.msra.mxu0 0.0
    %1648 = vmatpush.msra.mxu0 0.0
    %1649 = vmatpush.msra.mxu0 0.0
    %1650 = vmatpush.msra.mxu0 0.0
    %1651 = vmatpush.msra.mxu0 0.0
    %1652 = vmatpush.msra.mxu0 0.0
    %1653 = vmatpush.msra.mxu0 %v1447
    %1654 = vmatpush.msra.mxu0 %v1444
    %1655 = vmatpush.msra.mxu0 %v1441
    %1656 = vmatpush.msra.mxu0 %v1438
    %1657 = vmatpush.msra.mxu0 %v1435
    %1658 = vmatpush.msra.mxu0 %v1432
    %1659 = vmatpush.msra.mxu0 %v1429
    %1660 = vmatpush.msra.mxu0 %v1426
    %1661 = vmatmul.f32.gmra.mxu0 %v1643
    %v1662 = vpop.f32.mrf.mxu0
    %v1663 = vadd.f32 0.0, %v1662
    %1664 = vdwg.mxu0
    %1665 = vmatpush.msra.mxu0 0.0
    %1666 = vmatpush.msra.mxu0 0.0
    %1667 = vmatpush.msra.mxu0 0.0
    %1668 = vmatpush.msra.mxu0 0.0
    %1669 = vmatpush.msra.mxu0 0.0
    %1670 = vmatpush.msra.mxu0 0.0
    %1671 = vmatpush.msra.mxu0 0.0
    %1672 = vmatpush.msra.mxu0 0.0
    %1673 = vmatpush.msra.mxu0 %v1448
    %1674 = vmatpush.msra.mxu0 %v1445
    %1675 = vmatpush.msra.mxu0 %v1442
    %1676 = vmatpush.msra.mxu0 %v1439
    %1677 = vmatpush.msra.mxu0 %v1436
    %1678 = vmatpush.msra.mxu0 %v1433
    %1679 = vmatpush.msra.mxu0 %v1430
    %1680 = vmatpush.msra.mxu0 %v1427
    %1681 = vmatmul.f32.gmra.mxu0 %v1643
    %v1682 = vpop.f32.mrf.mxu0
    %v1683 = vadd.f32 0.0, %v1682
    %1684 = vdwg.mxu0
    %1685 = vmatpush.msra.mxu0 0.0
    %1686 = vmatpush.msra.mxu0 0.0
    %1687 = vmatpush.msra.mxu0 0.0
    %1688 = vmatpush.msra.mxu0 0.0
    %1689 = vmatpush.msra.mxu0 0.0
    %1690 = vmatpush.msra.mxu0 0.0
    %1691 = vmatpush.msra.mxu0 0.0
    %1692 = vmatpush.msra.mxu0 0.0
    %1693 = vmatpush.msra.mxu0 %v1449
    %1694 = vmatpush.msra.mxu0 %v1446
    %1695 = vmatpush.msra.mxu0 %v1443
    %1696 = vmatpush.msra.mxu0 %v1440
    %1697 = vmatpush.msra.mxu0 %v1437
    %1698 = vmatpush.msra.mxu0 %v1434
    %1699 = vmatpush.msra.mxu0 %v1431
    %1700 = vmatpush.msra.mxu0 %v1428
    %1701 = vmatmul.f32.gmra.mxu0 %v1643
    %v1702 = vpop.f32.mrf.mxu0
    %v1703 = vadd.f32 0.0, %v1702
    %1704 = vdwg.mxu0
    %v1706 = vrot.slane %v1663, 4
    %v1708 = vadd.f32 %v1460, %v1706
    %v1709 = vxor.u32 %v1708, 2147483648
    %v1710 = vmul.f32 %v1709, 1.442695
    %v1711 = vpow.pop %v1710
    %v1712 = vadd.f32 %v1711, 1.0
    %v1713 = vrcp.pop %v1712
    %v1714 = vmul.f32 %v1712, %v1713
    %v1715 = vsub.f32 1.0, %v1714
    %v1716 = vmul.f32 %v1713, %v1715
    %v1717 = vadd.f32 %v1713, %v1716
    %vm1718 = vweird.f32 %v1712
    %vm1719 = vweird.f32 %v1713
    %vm1720 = vmor %vm1718, %vm1719
    %v1721 = vsel %vm1720, %v1713, %v1717
    %v1722 = vand.u32 2147483647, %v1712
    %vm1723 = vcmp.eq.f32.partialorder %v1722, 8.507059e+37
    %v1724 = vand.u32 %v1712, 2147483648
    %v1725 = vor.u32 1.1754944e-38, %v1724
    %v1726 = vsel %vm1723, %v1725, %v1721
    %v1727 = vmul.f32 1.0, %v1726
    %v1729 = vrot.slane %v1683, 4
    %v1731 = vadd.f32 %v1461, %v1729
    %v1732 = vxor.u32 %v1731, 2147483648
    %v1733 = vmul.f32 %v1732, 1.442695
    %v1734 = vpow.pop %v1733
    %v1735 = vadd.f32 %v1734, 1.0
    %v1736 = vrcp.pop %v1735
    %v1737 = vmul.f32 %v1735, %v1736
    %v1738 = vsub.f32 1.0, %v1737
    %v1739 = vmul.f32 %v1736, %v1738
    %v1740 = vadd.f32 %v1736, %v1739
    %vm1741 = vweird.f32 %v1735
    %vm1742 = vweird.f32 %v1736
    %vm1743 = vmor %vm1741, %vm1742
    %v1744 = vsel %vm1743, %v1736, %v1740
    %v1745 = vand.u32 2147483647, %v1735
    %vm1746 = vcmp.eq.f32.partialorder %v1745, 8.507059e+37
    %v1747 = vand.u32 %v1735, 2147483648
    %v1748 = vor.u32 1.1754944e-38, %v1747
    %v1749 = vsel %vm1746, %v1748, %v1744
    %v1750 = vmul.f32 1.0, %v1749
    %v1751 = vadd.f32 %v1703, %v1501
    %v1753 = vrot.slane %v1751, 4
    %v1755 = vmul.f32 %v1727, %v1753
    %v1756 = vadd.f32 %v1462, %v1755
    %v1757 = vtanh.pop %v1756
    %v1759 = vrot.slane %v1757, 2
    %v1761 = vsub.f32 %v1640, %v1759
    %v1763 = vrot.slane %v1761, 6
    %v1765 = vmul.f32 %v1750, %v1763
    %v1766 = vadd.f32 %v1757, %v1765
    %v1768 = vrot.slane %v1766, 4
    %v1769 = vsel %vm304, %v1768, 0
    %1771 = vmatpush.msra.mxu0 0.0
    %1772 = vmatpush.msra.mxu0 0.0
    %1773 = vmatpush.msra.mxu0 0.0
    %1774 = vmatpush.msra.mxu0 0.0
    %1775 = vmatpush.msra.mxu0 0.0
    %1776 = vmatpush.msra.mxu0 0.0
    %1777 = vmatpush.msra.mxu0 0.0
    %1778 = vmatpush.msra.mxu0 0.0
    %1779 = vmatpush.msra.mxu0 %v1447
    %1780 = vmatpush.msra.mxu0 %v1444
    %1781 = vmatpush.msra.mxu0 %v1441
    %1782 = vmatpush.msra.mxu0 %v1438
    %1783 = vmatpush.msra.mxu0 %v1435
    %1784 = vmatpush.msra.mxu0 %v1432
    %1785 = vmatpush.msra.mxu0 %v1429
    %1786 = vmatpush.msra.mxu0 %v1426
    %1787 = vmatmul.f32.gmra.mxu0 %v1769
    %v1788 = vpop.f32.mrf.mxu0
    %v1789 = vadd.f32 0.0, %v1788
    %1790 = vdwg.mxu0
    %1791 = vmatpush.msra.mxu0 0.0
    %1792 = vmatpush.msra.mxu0 0.0
    %1793 = vmatpush.msra.mxu0 0.0
    %1794 = vmatpush.msra.mxu0 0.0
    %1795 = vmatpush.msra.mxu0 0.0
    %1796 = vmatpush.msra.mxu0 0.0
    %1797 = vmatpush.msra.mxu0 0.0
    %1798 = vmatpush.msra.mxu0 0.0
    %1799 = vmatpush.msra.mxu0 %v1448
    %1800 = vmatpush.msra.mxu0 %v1445
    %1801 = vmatpush.msra.mxu0 %v1442
    %1802 = vmatpush.msra.mxu0 %v1439
    %1803 = vmatpush.msra.mxu0 %v1436
    %1804 = vmatpush.msra.mxu0 %v1433
    %1805 = vmatpush.msra.mxu0 %v1430
    %1806 = vmatpush.msra.mxu0 %v1427
    %1807 = vmatmul.f32.gmra.mxu0 %v1769
    %v1808 = vpop.f32.mrf.mxu0
    %v1809 = vadd.f32 0.0, %v1808
    %1810 = vdwg.mxu0
    %1811 = vmatpush.msra.mxu0 0.0
    %1812 = vmatpush.msra.mxu0 0.0
    %1813 = vmatpush.msra.mxu0 0.0
    %1814 = vmatpush.msra.mxu0 0.0
    %1815 = vmatpush.msra.mxu0 0.0
    %1816 = vmatpush.msra.mxu0 0.0
    %1817 = vmatpush.msra.mxu0 0.0
    %1818 = vmatpush.msra.mxu0 0.0
    %1819 = vmatpush.msra.mxu0 %v1449
    %1820 = vmatpush.msra.mxu0 %v1446
    %1821 = vmatpush.msra.mxu0 %v1443
    %1822 = vmatpush.msra.mxu0 %v1440
    %1823 = vmatpush.msra.mxu0 %v1437
    %1824 = vmatpush.msra.mxu0 %v1434
    %1825 = vmatpush.msra.mxu0 %v1431
    %1826 = vmatpush.msra.mxu0 %v1428
    %1827 = vmatmul.f32.gmra.mxu0 %v1769
    %v1828 = vpop.f32.mrf.mxu0
    %v1829 = vadd.f32 0.0, %v1828
    %1830 = vdwg.mxu0
    %v1832 = vrot.slane %v1789, 2
    %v1834 = vadd.f32 %v1513, %v1832
    %v1835 = vxor.u32 %v1834, 2147483648
    %v1836 = vmul.f32 %v1835, 1.442695
    %v1837 = vpow.pop %v1836
    %v1838 = vadd.f32 %v1837, 1.0
    %v1839 = vrcp.pop %v1838
    %v1840 = vmul.f32 %v1838, %v1839
    %v1841 = vsub.f32 1.0, %v1840
    %v1842 = vmul.f32 %v1839, %v1841
    %v1843 = vadd.f32 %v1839, %v1842
    %vm1844 = vweird.f32 %v1838
    %vm1845 = vweird.f32 %v1839
    %vm1846 = vmor %vm1844, %vm1845
    %v1847 = vsel %vm1846, %v1839, %v1843
    %v1848 = vand.u32 2147483647, %v1838
    %vm1849 = vcmp.eq.f32.partialorder %v1848, 8.507059e+37
    %v1850 = vand.u32 %v1838, 2147483648
    %v1851 = vor.u32 1.1754944e-38, %v1850
    %v1852 = vsel %vm1849, %v1851, %v1847
    %v1853 = vmul.f32 1.0, %v1852
    %v1855 = vrot.slane %v1809, 2
    %v1857 = vadd.f32 %v1514, %v1855
    %v1858 = vxor.u32 %v1857, 2147483648
    %v1859 = vmul.f32 %v1858, 1.442695
    %v1860 = vpow.pop %v1859
    %v1861 = vadd.f32 %v1860, 1.0
    %v1862 = vrcp.pop %v1861
    %v1863 = vmul.f32 %v1861, %v1862
    %v1864 = vsub.f32 1.0, %v1863
    %v1865 = vmul.f32 %v1862, %v1864
    %v1866 = vadd.f32 %v1862, %v1865
    %vm1867 = vweird.f32 %v1861
    %vm1868 = vweird.f32 %v1862
    %vm1869 = vmor %vm1867, %vm1868
    %v1870 = vsel %vm1869, %v1862, %v1866
    %v1871 = vand.u32 2147483647, %v1861
    %vm1872 = vcmp.eq.f32.partialorder %v1871, 8.507059e+37
    %v1873 = vand.u32 %v1861, 2147483648
    %v1874 = vor.u32 1.1754944e-38, %v1873
    %v1875 = vsel %vm1872, %v1874, %v1870
    %v1876 = vmul.f32 1.0, %v1875
    %v1877 = vadd.f32 %v1829, %v1501
    %v1879 = vrot.slane %v1877, 2
    %v1881 = vmul.f32 %v1853, %v1879
    %v1882 = vadd.f32 %v1515, %v1881
    %v1883 = vtanh.pop %v1882
    %v1885 = vrot.slane %v1883, 2
    %v1887 = vsub.f32 %v1766, %v1885
    %v1889 = vrot.slane %v1887, 6
    %v1891 = vmul.f32 %v1876, %v1889
    %v1892 = vadd.f32 %v1883, %v1891
    %v1896 = vrot.slane %v1375, 6
    %v1897 = vrot.slane %v1398, 6
    %v1898 = vrot.slane %v1421, 6
    %v1902 = vadd.f32 %v1309, %v1896
    %v1903 = vadd.f32 %v1332, %v1897
    %v1904 = vadd.f32 %v1355, %v1898
    %v1906 = vrot.slane %v1892, 6
    %v1907 = vsel %vm304, %v1906, 0
    %1909 = vmatpush.msra.mxu0 0.0
    %1910 = vmatpush.msra.mxu0 0.0
    %1911 = vmatpush.msra.mxu0 0.0
    %1912 = vmatpush.msra.mxu0 0.0
    %1913 = vmatpush.msra.mxu0 0.0
    %1914 = vmatpush.msra.mxu0 0.0
    %1915 = vmatpush.msra.mxu0 0.0
    %1916 = vmatpush.msra.mxu0 0.0
    %1917 = vmatpush.msra.mxu0 %v1447
    %1918 = vmatpush.msra.mxu0 %v1444
    %1919 = vmatpush.msra.mxu0 %v1441
    %1920 = vmatpush.msra.mxu0 %v1438
    %1921 = vmatpush.msra.mxu0 %v1435
    %1922 = vmatpush.msra.mxu0 %v1432
    %1923 = vmatpush.msra.mxu0 %v1429
    %1924 = vmatpush.msra.mxu0 %v1426
    %1925 = vmatmul.f32.gmra.mxu0 %v1907
    %v1926 = vpop.f32.mrf.mxu0
    %v1927 = vadd.f32 0.0, %v1926
    %1928 = vdwg.mxu0
    %1929 = vmatpush.msra.mxu0 0.0
    %1930 = vmatpush.msra.mxu0 0.0
    %1931 = vmatpush.msra.mxu0 0.0
    %1932 = vmatpush.msra.mxu0 0.0
    %1933 = vmatpush.msra.mxu0 0.0
    %1934 = vmatpush.msra.mxu0 0.0
    %1935 = vmatpush.msra.mxu0 0.0
    %1936 = vmatpush.msra.mxu0 0.0
    %1937 = vmatpush.msra.mxu0 %v1448
    %1938 = vmatpush.msra.mxu0 %v1445
    %1939 = vmatpush.msra.mxu0 %v1442
    %1940 = vmatpush.msra.mxu0 %v1439
    %1941 = vmatpush.msra.mxu0 %v1436
    %1942 = vmatpush.msra.mxu0 %v1433
    %1943 = vmatpush.msra.mxu0 %v1430
    %1944 = vmatpush.msra.mxu0 %v1427
    %1945 = vmatmul.f32.gmra.mxu0 %v1907
    %v1946 = vpop.f32.mrf.mxu0
    %v1947 = vadd.f32 0.0, %v1946
    %1948 = vdwg.mxu0
    %1949 = vmatpush.msra.mxu0 0.0
    %1950 = vmatpush.msra.mxu0 0.0
    %1951 = vmatpush.msra.mxu0 0.0
    %1952 = vmatpush.msra.mxu0 0.0
    %1953 = vmatpush.msra.mxu0 0.0
    %1954 = vmatpush.msra.mxu0 0.0
    %1955 = vmatpush.msra.mxu0 0.0
    %1956 = vmatpush.msra.mxu0 0.0
    %1957 = vmatpush.msra.mxu0 %v1449
    %1958 = vmatpush.msra.mxu0 %v1446
    %1959 = vmatpush.msra.mxu0 %v1443
    %1960 = vmatpush.msra.mxu0 %v1440
    %1961 = vmatpush.msra.mxu0 %v1437
    %1962 = vmatpush.msra.mxu0 %v1434
    %1963 = vmatpush.msra.mxu0 %v1431
    %1964 = vmatpush.msra.mxu0 %v1428
    %1965 = vmatmul.f32.gmra.mxu0 %v1907
    %v1966 = vpop.f32.mrf.mxu0
    %v1967 = vadd.f32 0.0, %v1966
    %1968 = vdwg.mxu0
    %v1969 = vadd.f32 %v1902, %v1927
    %v1970 = vxor.u32 %v1969, 2147483648
    %v1971 = vmul.f32 %v1970, 1.442695
    %v1972 = vpow.pop %v1971
    %v1973 = vadd.f32 %v1972, 1.0
    %v1974 = vrcp.pop %v1973
    %v1975 = vmul.f32 %v1973, %v1974
    %v1976 = vsub.f32 1.0, %v1975
    %v1977 = vmul.f32 %v1974, %v1976
    %v1978 = vadd.f32 %v1974, %v1977
    %vm1979 = vweird.f32 %v1973
    %vm1980 = vweird.f32 %v1974
    %vm1981 = vmor %vm1979, %vm1980
    %v1982 = vsel %vm1981, %v1974, %v1978
    %v1983 = vand.u32 2147483647, %v1973
    %vm1984 = vcmp.eq.f32.partialorder %v1983, 8.507059e+37
    %v1985 = vand.u32 %v1973, 2147483648
    %v1986 = vor.u32 1.1754944e-38, %v1985
    %v1987 = vsel %vm1984, %v1986, %v1982
    %v1988 = vmul.f32 1.0, %v1987
    %v1989 = vadd.f32 %v1903, %v1947
    %v1990 = vxor.u32 %v1989, 2147483648
    %v1991 = vmul.f32 %v1990, 1.442695
    %v1992 = vpow.pop %v1991
    %v1993 = vadd.f32 %v1992, 1.0
    %v1994 = vrcp.pop %v1993
    %v1995 = vmul.f32 %v1993, %v1994
    %v1996 = vsub.f32 1.0, %v1995
    %v1997 = vmul.f32 %v1994, %v1996
    %v1998 = vadd.f32 %v1994, %v1997
    %vm1999 = vweird.f32 %v1993
    %vm2000 = vweird.f32 %v1994
    %vm2001 = vmor %vm1999, %vm2000
    %v2002 = vsel %vm2001, %v1994, %v1998
    %v2003 = vand.u32 2147483647, %v1993
    %vm2004 = vcmp.eq.f32.partialorder %v2003, 8.507059e+37
    %v2005 = vand.u32 %v1993, 2147483648
    %v2006 = vor.u32 1.1754944e-38, %v2005
    %v2007 = vsel %vm2004, %v2006, %v2002
    %v2008 = vmul.f32 1.0, %v2007
    %v2009 = vadd.f32 %v1967, %v1501
    %v2010 = vmul.f32 %v1988, %v2009
    %v2011 = vadd.f32 %v1904, %v2010
    %v2012 = vtanh.pop %v2011
    %v2014 = vrot.slane %v2012, 2
    %v2016 = vsub.f32 %v1892, %v2014
    %v2018 = vrot.slane %v2016, 6
    %v2020 = vmul.f32 %v2008, %v2018
    %v2021 = vadd.f32 %v2012, %v2020
    %v2022 = vrot.slane %v1375, 2
    %v2023 = vrot.slane %v1398, 2
    %v2024 = vrot.slane %v1421, 2
    %v2028 = vadd.f32 %v1309, %v2022
    %v2029 = vadd.f32 %v1332, %v2023
    %v2030 = vadd.f32 %v1355, %v2024
    %v2032 = vsel %vm304, %v2021, 0
    %2034 = vmatpush.msra.mxu0 0.0
    %2035 = vmatpush.msra.mxu0 0.0
    %2036 = vmatpush.msra.mxu0 0.0
    %2037 = vmatpush.msra.mxu0 0.0
    %2038 = vmatpush.msra.mxu0 0.0
    %2039 = vmatpush.msra.mxu0 0.0
    %2040 = vmatpush.msra.mxu0 0.0
    %2041 = vmatpush.msra.mxu0 0.0
    %2042 = vmatpush.msra.mxu0 %v1447
    %2043 = vmatpush.msra.mxu0 %v1444
    %2044 = vmatpush.msra.mxu0 %v1441
    %2045 = vmatpush.msra.mxu0 %v1438
    %2046 = vmatpush.msra.mxu0 %v1435
    %2047 = vmatpush.msra.mxu0 %v1432
    %2048 = vmatpush.msra.mxu0 %v1429
    %2049 = vmatpush.msra.mxu0 %v1426
    %2050 = vmatmul.f32.gmra.mxu0 %v2032
    %v2051 = vpop.f32.mrf.mxu0
    %v2052 = vadd.f32 0.0, %v2051
    %2053 = vdwg.mxu0
    %2054 = vmatpush.msra.mxu0 0.0
    %2055 = vmatpush.msra.mxu0 0.0
    %2056 = vmatpush.msra.mxu0 0.0
    %2057 = vmatpush.msra.mxu0 0.0
    %2058 = vmatpush.msra.mxu0 0.0
    %2059 = vmatpush.msra.mxu0 0.0
    %2060 = vmatpush.msra.mxu0 0.0
    %2061 = vmatpush.msra.mxu0 0.0
    %2062 = vmatpush.msra.mxu0 %v1448
    %2063 = vmatpush.msra.mxu0 %v1445
    %2064 = vmatpush.msra.mxu0 %v1442
    %2065 = vmatpush.msra.mxu0 %v1439
    %2066 = vmatpush.msra.mxu0 %v1436
    %2067 = vmatpush.msra.mxu0 %v1433
    %2068 = vmatpush.msra.mxu0 %v1430
    %2069 = vmatpush.msra.mxu0 %v1427
    %2070 = vmatmul.f32.gmra.mxu0 %v2032
    %v2071 = vpop.f32.mrf.mxu0
    %v2072 = vadd.f32 0.0, %v2071
    %2073 = vdwg.mxu0
    %2074 = vmatpush.msra.mxu0 0.0
    %2075 = vmatpush.msra.mxu0 0.0
    %2076 = vmatpush.msra.mxu0 0.0
    %2077 = vmatpush.msra.mxu0 0.0
    %2078 = vmatpush.msra.mxu0 0.0
    %2079 = vmatpush.msra.mxu0 0.0
    %2080 = vmatpush.msra.mxu0 0.0
    %2081 = vmatpush.msra.mxu0 0.0
    %2082 = vmatpush.msra.mxu0 %v1449
    %2083 = vmatpush.msra.mxu0 %v1446
    %2084 = vmatpush.msra.mxu0 %v1443
    %2085 = vmatpush.msra.mxu0 %v1440
    %2086 = vmatpush.msra.mxu0 %v1437
    %2087 = vmatpush.msra.mxu0 %v1434
    %2088 = vmatpush.msra.mxu0 %v1431
    %2089 = vmatpush.msra.mxu0 %v1428
    %2090 = vmatmul.f32.gmra.mxu0 %v2032
    %v2091 = vpop.f32.mrf.mxu0
    %v2092 = vadd.f32 0.0, %v2091
    %2093 = vdwg.mxu0
    %v2095 = vrot.slane %v2052, 6
    %v2097 = vadd.f32 %v2028, %v2095
    %v2098 = vxor.u32 %v2097, 2147483648
    %v2099 = vmul.f32 %v2098, 1.442695
    %v2100 = vpow.pop %v2099
    %v2101 = vadd.f32 %v2100, 1.0
    %v2102 = vrcp.pop %v2101
    %v2103 = vmul.f32 %v2101, %v2102
    %v2104 = vsub.f32 1.0, %v2103
    %v2105 = vmul.f32 %v2102, %v2104
    %v2106 = vadd.f32 %v2102, %v2105
    %vm2107 = vweird.f32 %v2101
    %vm2108 = vweird.f32 %v2102
    %vm2109 = vmor %vm2107, %vm2108
    %v2110 = vsel %vm2109, %v2102, %v2106
    %v2111 = vand.u32 2147483647, %v2101
    %vm2112 = vcmp.eq.f32.partialorder %v2111, 8.507059e+37
    %v2113 = vand.u32 %v2101, 2147483648
    %v2114 = vor.u32 1.1754944e-38, %v2113
    %v2115 = vsel %vm2112, %v2114, %v2110
    %v2116 = vmul.f32 1.0, %v2115
    %v2118 = vrot.slane %v2072, 6
    %v2120 = vadd.f32 %v2029, %v2118
    %v2121 = vxor.u32 %v2120, 2147483648
    %v2122 = vmul.f32 %v2121, 1.442695
    %v2123 = vpow.pop %v2122
    %v2124 = vadd.f32 %v2123, 1.0
    %v2125 = vrcp.pop %v2124
    %v2126 = vmul.f32 %v2124, %v2125
    %v2127 = vsub.f32 1.0, %v2126
    %v2128 = vmul.f32 %v2125, %v2127
    %v2129 = vadd.f32 %v2125, %v2128
    %vm2130 = vweird.f32 %v2124
    %vm2131 = vweird.f32 %v2125
    %vm2132 = vmor %vm2130, %vm2131
    %v2133 = vsel %vm2132, %v2125, %v2129
    %v2134 = vand.u32 2147483647, %v2124
    %vm2135 = vcmp.eq.f32.partialorder %v2134, 8.507059e+37
    %v2136 = vand.u32 %v2124, 2147483648
    %v2137 = vor.u32 1.1754944e-38, %v2136
    %v2138 = vsel %vm2135, %v2137, %v2133
    %v2139 = vmul.f32 1.0, %v2138
    %v2140 = vadd.f32 %v2092, %v1501
    %v2142 = vrot.slane %v2140, 6
    %v2144 = vmul.f32 %v2116, %v2142
    %v2145 = vadd.f32 %v2030, %v2144
    %v2146 = vtanh.pop %v2145
    %v2148 = vrot.slane %v2146, 2
    %v2150 = vsub.f32 %v2021, %v2148
    %v2152 = vrot.slane %v2150, 6
    %v2154 = vmul.f32 %v2139, %v2152
    %v2155 = vadd.f32 %v2146, %v2154
    %v2157 = vrot.slane %v2155, 2
    %v2158 = vsel %vm304, %v2157, 0
    %2160 = vmatpush.msra.mxu0 0.0
    %2161 = vmatpush.msra.mxu0 0.0
    %2162 = vmatpush.msra.mxu0 0.0
    %2163 = vmatpush.msra.mxu0 0.0
    %2164 = vmatpush.msra.mxu0 0.0
    %2165 = vmatpush.msra.mxu0 0.0
    %2166 = vmatpush.msra.mxu0 0.0
    %2167 = vmatpush.msra.mxu0 0.0
    %2168 = vmatpush.msra.mxu0 %v1447
    %2169 = vmatpush.msra.mxu0 %v1444
    %2170 = vmatpush.msra.mxu0 %v1441
    %2171 = vmatpush.msra.mxu0 %v1438
    %2172 = vmatpush.msra.mxu0 %v1435
    %2173 = vmatpush.msra.mxu0 %v1432
    %2174 = vmatpush.msra.mxu0 %v1429
    %2175 = vmatpush.msra.mxu0 %v1426
    %2176 = vmatmul.f32.gmra.mxu0 %v2158
    %v2177 = vpop.f32.mrf.mxu0
    %v2178 = vadd.f32 0.0, %v2177
    %2179 = vdwg.mxu0
    %2180 = vmatpush.msra.mxu0 0.0
    %2181 = vmatpush.msra.mxu0 0.0
    %2182 = vmatpush.msra.mxu0 0.0
    %2183 = vmatpush.msra.mxu0 0.0
    %2184 = vmatpush.msra.mxu0 0.0
    %2185 = vmatpush.msra.mxu0 0.0
    %2186 = vmatpush.msra.mxu0 0.0
    %2187 = vmatpush.msra.mxu0 0.0
    %2188 = vmatpush.msra.mxu0 %v1448
    %2189 = vmatpush.msra.mxu0 %v1445
    %2190 = vmatpush.msra.mxu0 %v1442
    %2191 = vmatpush.msra.mxu0 %v1439
    %2192 = vmatpush.msra.mxu0 %v1436
    %2193 = vmatpush.msra.mxu0 %v1433
    %2194 = vmatpush.msra.mxu0 %v1430
    %2195 = vmatpush.msra.mxu0 %v1427
    %2196 = vmatmul.f32.gmra.mxu0 %v2158
    %v2197 = vpop.f32.mrf.mxu0
    %v2198 = vadd.f32 0.0, %v2197
    %2199 = vdwg.mxu0
    %2200 = vmatpush.msra.mxu0 0.0
    %2201 = vmatpush.msra.mxu0 0.0
    %2202 = vmatpush.msra.mxu0 0.0
    %2203 = vmatpush.msra.mxu0 0.0
    %2204 = vmatpush.msra.mxu0 0.0
    %2205 = vmatpush.msra.mxu0 0.0
    %2206 = vmatpush.msra.mxu0 0.0
    %2207 = vmatpush.msra.mxu0 0.0
    %2208 = vmatpush.msra.mxu0 %v1449
    %2209 = vmatpush.msra.mxu0 %v1446
    %2210 = vmatpush.msra.mxu0 %v1443
    %2211 = vmatpush.msra.mxu0 %v1440
    %2212 = vmatpush.msra.mxu0 %v1437
    %2213 = vmatpush.msra.mxu0 %v1434
    %2214 = vmatpush.msra.mxu0 %v1431
    %2215 = vmatpush.msra.mxu0 %v1428
    %2216 = vmatmul.f32.gmra.mxu0 %v2158
    %v2217 = vpop.f32.mrf.mxu0
    %v2218 = vadd.f32 0.0, %v2217
    %2219 = vdwg.mxu0
    %v2221 = vrot.slane %v2178, 4
    %v2223 = vadd.f32 %v1902, %v2221
    %v2224 = vxor.u32 %v2223, 2147483648
    %v2225 = vmul.f32 %v2224, 1.442695
    %v2226 = vpow.pop %v2225
    %v2227 = vadd.f32 %v2226, 1.0
    %v2228 = vrcp.pop %v2227
    %v2229 = vmul.f32 %v2227, %v2228
    %v2230 = vsub.f32 1.0, %v2229
    %v2231 = vmul.f32 %v2228, %v2230
    %v2232 = vadd.f32 %v2228, %v2231
    %vm2233 = vweird.f32 %v2227
    %vm2234 = vweird.f32 %v2228
    %vm2235 = vmor %vm2233, %vm2234
    %v2236 = vsel %vm2235, %v2228, %v2232
    %v2237 = vand.u32 2147483647, %v2227
    %vm2238 = vcmp.eq.f32.partialorder %v2237, 8.507059e+37
    %v2239 = vand.u32 %v2227, 2147483648
    %v2240 = vor.u32 1.1754944e-38, %v2239
    %v2241 = vsel %vm2238, %v2240, %v2236
    %v2242 = vmul.f32 1.0, %v2241
    %v2244 = vrot.slane %v2198, 4
    %v2246 = vadd.f32 %v1903, %v2244
    %v2247 = vxor.u32 %v2246, 2147483648
    %v2248 = vmul.f32 %v2247, 1.442695
    %v2249 = vpow.pop %v2248
    %v2250 = vadd.f32 %v2249, 1.0
    %v2251 = vrcp.pop %v2250
    %v2252 = vmul.f32 %v2250, %v2251
    %v2253 = vsub.f32 1.0, %v2252
    %v2254 = vmul.f32 %v2251, %v2253
    %v2255 = vadd.f32 %v2251, %v2254
    %vm2256 = vweird.f32 %v2250
    %vm2257 = vweird.f32 %v2251
    %vm2258 = vmor %vm2256, %vm2257
    %v2259 = vsel %vm2258, %v2251, %v2255
    %v2260 = vand.u32 2147483647, %v2250
    %vm2261 = vcmp.eq.f32.partialorder %v2260, 8.507059e+37
    %v2262 = vand.u32 %v2250, 2147483648
    %v2263 = vor.u32 1.1754944e-38, %v2262
    %v2264 = vsel %vm2261, %v2263, %v2259
    %v2265 = vmul.f32 1.0, %v2264
    %v2266 = vadd.f32 %v2218, %v1501
    %v2268 = vrot.slane %v2266, 4
    %v2270 = vmul.f32 %v2242, %v2268
    %v2271 = vadd.f32 %v1904, %v2270
    %v2272 = vtanh.pop %v2271
    %v2274 = vrot.slane %v2272, 2
    %v2276 = vsub.f32 %v2155, %v2274
    %v2278 = vrot.slane %v2276, 6
    %v2280 = vmul.f32 %v2265, %v2278
    %v2281 = vadd.f32 %v2272, %v2280
    %v2283 = vrot.slane %v2281, 4
    %v2284 = vsel %vm304, %v2283, 0
    %2286 = vmatpush.msra.mxu0 0.0
    %2287 = vmatpush.msra.mxu0 0.0
    %2288 = vmatpush.msra.mxu0 0.0
    %2289 = vmatpush.msra.mxu0 0.0
    %2290 = vmatpush.msra.mxu0 0.0
    %2291 = vmatpush.msra.mxu0 0.0
    %2292 = vmatpush.msra.mxu0 0.0
    %2293 = vmatpush.msra.mxu0 0.0
    %2294 = vmatpush.msra.mxu0 %v1447
    %2295 = vmatpush.msra.mxu0 %v1444
    %2296 = vmatpush.msra.mxu0 %v1441
    %2297 = vmatpush.msra.mxu0 %v1438
    %2298 = vmatpush.msra.mxu0 %v1435
    %2299 = vmatpush.msra.mxu0 %v1432
    %2300 = vmatpush.msra.mxu0 %v1429
    %2301 = vmatpush.msra.mxu0 %v1426
    %2302 = vmatmul.f32.gmra.mxu0 %v2284
    %v2303 = vpop.f32.mrf.mxu0
    %v2304 = vadd.f32 0.0, %v2303
    %2305 = vdwg.mxu0
    %2306 = vmatpush.msra.mxu0 0.0
    %2307 = vmatpush.msra.mxu0 0.0
    %2308 = vmatpush.msra.mxu0 0.0
    %2309 = vmatpush.msra.mxu0 0.0
    %2310 = vmatpush.msra.mxu0 0.0
    %2311 = vmatpush.msra.mxu0 0.0
    %2312 = vmatpush.msra.mxu0 0.0
    %2313 = vmatpush.msra.mxu0 0.0
    %2314 = vmatpush.msra.mxu0 %v1448
    %2315 = vmatpush.msra.mxu0 %v1445
    %2316 = vmatpush.msra.mxu0 %v1442
    %2317 = vmatpush.msra.mxu0 %v1439
    %2318 = vmatpush.msra.mxu0 %v1436
    %2319 = vmatpush.msra.mxu0 %v1433
    %2320 = vmatpush.msra.mxu0 %v1430
    %2321 = vmatpush.msra.mxu0 %v1427
    %2322 = vmatmul.f32.gmra.mxu0 %v2284
    %v2323 = vpop.f32.mrf.mxu0
    %v2324 = vadd.f32 0.0, %v2323
    %2325 = vdwg.mxu0
    %2326 = vmatpush.msra.mxu0 0.0
    %2327 = vmatpush.msra.mxu0 0.0
    %2328 = vmatpush.msra.mxu0 0.0
    %2329 = vmatpush.msra.mxu0 0.0
    %2330 = vmatpush.msra.mxu0 0.0
    %2331 = vmatpush.msra.mxu0 0.0
    %2332 = vmatpush.msra.mxu0 0.0
    %2333 = vmatpush.msra.mxu0 0.0
    %2334 = vmatpush.msra.mxu0 %v1449
    %2335 = vmatpush.msra.mxu0 %v1446
    %2336 = vmatpush.msra.mxu0 %v1443
    %2337 = vmatpush.msra.mxu0 %v1440
    %2338 = vmatpush.msra.mxu0 %v1437
    %2339 = vmatpush.msra.mxu0 %v1434
    %2340 = vmatpush.msra.mxu0 %v1431
    %2341 = vmatpush.msra.mxu0 %v1428
    %2342 = vmatmul.f32.gmra.mxu0 %v2284
    %v2343 = vpop.f32.mrf.mxu0
    %v2344 = vadd.f32 0.0, %v2343
    %2345 = vdwg.mxu0
    %v2347 = vrot.slane %v2304, 2
    %v2349 = vadd.f32 %v2028, %v2347
    %v2350 = vxor.u32 %v2349, 2147483648
    %v2351 = vmul.f32 %v2350, 1.442695
    %v2352 = vpow.pop %v2351
    %v2353 = vadd.f32 %v2352, 1.0
    %v2354 = vrcp.pop %v2353
    %v2355 = vmul.f32 %v2353, %v2354
    %v2356 = vsub.f32 1.0, %v2355
    %v2357 = vmul.f32 %v2354, %v2356
    %v2358 = vadd.f32 %v2354, %v2357
    %vm2359 = vweird.f32 %v2353
    %vm2360 = vweird.f32 %v2354
    %vm2361 = vmor %vm2359, %vm2360
    %v2362 = vsel %vm2361, %v2354, %v2358
    %v2363 = vand.u32 2147483647, %v2353
    %vm2364 = vcmp.eq.f32.partialorder %v2363, 8.507059e+37
    %v2365 = vand.u32 %v2353, 2147483648
    %v2366 = vor.u32 1.1754944e-38, %v2365
    %v2367 = vsel %vm2364, %v2366, %v2362
    %v2368 = vmul.f32 1.0, %v2367
    %v2370 = vrot.slane %v2324, 2
    %v2372 = vadd.f32 %v2029, %v2370
    %v2373 = vxor.u32 %v2372, 2147483648
    %v2374 = vmul.f32 %v2373, 1.442695
    %v2375 = vpow.pop %v2374
    %v2376 = vadd.f32 %v2375, 1.0
    %v2377 = vrcp.pop %v2376
    %v2378 = vmul.f32 %v2376, %v2377
    %v2379 = vsub.f32 1.0, %v2378
    %v2380 = vmul.f32 %v2377, %v2379
    %v2381 = vadd.f32 %v2377, %v2380
    %vm2382 = vweird.f32 %v2376
    %vm2383 = vweird.f32 %v2377
    %vm2384 = vmor %vm2382, %vm2383
    %v2385 = vsel %vm2384, %v2377, %v2381
    %v2386 = vand.u32 2147483647, %v2376
    %vm2387 = vcmp.eq.f32.partialorder %v2386, 8.507059e+37
    %v2388 = vand.u32 %v2376, 2147483648
    %v2389 = vor.u32 1.1754944e-38, %v2388
    %v2390 = vsel %vm2387, %v2389, %v2385
    %v2391 = vmul.f32 1.0, %v2390
    %v2392 = vadd.f32 %v2344, %v1501
    %v2394 = vrot.slane %v2392, 2
    %v2396 = vmul.f32 %v2368, %v2394
    %v2397 = vadd.f32 %v2030, %v2396
    %v2398 = vtanh.pop %v2397
    %v2400 = vrot.slane %v2398, 2
    %v2402 = vsub.f32 %v2281, %v2400
    %v2404 = vrot.slane %v2402, 6
    %v2406 = vmul.f32 %v2391, %v2404
    %v2407 = vadd.f32 %v2398, %v2406
    %v2408 = vld [vmem:[%s4] sm:$0xff]
    %v2409 = vld [vmem:[%s4 + $0x8] sm:$0xff]
    %v2410 = vld [vmem:[%s4 + $0x10] sm:$0xff]
    %v2411 = vld [vmem:[%s4 + $0x18] sm:$0xff]
    %v2412 = vld [vmem:[%s4 + $0x20] sm:$0xff]
    %v2413 = vld [vmem:[%s4 + $0x28] sm:$0xff]
    %v2414 = vld [vmem:[%s4 + $0x30] sm:$0xff]
    %v2415 = vld [vmem:[%s4 + $0x38] sm:$0xff]
    %v2416 = vld [vmem:[%s4 + $0x40] sm:$0xff]
    %v2417 = vld [vmem:[%s4 + $0x48] sm:$0xff]
    %v2418 = vld [vmem:[%s4 + $0x50] sm:$0xff]
    %v2419 = vld [vmem:[%s4 + $0x58] sm:$0xff]
    %v2420 = vld [vmem:[%s4 + $0x60] sm:$0xff]
    %v2421 = vld [vmem:[%s4 + $0x68] sm:$0xff]
    %v2422 = vld [vmem:[%s4 + $0x70] sm:$0xff]
    %v2423 = vld [vmem:[%s4 + $0x78] sm:$0xff]
    %v2424 = vld [vmem:[%s4 + $0x80] sm:$0xff]
    %v2425 = vld [vmem:[%s4 + $0x88] sm:$0xff]
    %v2426 = vld [vmem:[%s4 + $0x90] sm:$0xff]
    %v2427 = vld [vmem:[%s4 + $0x98] sm:$0xff]
    %v2428 = vld [vmem:[%s4 + $0xa0] sm:$0xff]
    %v2429 = vld [vmem:[%s4 + $0xa8] sm:$0xff]
    %v2430 = vld [vmem:[%s4 + $0xb0] sm:$0xff]
    %v2431 = vld [vmem:[%s4 + $0xb8] sm:$0xff]
    %v2432 = vld [vmem:[%s4 + $0xc0] sm:$0xff]
    %v2433 = vld [vmem:[%s4 + $0xc8] sm:$0xff]
    %v2434 = vld [vmem:[%s4 + $0xd0] sm:$0xff]
    %v2435 = vld [vmem:[%s4 + $0xd8] sm:$0xff]
    %v2436 = vld [vmem:[%s4 + $0xe0] sm:$0xff]
    %v2437 = vld [vmem:[%s4 + $0xe8] sm:$0xff]
    %v2438 = vld [vmem:[%s4 + $0xf0] sm:$0xff]
    %v2439 = vld [vmem:[%s4 + $0xf8] sm:$0xff]
    %v2440 = vld [vmem:[%s5] sm:$0x1]
    %v2441 = vperm.slane %v2440, 0
    %v2443 = vrot.slane %v2407, 6
    %v2444 = vsel %vm304, %v2443, 0
    %2446 = vmatpush.msra.mxu0 0.0
    %2447 = vmatpush.msra.mxu0 0.0
    %2448 = vmatpush.msra.mxu0 0.0
    %2449 = vmatpush.msra.mxu0 0.0
    %2450 = vmatpush.msra.mxu0 0.0
    %2451 = vmatpush.msra.mxu0 0.0
    %2452 = vmatpush.msra.mxu0 0.0
    %2453 = vmatpush.msra.mxu0 0.0
    %2454 = vmatpush.msra.mxu0 %v2415
    %2455 = vmatpush.msra.mxu0 %v2414
    %2456 = vmatpush.msra.mxu0 %v2413
    %2457 = vmatpush.msra.mxu0 %v2412
    %2458 = vmatpush.msra.mxu0 %v2411
    %2459 = vmatpush.msra.mxu0 %v2410
    %2460 = vmatpush.msra.mxu0 %v2409
    %2461 = vmatpush.msra.mxu0 %v2408
    %2462 = vmatmul.f32.gmra.mxu0 %v2444
    %v2463 = vpop.f32.mrf.mxu0
    %v2464 = vadd.f32 %v2441, %v2463
    %2465 = vdwg.mxu0
    %v2466 = vmax.f32 %v2464, 0.0
    %v2467 = vld [vmem:[%s5 + $0x1] sm:$0x1]
    %v2468 = vperm.slane %v2467, 0
    %2469 = vmatpush.msra.mxu0 %v2431
    %2470 = vmatpush.msra.mxu0 %v2430
    %2471 = vmatpush.msra.mxu0 %v2429
    %2472 = vmatpush.msra.mxu0 %v2428
    %2473 = vmatpush.msra.mxu0 %v2427
    %2474 = vmatpush.msra.mxu0 %v2426
    %2475 = vmatpush.msra.mxu0 %v2425
    %2476 = vmatpush.msra.mxu0 %v2424
    %2477 = vmatpush.msra.mxu0 %v2423
    %2478 = vmatpush.msra.mxu0 %v2422
    %2479 = vmatpush.msra.mxu0 %v2421
    %2480 = vmatpush.msra.mxu0 %v2420
    %2481 = vmatpush.msra.mxu0 %v2419
    %2482 = vmatpush.msra.mxu0 %v2418
    %2483 = vmatpush.msra.mxu0 %v2417
    %2484 = vmatpush.msra.mxu0 %v2416
    %2485 = vmatmul.f32.gmra.mxu0 %v2466
    %v2486 = vpop.f32.mrf.mxu0
    %v2487 = vadd.f32 %v2468, %v2486
    %2488 = vdwg.mxu0
    %v2489 = vmax.f32 %v2487, 0.0
    %v2490 = vld [vmem:[%s5 + $0x2] sm:$0x1]
    %v2491 = vperm.slane %v2490, 0
    %v2493 = vsel %vm304, %v2489, 0
    %2495 = vmatpush.msra.mxu0 0.0
    %2496 = vmatpush.msra.mxu0 0.0
    %2497 = vmatpush.msra.mxu0 0.0
    %2498 = vmatpush.msra.mxu0 0.0
    %2499 = vmatpush.msra.mxu0 0.0
    %2500 = vmatpush.msra.mxu0 0.0
    %2501 = vmatpush.msra.mxu0 0.0
    %2502 = vmatpush.msra.mxu0 0.0
    %2503 = vmatpush.msra.mxu0 %v2439
    %2504 = vmatpush.msra.mxu0 %v2438
    %2505 = vmatpush.msra.mxu0 %v2437
    %2506 = vmatpush.msra.mxu0 %v2436
    %2507 = vmatpush.msra.mxu0 %v2435
    %2508 = vmatpush.msra.mxu0 %v2434
    %2509 = vmatpush.msra.mxu0 %v2433
    %2510 = vmatpush.msra.mxu0 %v2432
    %2511 = vmatmul.f32.gmra.mxu0 %v2493
    %v2512 = vpop.f32.mrf.mxu0
    %v2513 = vadd.f32 %v2491, %v2512
    %2514 = vdwg.mxu0
    %vm2515 = vcmask 33792
    %2516 = vst.msk [vmem:[#allocation3] sm:$0x3] %vm2515, %v2513
    // Predicated region
    $region26: #{gru_model_forward.1} parent=1 // pred_check
      _
    $region27: #{gru_model_forward.1} parent=1 // pred_check_branch
      %2518 = sbr.rel (0) target = $region29
    $region28: #{gru_model_forward.1} parent=1 // pred_region
      %2520 = vsyncadd [#allocation4], 0
      %s2522 = sshll.u32 [#allocation3], 4
      %s2523 = int_to_ptr.vmem [resolvable:$true] %s2522
      %s2524 = sshll.u32 %s6, 4
      %s2525 = int_to_ptr.hbm [resolvable:$true] %s2524
      %2527 = dma.vmem_to_hbm [thread:$0]  %s2523, 32, %s2525, [#allocation4]
    $region29: #{gru_model_forward.1} parent=1 // pred_fallthru
      _
    // Predicated region
    $region30: #{gru_model_forward.1} parent=1 // pred_check
      _
    $region31: #{gru_model_forward.1} parent=1 // pred_check_branch
      %2529 = sbr.rel (0) target = $region33
    $region32: #{gru_model_forward.1} parent=1 // pred_region
      %2531 = dma.done [#allocation4], 32
    $region33: #{gru_model_forward.1} parent=1 // pred_fallthru
      _
    %2532 = vsyncpa [#allocation4], 1

</llo_original>
